<compile_context>
chip_gen: v5e
topology: v5e:2x2
jax: 0.10.0
libtpu: 0.0.40
codegen_flags: <defaults>
</compile_context>

<pallas_src>
import functools
import math

import jax
import jax.numpy as jnp
from jax import lax
from jax.experimental import pallas as pl
from jax.experimental.pallas import tpu as pltpu


def _sinusoidal_pos_emb_kernel(x_ref, o_ref, *, dim, half_dim, scale,
                               neg_log_ts, block_rows, x_is_full):
    """One row-tile of the embedding.

    x_ref: [b_pad, 1] full timestep vector (x_is_full) or [block_rows, 1] tile.
    o_ref: [block_rows, dim] lane-dense output tile.
    """
    if x_is_full:
        row0 = pl.multiple_of(pl.program_id(0) * block_rows, block_rows)
        t = x_ref[pl.ds(row0, block_rows), :]                      # [bn, 1]
    else:
        t = x_ref[...]                                             # [bn, 1]
    t = t.astype(jnp.float32) * scale                              # rescaled steps

    # Single full-lane-width pass:
    #   lanes [0, half_dim)    -> sin(t * freq_k)                    (phase 0)
    #   lanes [half_dim, dim)  -> sin(t * freq_k + pi/2) == cos(...)
    j = lax.broadcasted_iota(jnp.int32, (1, dim), 1)               # lane index
    is_sin = j < half_dim
    k = jnp.where(is_sin, j, j - half_dim).astype(jnp.float32)
    freq = jnp.exp(k * neg_log_ts)                                 # [1, dim]
    phase = jnp.where(is_sin, 0.0, 0.5 * math.pi)                  # [1, dim]

    o_ref[...] = jnp.sin(t * freq + phase).astype(o_ref.dtype)     # [bn, dim]


def sinusoidal_pos_emb(x, *, dim, num_steps, rescale_steps=4000.0,
                       block_rows=1024, out_dtype=jnp.float32,
                       full_input_max_rows=8192):
    """Pallas TPU equivalent of SinusoidalPosEmb(dim, num_steps, rescale_steps)(x).

    x: [B] float/int timesteps.  Returns [B, dim] `out_dtype`.
    """
    assert dim % 2 == 0 and dim >= 4, "dim must be an even number >= 4"
    b = x.shape[0]
    half_dim = dim // 2
    scale = float(rescale_steps) / float(num_steps)
    neg_log_ts = -math.log(10000.0) / (half_dim - 1)

    # Row tile: whole array if it fits one block, else sublane-aligned tiles.
    bn = b if b <= block_rows else block_rows
    num_blocks = pl.cdiv(b, bn)
    b_pad = num_blocks * bn

    x2 = x.reshape(b, 1)  # cast happens in-kernel (no extra pre-kernel XLA op)

    # Input strategy: keep the whole (tiny) timestep vector resident in VMEM
    # (constant block, no per-step DMA) unless the batch is huge, in which case
    # fall back to per-tile [bn, 1] blocks (Pallas handles the ragged tail).
    x_is_full = b_pad <= full_input_max_rows
    if x_is_full:
        if b_pad != b:
            x2 = jnp.pad(x2, ((0, b_pad - b), (0, 0)))
        in_spec = pl.BlockSpec((b_pad, 1), lambda i: (0, 0))
    else:
        in_spec = pl.BlockSpec((bn, 1), lambda i: (i, 0))

    kernel = functools.partial(
        _sinusoidal_pos_emb_kernel,
        dim=dim, half_dim=half_dim, scale=scale, neg_log_ts=neg_log_ts,
        block_rows=bn, x_is_full=x_is_full)

    return pl.pallas_call(
        kernel,
        out_shape=jax.ShapeDtypeStruct((b, dim), out_dtype),
        grid=(num_blocks,),
        in_specs=[in_spec],
        out_specs=pl.BlockSpec((bn, dim), lambda i: (i, 0)),
        compiler_params=pltpu.CompilerParams(
            dimension_semantics=("parallel",)),  # v7x: split row tiles over both TCs
    )(x2)


def reference_forward(x, dim, num_steps, rescale_steps=4000.0):
    """Pure-jnp reference matching the PyTorch module."""
    xs = x.astype(jnp.float32) / float(num_steps) * float(rescale_steps)
    half_dim = dim // 2
    emb = math.log(10000.0) / (half_dim - 1)
    emb = jnp.exp(jnp.arange(half_dim, dtype=jnp.float32) * -emb)
    emb = xs[:, None] * emb[None, :]
    return jnp.concatenate([jnp.sin(emb), jnp.cos(emb)], axis=-1)


if __name__ == "__main__":
    dim = 128            # -> half_dim = 64, lane-dense 128-wide output
    num_steps = 1000
    key = jax.random.PRNGKey(0)
    k1, k2 = jax.random.split(key)

    # Case 1 (default config): small batch -> single whole-array block, grid=(1,).
    B1 = 256
    t1 = jax.random.randint(k1, (B1,), 0, num_steps).astype(jnp.float32)
    out1 = jax.block_until_ready(sinusoidal_pos_emb(t1, dim=dim, num_steps=num_steps))
    ref1 = reference_forward(t1, dim, num_steps)
    assert out1.shape == (B1, dim), out1.shape
    err1 = float(jnp.max(jnp.abs(out1 - ref1)))
    assert jnp.allclose(out1, ref1, atol=2e-3, rtol=2e-3), f"mismatch, max_err={err1}"

    # Case 2: ragged multi-block grid + per-tile input path (fallback mode).
    B2 = 272
    t2 = jax.random.randint(k2, (B2,), 0, num_steps).astype(jnp.float32)
    out2 = jax.block_until_ready(sinusoidal_pos_emb(
        t2, dim=dim, num_steps=num_steps, block_rows=128, full_input_max_rows=0))
    ref2 = reference_forward(t2, dim, num_steps)
    assert out2.shape == (B2, dim), out2.shape
    err2 = float(jnp.max(jnp.abs(out2 - ref2)))
    assert jnp.allclose(out2, ref2, atol=2e-3, rtol=2e-3), f"mismatch, max_err={err2}"

    print("KERNEL_OK")
</pallas_src>

<mosaic_0001>
module attributes {stable_mosaic.version = 11 : i64} {
  func.func @_sinusoidal_pos_emb_kernel(%arg0: i32, %arg1: memref<256x1xf32, #tpu.memory_space<vmem>>, %arg2: memref<256x128xf32, #tpu.memory_space<vmem>>) attributes {dimension_semantics = [#tpu.dimension_semantics<parallel>], iteration_bounds = array<i64: 1>, scalar_prefetch = 0 : i64, scratch_operands = 0 : i64, tpu.core_type = #tpu.core_type<tc>, window_params = [{pipeline_mode = #tpu.pipeline_mode<synchronous>, transform_indices = @transform_0, window_bounds = array<i64: 256, 1>}, {transform_indices = @transform_1, window_bounds = array<i64: 256, 128>}]} {
    %c256_i32 = arith.constant 256 : i32
    %0 = arith.muli %arg0, %c256_i32 : i32
    %1 = tpu.assume_multiple %0, 256 : i32
    %2 = arith.index_cast %1 : i32 to index
    %c0 = arith.constant 0 : index
    %3 = vector.load %arg1[%2, %c0] : memref<256x1xf32, #tpu.memory_space<vmem>>, vector<256x1xf32>
    %cst = arith.constant 4.000000e+00 : f32
    %4 = vector.broadcast %cst : f32 to vector<256x1xf32>
    %5 = arith.mulf %3, %4 : vector<256x1xf32>
    %6 = tpu.iota {dimensions = array<i32: 1>} : vector<1x128xi32>
    %c64_i32 = arith.constant 64 : i32
    %7 = vector.broadcast %c64_i32 : i32 to vector<1x128xi32>
    %8 = arith.cmpi slt, %6, %7 : vector<1x128xi32>
    %c64_i32_0 = arith.constant 64 : i32
    %9 = vector.broadcast %c64_i32_0 : i32 to vector<1x128xi32>
    %10 = arith.subi %6, %9 : vector<1x128xi32>
    %11 = arith.select %8, %6, %10 : vector<1x128xi1>, vector<1x128xi32>
    %12 = arith.sitofp %11 : vector<1x128xi32> to vector<1x128xf32>
    %cst_1 = arith.constant -0.146195874 : f32
    %13 = vector.broadcast %cst_1 : f32 to vector<1x128xf32>
    %14 = arith.mulf %12, %13 : vector<1x128xf32>
    %15 = math.exp %14 : vector<1x128xf32>
    %cst_2 = arith.constant 0.000000e+00 : f32
    %cst_3 = arith.constant 1.57079637 : f32
    %16 = vector.broadcast %cst_2 : f32 to vector<1x128xf32>
    %17 = vector.broadcast %cst_3 : f32 to vector<1x128xf32>
    %18 = arith.select %8, %16, %17 : vector<1x128xi1>, vector<1x128xf32>
    %19 = vector.broadcast %5 : vector<256x1xf32> to vector<256x128xf32>
    %20 = vector.broadcast %15 : vector<1x128xf32> to vector<256x128xf32>
    %21 = arith.mulf %19, %20 : vector<256x128xf32>
    %22 = vector.broadcast %18 : vector<1x128xf32> to vector<256x128xf32>
    %23 = arith.addf %21, %22 : vector<256x128xf32>
    %24 = math.sin %23 : vector<256x128xf32>
    %c0_4 = arith.constant 0 : index
    %c0_5 = arith.constant 0 : index
    %25 = vector.load %arg2[%c0_4, %c0_5] : memref<256x128xf32, #tpu.memory_space<vmem>>, vector<256x128xf32>
    tpu.vector_store %arg2[%c0_4, %c0_5], %24 {strides = array<i32>} : memref<256x128xf32, #tpu.memory_space<vmem>>, vector<256x128xf32>,
    return
  }
  func.func @transform_0(%arg0: i32) -> (i32, i32) {
    %c0_i32 = arith.constant 0 : i32
    %c0_i32_0 = arith.constant 0 : i32
    %c0_i32_1 = arith.constant 0 : i32
    return %c0_i32, %c0_i32_0 : i32, i32
  }
  func.func @transform_1(%arg0: i32) -> (i32, i32) {
    %c0_i32 = arith.constant 0 : i32
    %c0_i32_0 = arith.constant 0 : i32
    return %arg0, %c0_i32 : i32, i32
  }
}

</mosaic_0001>

<llo_original>
// kernel: tpu_custom_call.1
$region0: #{tpu_custom_call.1}
  #allocation0 [shape = 'u32[]', space=smem, size = 0x4, offset = 0x4, fixed_abs, tag = 'smem constant byte address 0x4 - core index']
  #allocation1 [shape = 'u32[72,128]{1,0:T(1,128)}', space=vmem, size = 0x9000, scoped, tag = 'internal scratch']
  %s0 = inlined_call_operand.vmem [shape: f32[256,1], index: 0, kind: input, shape index: {}]
  %s1 = inlined_call_operand.hbm [shape: f32[256,128], index: 1, kind: output, shape index: {}]
  %s2 = sld [smem:[#allocation0]]
  $region14: #{tpu_custom_call.1} parent=0
    _
  %s4 = ssub.s32 1, %s2
  %s5 = scalar_select 0, %s4, %s2
  $region1: #{tpu_custom_call.1} parent=0
    #allocation2 [shape = 'u8[131072]{0}', space=vmem, size = 0x20000, scoped, tag = 'output window, operand 0, single buffered']
    #allocation3 [shape = 's32[1]{0}', space=sflag, size = 0x4, scoped, tag = 'scoped memory for tpu_custom_call.1']
    %6 = vsyncpa [#allocation3], 0
    // Predicated region
    $region2: #{tpu_custom_call.1} parent=1 // pred_check
      _
    $region3: #{tpu_custom_call.1} parent=1 // pred_check_branch
      %8 = sbr.rel (0) target = $region5
    $region4: #{tpu_custom_call.1} parent=1 // pred_region
      _
    $region5: #{tpu_custom_call.1} parent=1 // pred_fallthru
      _
    %s9 = smul.u32 0, 256
    %s10 = scalar_lea.vmem %s0, %s9
    %v11 = vld [vmem:[%s10] sm:$0xff]
    %v12 = vld [vmem:[%s10 + $0x8] sm:$0xff]
    %v13 = vld [vmem:[%s10 + $0x10] sm:$0xff]
    %v14 = vld [vmem:[%s10 + $0x18] sm:$0xff]
    %v15 = vld [vmem:[%s10 + $0x20] sm:$0xff]
    %v16 = vld [vmem:[%s10 + $0x28] sm:$0xff]
    %v17 = vld [vmem:[%s10 + $0x30] sm:$0xff]
    %v18 = vld [vmem:[%s10 + $0x38] sm:$0xff]
    %v19 = vld [vmem:[%s10 + $0x40] sm:$0xff]
    %v20 = vld [vmem:[%s10 + $0x48] sm:$0xff]
    %v21 = vld [vmem:[%s10 + $0x50] sm:$0xff]
    %v22 = vld [vmem:[%s10 + $0x58] sm:$0xff]
    %v23 = vld [vmem:[%s10 + $0x60] sm:$0xff]
    %v24 = vld [vmem:[%s10 + $0x68] sm:$0xff]
    %v25 = vld [vmem:[%s10 + $0x70] sm:$0xff]
    %v26 = vld [vmem:[%s10 + $0x78] sm:$0xff]
    %v27 = vld [vmem:[%s10 + $0x80] sm:$0xff]
    %v28 = vld [vmem:[%s10 + $0x88] sm:$0xff]
    %v29 = vld [vmem:[%s10 + $0x90] sm:$0xff]
    %v30 = vld [vmem:[%s10 + $0x98] sm:$0xff]
    %v31 = vld [vmem:[%s10 + $0xa0] sm:$0xff]
    %v32 = vld [vmem:[%s10 + $0xa8] sm:$0xff]
    %v33 = vld [vmem:[%s10 + $0xb0] sm:$0xff]
    %v34 = vld [vmem:[%s10 + $0xb8] sm:$0xff]
    %v35 = vld [vmem:[%s10 + $0xc0] sm:$0xff]
    %v36 = vld [vmem:[%s10 + $0xc8] sm:$0xff]
    %v37 = vld [vmem:[%s10 + $0xd0] sm:$0xff]
    %v38 = vld [vmem:[%s10 + $0xd8] sm:$0xff]
    %v39 = vld [vmem:[%s10 + $0xe0] sm:$0xff]
    %v40 = vld [vmem:[%s10 + $0xe8] sm:$0xff]
    %v41 = vld [vmem:[%s10 + $0xf0] sm:$0xff]
    %v42 = vld [vmem:[%s10 + $0xf8] sm:$0xff]
    %v43 = vmul.f32 %v11, 4.0
    %v44 = vmul.f32 %v12, 4.0
    %v45 = vmul.f32 %v13, 4.0
    %v46 = vmul.f32 %v14, 4.0
    %v47 = vmul.f32 %v15, 4.0
    %v48 = vmul.f32 %v16, 4.0
    %v49 = vmul.f32 %v17, 4.0
    %v50 = vmul.f32 %v18, 4.0
    %v51 = vmul.f32 %v19, 4.0
    %v52 = vmul.f32 %v20, 4.0
    %v53 = vmul.f32 %v21, 4.0
    %v54 = vmul.f32 %v22, 4.0
    %v55 = vmul.f32 %v23, 4.0
    %v56 = vmul.f32 %v24, 4.0
    %v57 = vmul.f32 %v25, 4.0
    %v58 = vmul.f32 %v26, 4.0
    %v59 = vmul.f32 %v27, 4.0
    %v60 = vmul.f32 %v28, 4.0
    %v61 = vmul.f32 %v29, 4.0
    %v62 = vmul.f32 %v30, 4.0
    %v63 = vmul.f32 %v31, 4.0
    %v64 = vmul.f32 %v32, 4.0
    %v65 = vmul.f32 %v33, 4.0
    %v66 = vmul.f32 %v34, 4.0
    %v67 = vmul.f32 %v35, 4.0
    %v68 = vmul.f32 %v36, 4.0
    %v69 = vmul.f32 %v37, 4.0
    %v70 = vmul.f32 %v38, 4.0
    %v71 = vmul.f32 %v39, 4.0
    %v72 = vmul.f32 %v40, 4.0
    %v73 = vmul.f32 %v41, 4.0
    %v74 = vmul.f32 %v42, 4.0
    %v75 = vlaneseq
    %v76 = vand.u32 %v75, 127
    %vm77 = vcmp.lt.s32.totalorder %v76, 64
    %v78 = vsub.s32 %v76, 64
    %v79 = vsel %vm77, %v76, %v78
    %v80 = vcvt.s32.f32 %v79
    %v81 = vmul.f32 %v80, -0.14619587
    %v82 = vmul.f32 %v81, 1.442695
    %v83 = vpow.pop %v82
    %v84 = vsel %vm77, 0.0, 1.5707964
    %86 = vset.pattern.permute.xlu0 0
    %87 = vperm.xlu0 %86, %v43
    %v88 = vpop.permute.xlu0 %87
    %91 = vset.pattern.permute.xlu0 0
    %92 = vperm.xlu0 %91, %v44
    %v93 = vpop.permute.xlu0 %92
    %96 = vset.pattern.permute.xlu0 0
    %97 = vperm.xlu0 %96, %v45
    %v98 = vpop.permute.xlu0 %97
    %101 = vset.pattern.permute.xlu0 0
    %102 = vperm.xlu0 %101, %v46
    %v103 = vpop.permute.xlu0 %102
    %106 = vset.pattern.permute.xlu0 0
    %107 = vperm.xlu0 %106, %v47
    %v108 = vpop.permute.xlu0 %107
    %111 = vset.pattern.permute.xlu0 0
    %112 = vperm.xlu0 %111, %v48
    %v113 = vpop.permute.xlu0 %112
    %116 = vset.pattern.permute.xlu0 0
    %117 = vperm.xlu0 %116, %v49
    %v118 = vpop.permute.xlu0 %117
    %121 = vset.pattern.permute.xlu0 0
    %122 = vperm.xlu0 %121, %v50
    %v123 = vpop.permute.xlu0 %122
    %126 = vset.pattern.permute.xlu0 0
    %127 = vperm.xlu0 %126, %v51
    %v128 = vpop.permute.xlu0 %127
    %131 = vset.pattern.permute.xlu0 0
    %132 = vperm.xlu0 %131, %v52
    %v133 = vpop.permute.xlu0 %132
    %136 = vset.pattern.permute.xlu0 0
    %137 = vperm.xlu0 %136, %v53
    %v138 = vpop.permute.xlu0 %137
    %141 = vset.pattern.permute.xlu0 0
    %142 = vperm.xlu0 %141, %v54
    %v143 = vpop.permute.xlu0 %142
    %146 = vset.pattern.permute.xlu0 0
    %147 = vperm.xlu0 %146, %v55
    %v148 = vpop.permute.xlu0 %147
    %151 = vset.pattern.permute.xlu0 0
    %152 = vperm.xlu0 %151, %v56
    %v153 = vpop.permute.xlu0 %152
    %156 = vset.pattern.permute.xlu0 0
    %157 = vperm.xlu0 %156, %v57
    %v158 = vpop.permute.xlu0 %157
    %161 = vset.pattern.permute.xlu0 0
    %162 = vperm.xlu0 %161, %v58
    %v163 = vpop.permute.xlu0 %162
    %166 = vset.pattern.permute.xlu0 0
    %167 = vperm.xlu0 %166, %v59
    %v168 = vpop.permute.xlu0 %167
    %171 = vset.pattern.permute.xlu0 0
    %172 = vperm.xlu0 %171, %v60
    %v173 = vpop.permute.xlu0 %172
    %176 = vset.pattern.permute.xlu0 0
    %177 = vperm.xlu0 %176, %v61
    %v178 = vpop.permute.xlu0 %177
    %181 = vset.pattern.permute.xlu0 0
    %182 = vperm.xlu0 %181, %v62
    %v183 = vpop.permute.xlu0 %182
    %186 = vset.pattern.permute.xlu0 0
    %187 = vperm.xlu0 %186, %v63
    %v188 = vpop.permute.xlu0 %187
    %191 = vset.pattern.permute.xlu0 0
    %192 = vperm.xlu0 %191, %v64
    %v193 = vpop.permute.xlu0 %192
    %196 = vset.pattern.permute.xlu0 0
    %197 = vperm.xlu0 %196, %v65
    %v198 = vpop.permute.xlu0 %197
    %201 = vset.pattern.permute.xlu0 0
    %202 = vperm.xlu0 %201, %v66
    %v203 = vpop.permute.xlu0 %202
    %206 = vset.pattern.permute.xlu0 0
    %207 = vperm.xlu0 %206, %v67
    %v208 = vpop.permute.xlu0 %207
    %211 = vset.pattern.permute.xlu0 0
    %212 = vperm.xlu0 %211, %v68
    %v213 = vpop.permute.xlu0 %212
    %216 = vset.pattern.permute.xlu0 0
    %217 = vperm.xlu0 %216, %v69
    %v218 = vpop.permute.xlu0 %217
    %221 = vset.pattern.permute.xlu0 0
    %222 = vperm.xlu0 %221, %v70
    %v223 = vpop.permute.xlu0 %222
    %226 = vset.pattern.permute.xlu0 0
    %227 = vperm.xlu0 %226, %v71
    %v228 = vpop.permute.xlu0 %227
    %231 = vset.pattern.permute.xlu0 0
    %232 = vperm.xlu0 %231, %v72
    %v233 = vpop.permute.xlu0 %232
    %236 = vset.pattern.permute.xlu0 0
    %237 = vperm.xlu0 %236, %v73
    %v238 = vpop.permute.xlu0 %237
    %241 = vset.pattern.permute.xlu0 0
    %242 = vperm.xlu0 %241, %v74
    %v243 = vpop.permute.xlu0 %242
    %v245 = vmul.f32 %v88, %v83
    %v246 = vmul.f32 %v93, %v83
    %v247 = vmul.f32 %v98, %v83
    %v248 = vmul.f32 %v103, %v83
    %v249 = vmul.f32 %v108, %v83
    %v250 = vmul.f32 %v113, %v83
    %v251 = vmul.f32 %v118, %v83
    %v252 = vmul.f32 %v123, %v83
    %v253 = vmul.f32 %v128, %v83
    %v254 = vmul.f32 %v133, %v83
    %v255 = vmul.f32 %v138, %v83
    %v256 = vmul.f32 %v143, %v83
    %v257 = vmul.f32 %v148, %v83
    %v258 = vmul.f32 %v153, %v83
    %v259 = vmul.f32 %v158, %v83
    %v260 = vmul.f32 %v163, %v83
    %v261 = vmul.f32 %v168, %v83
    %v262 = vmul.f32 %v173, %v83
    %v263 = vmul.f32 %v178, %v83
    %v264 = vmul.f32 %v183, %v83
    %v265 = vmul.f32 %v188, %v83
    %v266 = vmul.f32 %v193, %v83
    %v267 = vmul.f32 %v198, %v83
    %v268 = vmul.f32 %v203, %v83
    %v269 = vmul.f32 %v208, %v83
    %v270 = vmul.f32 %v213, %v83
    %v271 = vmul.f32 %v218, %v83
    %v272 = vmul.f32 %v223, %v83
    %v273 = vmul.f32 %v228, %v83
    %v274 = vmul.f32 %v233, %v83
    %v275 = vmul.f32 %v238, %v83
    %v276 = vmul.f32 %v243, %v83
    %v277 = vadd.f32 %v245, %v84
    %v278 = vadd.f32 %v246, %v84
    %v279 = vadd.f32 %v247, %v84
    %v280 = vadd.f32 %v248, %v84
    %v281 = vadd.f32 %v249, %v84
    %v282 = vadd.f32 %v250, %v84
    %v283 = vadd.f32 %v251, %v84
    %v284 = vadd.f32 %v252, %v84
    %v285 = vadd.f32 %v253, %v84
    %v286 = vadd.f32 %v254, %v84
    %v287 = vadd.f32 %v255, %v84
    %v288 = vadd.f32 %v256, %v84
    %v289 = vadd.f32 %v257, %v84
    %v290 = vadd.f32 %v258, %v84
    %v291 = vadd.f32 %v259, %v84
    %v292 = vadd.f32 %v260, %v84
    %v293 = vadd.f32 %v261, %v84
    %v294 = vadd.f32 %v262, %v84
    %v295 = vadd.f32 %v263, %v84
    %v296 = vadd.f32 %v264, %v84
    %v297 = vadd.f32 %v265, %v84
    %v298 = vadd.f32 %v266, %v84
    %v299 = vadd.f32 %v267, %v84
    %v300 = vadd.f32 %v268, %v84
    %v301 = vadd.f32 %v269, %v84
    %v302 = vadd.f32 %v270, %v84
    %v303 = vadd.f32 %v271, %v84
    %v304 = vadd.f32 %v272, %v84
    %v305 = vadd.f32 %v273, %v84
    %v306 = vadd.f32 %v274, %v84
    %v307 = vadd.f32 %v275, %v84
    %v308 = vadd.f32 %v276, %v84
    %v309 = vand.u32 2147483647, %v277
    %vm310 = vcmp.le.f32.partialorder %v309, 0.7853982
    %vm311 = vcmp.lt.s32.totalorder %v277, 0
    %v312 = vand.u32 %v277, 2139095040
    %v313 = vshrl.u32 %v312, 23
    %v314 = vsub.s32 %v313, 127
    %v315 = vand.u32 2147483647, %v277
    %v316 = vand.u32 %v315, 8388607
    %v317 = vor.u32 %v316, 8388608
    %v318 = vsub.s32 0, %v317
    %v319 = vadd.s32 %v314, 1
    %vm320 = vcmp.gt.s32.totalorder %v319, 0
    %v321 = vsel %vm320, %v319, 0
    %v322 = vshrl.u32 %v321, 5
    %v323 = vand.u32 %v321, 31
    %v324 = vsub.s32 32, %v323
    %v325 = vshrl.u32 683565275, %v324
    %v326 = vshll.u32 683565275, %v323
    %v327 = vshrl.u32 2475754826, %v324
    %v328 = vor.u32 %v326, %v327
    %v329 = vshll.u32 2475754826, %v323
    %v330 = vshrl.u32 2131351028, %v324
    %v331 = vor.u32 %v329, %v330
    %v332 = vshll.u32 2131351028, %v323
    %v333 = vshrl.u32 2102212464, %v324
    %v334 = vor.u32 %v332, %v333
    %v335 = vshll.u32 2102212464, %v323
    %v336 = vshrl.u32 920167782, %v324
    %v337 = vor.u32 %v335, %v336
    %v338 = vshll.u32 920167782, %v323
    %v339 = vshrl.u32 1326507024, %v324
    %v340 = vor.u32 %v338, %v339
    %vm341 = vcmp.lt.s32.totalorder %v322, 1
    %vm342 = vcmp.lt.s32.totalorder %v322, 2
    %vm343 = vcmp.lt.s32.totalorder %v322, 3
    %vm344 = vcmp.lt.s32.totalorder %v322, 4
    %v345 = vsel %vm341, %v325, %v328
    %v346 = vsel %vm344, %v334, 2102212464
    %v347 = vsel %vm343, %v331, %v346
    %v348 = vsel %vm342, %v345, %v347
    %v349 = vsel %vm341, %v328, %v331
    %v350 = vsel %vm344, %v337, 920167782
    %v351 = vsel %vm343, %v334, %v350
    %v352 = vsel %vm342, %v349, %v351
    %v353 = vsel %vm341, %v331, %v334
    %v354 = vsel %vm344, %v340, 1326507024
    %v355 = vsel %vm343, %v337, %v354
    %v356 = vsel %vm342, %v353, %v355
    %v357 = vshll.u32 %v317, 8
    %v358 = vand.u32 %v357, 65535
    %v359 = vshrl.u32 %v357, 16
    %v360 = vand.u32 %v356, 65535
    %v361 = vshrl.u32 %v356, 16
    %v362 = vmul.u32 %v358, %v360
    %v363 = vmul.u32 %v358, %v361
    %v364 = vmul.u32 %v359, %v360
    %v365 = vmul.u32 %v359, %v361
    %v366 = vshll.u32 %v363, 16
    %v367 = vshrl.u32 %v363, 16
    %v368 = vshll.u32 %v364, 16
    %v369 = vshrl.u32 %v364, 16
    %vm370 = vc.u32 %v362, %v366
    %v371 = vsel %vm370, 1, 0
    %v372 = vadd.s32 %v362, %v366
    %v373 = vadd.s32 %v365, %v371
    %vm374 = vc.u32 %v372, %v368
    %v375 = vsel %vm374, 1, 0
    %v376 = vadd.s32 %v372, %v368
    %v377 = vadd.s32 %v373, %v375
    %v378 = vadd.s32 %v377, %v367
    %v379 = vadd.s32 %v378, %v369
    %v380 = vand.u32 %v357, 65535
    %v381 = vshrl.u32 %v357, 16
    %v382 = vand.u32 %v352, 65535
    %v383 = vshrl.u32 %v352, 16
    %v384 = vmul.u32 %v380, %v382
    %v385 = vmul.u32 %v380, %v383
    %v386 = vmul.u32 %v381, %v382
    %v387 = vmul.u32 %v381, %v383
    %v388 = vshll.u32 %v385, 16
    %v389 = vshrl.u32 %v385, 16
    %v390 = vshll.u32 %v386, 16
    %v391 = vshrl.u32 %v386, 16
    %vm392 = vc.u32 %v384, %v388
    %v393 = vsel %vm392, 1, 0
    %v394 = vadd.s32 %v384, %v388
    %v395 = vadd.s32 %v387, %v393
    %vm396 = vc.u32 %v394, %v390
    %v397 = vsel %vm396, 1, 0
    %v398 = vadd.s32 %v394, %v390
    %v399 = vadd.s32 %v395, %v397
    %v400 = vadd.s32 %v399, %v389
    %v401 = vadd.s32 %v400, %v391
    %v402 = vmul.u32 %v357, %v348
    %v403 = vadd.s32 %v379, %v398
    %vm404 = vc.u32 %v379, %v398
    %v405 = vadd.s32 %v401, 1
    %v406 = vsel %vm404, %v405, %v401
    %v407 = vadd.s32 %v402, %v406
    %v408 = vadd.s32 %v407, 536870912
    %v409 = vshrl.u32 %v408, 30
    %v410 = vshll.u32 %v409, 30
    %v411 = vsub.s32 %v407, %v410
    %vm412 = vcmp.lt.s32.totalorder %v411, 0
    %v413 = vsub.s32 0, %v411
    %v414 = vsel %vm412, %v413, %v411
    %v415 = vclz %v414
    %v416 = vsub.s32 %v415, 2
    %vm417 = vcmp.gt.s32.totalorder 0, %v416
    %v418 = vsel %vm417, 0, %v416
    %v419 = vsub.s32 32, %v418
    %v420 = vshll.u32 %v411, %v418
    %v421 = vshrl.u32 %v403, %v419
    %v422 = vor.u32 %v420, %v421
    %v423 = vsub.s32 4294967266, %v418
    %v424 = vadd.s32 %v423, 127
    %v425 = vshll.u32 %v424, 23
    %v426 = vor.u32 4788187, %v425
    %v427 = vand.u32 2147483647, %v426
    %v429 = vcvt.s32.f32 %v422
    %v430 = vmul.f32 %v429, %v427
    %v431 = vxor.u32 %v430, 2147483648
    %v432 = vsel %vm311, %v431, %v430
    %v433 = vsub.s32 4, %v409
    %v434 = vsel %vm311, %v433, %v409
    %v435 = vsel %vm310, %v277, %v432
    %v436 = vsel %vm310, 0, %v434
    %v437 = vmul.f32 %v435, %v435
    %v438 = vmul.f32 %v437, -0.001358992
    %v439 = vadd.f32 %v438, 0.041655596
    %v440 = vmul.f32 %v437, %v439
    %v441 = vadd.f32 %v440, -0.4999988
    %v442 = vmul.f32 %v437, %v441
    %v443 = vadd.f32 1.0, %v442
    %v444 = vmul.f32 %v435, %v435
    %v445 = vmul.f32 %v444, -0.00019511016
    %v446 = vadd.f32 %v445, 0.008332121
    %v447 = vmul.f32 %v444, %v446
    %v448 = vadd.f32 %v447, -0.16666654
    %v449 = vmul.f32 %v444, %v448
    %v450 = vadd.f32 %v449, 1.0
    %v451 = vmul.f32 %v450, %v435
    %vm452 = vweird.f32 %v277
    %v453 = vadd.s32 %v436, 3
    %v454 = vand.u32 %v453, 3
    %vm455 = vcmp.lt.s32.totalorder %v454, 2
    %vm456 = vcmp.eq.s32.totalorder %v454, 0
    %v457 = vxor.u32 %v451, 2147483648
    %v458 = vsel %vm456, %v443, %v457
    %vm459 = vcmp.eq.s32.totalorder %v454, 2
    %v460 = vxor.u32 %v443, 2147483648
    %v461 = vsel %vm459, %v460, %v451
    %v462 = vsel %vm455, %v458, %v461
    %v463 = vsel %vm452, nan, %v462
    %v464 = vand.u32 2147483647, %v278
    %vm465 = vcmp.le.f32.partialorder %v464, 0.7853982
    %vm466 = vcmp.lt.s32.totalorder %v278, 0
    %v467 = vand.u32 %v278, 2139095040
    %v468 = vshrl.u32 %v467, 23
    %v469 = vsub.s32 %v468, 127
    %v470 = vand.u32 2147483647, %v278
    %v471 = vand.u32 %v470, 8388607
    %v472 = vor.u32 %v471, 8388608
    %v473 = vsub.s32 0, %v472
    %v474 = vadd.s32 %v469, 1
    %vm475 = vcmp.gt.s32.totalorder %v474, 0
    %v476 = vsel %vm475, %v474, 0
    %v477 = vshrl.u32 %v476, 5
    %v478 = vand.u32 %v476, 31
    %v479 = vsub.s32 32, %v478
    %v480 = vshrl.u32 683565275, %v479
    %v481 = vshll.u32 683565275, %v478
    %v482 = vshrl.u32 2475754826, %v479
    %v483 = vor.u32 %v481, %v482
    %v484 = vshll.u32 2475754826, %v478
    %v485 = vshrl.u32 2131351028, %v479
    %v486 = vor.u32 %v484, %v485
    %v487 = vshll.u32 2131351028, %v478
    %v488 = vshrl.u32 2102212464, %v479
    %v489 = vor.u32 %v487, %v488
    %v490 = vshll.u32 2102212464, %v478
    %v491 = vshrl.u32 920167782, %v479
    %v492 = vor.u32 %v490, %v491
    %v493 = vshll.u32 920167782, %v478
    %v494 = vshrl.u32 1326507024, %v479
    %v495 = vor.u32 %v493, %v494
    %vm496 = vcmp.lt.s32.totalorder %v477, 1
    %vm497 = vcmp.lt.s32.totalorder %v477, 2
    %vm498 = vcmp.lt.s32.totalorder %v477, 3
    %vm499 = vcmp.lt.s32.totalorder %v477, 4
    %v500 = vsel %vm496, %v480, %v483
    %v501 = vsel %vm499, %v489, 2102212464
    %v502 = vsel %vm498, %v486, %v501
    %v503 = vsel %vm497, %v500, %v502
    %v504 = vsel %vm496, %v483, %v486
    %v505 = vsel %vm499, %v492, 920167782
    %v506 = vsel %vm498, %v489, %v505
    %v507 = vsel %vm497, %v504, %v506
    %v508 = vsel %vm496, %v486, %v489
    %v509 = vsel %vm499, %v495, 1326507024
    %v510 = vsel %vm498, %v492, %v509
    %v511 = vsel %vm497, %v508, %v510
    %v512 = vshll.u32 %v472, 8
    %v513 = vand.u32 %v512, 65535
    %v514 = vshrl.u32 %v512, 16
    %v515 = vand.u32 %v511, 65535
    %v516 = vshrl.u32 %v511, 16
    %v517 = vmul.u32 %v513, %v515
    %v518 = vmul.u32 %v513, %v516
    %v519 = vmul.u32 %v514, %v515
    %v520 = vmul.u32 %v514, %v516
    %v521 = vshll.u32 %v518, 16
    %v522 = vshrl.u32 %v518, 16
    %v523 = vshll.u32 %v519, 16
    %v524 = vshrl.u32 %v519, 16
    %vm525 = vc.u32 %v517, %v521
    %v526 = vsel %vm525, 1, 0
    %v527 = vadd.s32 %v517, %v521
    %v528 = vadd.s32 %v520, %v526
    %vm529 = vc.u32 %v527, %v523
    %v530 = vsel %vm529, 1, 0
    %v531 = vadd.s32 %v527, %v523
    %v532 = vadd.s32 %v528, %v530
    %v533 = vadd.s32 %v532, %v522
    %v534 = vadd.s32 %v533, %v524
    %v535 = vand.u32 %v512, 65535
    %v536 = vshrl.u32 %v512, 16
    %v537 = vand.u32 %v507, 65535
    %v538 = vshrl.u32 %v507, 16
    %v539 = vmul.u32 %v535, %v537
    %v540 = vmul.u32 %v535, %v538
    %v541 = vmul.u32 %v536, %v537
    %v542 = vmul.u32 %v536, %v538
    %v543 = vshll.u32 %v540, 16
    %v544 = vshrl.u32 %v540, 16
    %v545 = vshll.u32 %v541, 16
    %v546 = vshrl.u32 %v541, 16
    %vm547 = vc.u32 %v539, %v543
    %v548 = vsel %vm547, 1, 0
    %v549 = vadd.s32 %v539, %v543
    %v550 = vadd.s32 %v542, %v548
    %vm551 = vc.u32 %v549, %v545
    %v552 = vsel %vm551, 1, 0
    %v553 = vadd.s32 %v549, %v545
    %v554 = vadd.s32 %v550, %v552
    %v555 = vadd.s32 %v554, %v544
    %v556 = vadd.s32 %v555, %v546
    %v557 = vmul.u32 %v512, %v503
    %v558 = vadd.s32 %v534, %v553
    %vm559 = vc.u32 %v534, %v553
    %v560 = vadd.s32 %v556, 1
    %v561 = vsel %vm559, %v560, %v556
    %v562 = vadd.s32 %v557, %v561
    %v563 = vadd.s32 %v562, 536870912
    %v564 = vshrl.u32 %v563, 30
    %v565 = vshll.u32 %v564, 30
    %v566 = vsub.s32 %v562, %v565
    %vm567 = vcmp.lt.s32.totalorder %v566, 0
    %v568 = vsub.s32 0, %v566
    %v569 = vsel %vm567, %v568, %v566
    %v570 = vclz %v569
    %v571 = vsub.s32 %v570, 2
    %vm572 = vcmp.gt.s32.totalorder 0, %v571
    %v573 = vsel %vm572, 0, %v571
    %v574 = vsub.s32 32, %v573
    %v575 = vshll.u32 %v566, %v573
    %v576 = vshrl.u32 %v558, %v574
    %v577 = vor.u32 %v575, %v576
    %v578 = vsub.s32 4294967266, %v573
    %v579 = vadd.s32 %v578, 127
    %v580 = vshll.u32 %v579, 23
    %v581 = vor.u32 4788187, %v580
    %v582 = vand.u32 2147483647, %v581
    %v584 = vcvt.s32.f32 %v577
    %v585 = vmul.f32 %v584, %v582
    %v586 = vxor.u32 %v585, 2147483648
    %v587 = vsel %vm466, %v586, %v585
    %v588 = vsub.s32 4, %v564
    %v589 = vsel %vm466, %v588, %v564
    %v590 = vsel %vm465, %v278, %v587
    %v591 = vsel %vm465, 0, %v589
    %v592 = vmul.f32 %v590, %v590
    %v593 = vmul.f32 %v592, -0.001358992
    %v594 = vadd.f32 %v593, 0.041655596
    %v595 = vmul.f32 %v592, %v594
    %v596 = vadd.f32 %v595, -0.4999988
    %v597 = vmul.f32 %v592, %v596
    %v598 = vadd.f32 1.0, %v597
    %v599 = vmul.f32 %v590, %v590
    %v600 = vmul.f32 %v599, -0.00019511016
    %v601 = vadd.f32 %v600, 0.008332121
    %v602 = vmul.f32 %v599, %v601
    %v603 = vadd.f32 %v602, -0.16666654
    %v604 = vmul.f32 %v599, %v603
    %v605 = vadd.f32 %v604, 1.0
    %v606 = vmul.f32 %v605, %v590
    %vm607 = vweird.f32 %v278
    %v608 = vadd.s32 %v591, 3
    %v609 = vand.u32 %v608, 3
    %vm610 = vcmp.lt.s32.totalorder %v609, 2
    %vm611 = vcmp.eq.s32.totalorder %v609, 0
    %v612 = vxor.u32 %v606, 2147483648
    %v613 = vsel %vm611, %v598, %v612
    %vm614 = vcmp.eq.s32.totalorder %v609, 2
    %v615 = vxor.u32 %v598, 2147483648
    %v616 = vsel %vm614, %v615, %v606
    %v617 = vsel %vm610, %v613, %v616
    %v618 = vsel %vm607, nan, %v617
    %v619 = vand.u32 2147483647, %v279
    %vm620 = vcmp.le.f32.partialorder %v619, 0.7853982
    %vm621 = vcmp.lt.s32.totalorder %v279, 0
    %v622 = vand.u32 %v279, 2139095040
    %v623 = vshrl.u32 %v622, 23
    %v624 = vsub.s32 %v623, 127
    %v625 = vand.u32 2147483647, %v279
    %v626 = vand.u32 %v625, 8388607
    %v627 = vor.u32 %v626, 8388608
    %v628 = vsub.s32 0, %v627
    %v629 = vadd.s32 %v624, 1
    %vm630 = vcmp.gt.s32.totalorder %v629, 0
    %v631 = vsel %vm630, %v629, 0
    %v632 = vshrl.u32 %v631, 5
    %v633 = vand.u32 %v631, 31
    %v634 = vsub.s32 32, %v633
    %v635 = vshrl.u32 683565275, %v634
    %v636 = vshll.u32 683565275, %v633
    %v637 = vshrl.u32 2475754826, %v634
    %v638 = vor.u32 %v636, %v637
    %v639 = vshll.u32 2475754826, %v633
    %v640 = vshrl.u32 2131351028, %v634
    %v641 = vor.u32 %v639, %v640
    %v642 = vshll.u32 2131351028, %v633
    %v643 = vshrl.u32 2102212464, %v634
    %v644 = vor.u32 %v642, %v643
    %v645 = vshll.u32 2102212464, %v633
    %v646 = vshrl.u32 920167782, %v634
    %v647 = vor.u32 %v645, %v646
    %v648 = vshll.u32 920167782, %v633
    %v649 = vshrl.u32 1326507024, %v634
    %v650 = vor.u32 %v648, %v649
    %vm651 = vcmp.lt.s32.totalorder %v632, 1
    %vm652 = vcmp.lt.s32.totalorder %v632, 2
    %vm653 = vcmp.lt.s32.totalorder %v632, 3
    %vm654 = vcmp.lt.s32.totalorder %v632, 4
    %v655 = vsel %vm651, %v635, %v638
    %v656 = vsel %vm654, %v644, 2102212464
    %v657 = vsel %vm653, %v641, %v656
    %v658 = vsel %vm652, %v655, %v657
    %v659 = vsel %vm651, %v638, %v641
    %v660 = vsel %vm654, %v647, 920167782
    %v661 = vsel %vm653, %v644, %v660
    %v662 = vsel %vm652, %v659, %v661
    %v663 = vsel %vm651, %v641, %v644
    %v664 = vsel %vm654, %v650, 1326507024
    %v665 = vsel %vm653, %v647, %v664
    %v666 = vsel %vm652, %v663, %v665
    %v667 = vshll.u32 %v627, 8
    %v668 = vand.u32 %v667, 65535
    %v669 = vshrl.u32 %v667, 16
    %v670 = vand.u32 %v666, 65535
    %v671 = vshrl.u32 %v666, 16
    %v672 = vmul.u32 %v668, %v670
    %v673 = vmul.u32 %v668, %v671
    %v674 = vmul.u32 %v669, %v670
    %v675 = vmul.u32 %v669, %v671
    %v676 = vshll.u32 %v673, 16
    %v677 = vshrl.u32 %v673, 16
    %v678 = vshll.u32 %v674, 16
    %v679 = vshrl.u32 %v674, 16
    %vm680 = vc.u32 %v672, %v676
    %v681 = vsel %vm680, 1, 0
    %v682 = vadd.s32 %v672, %v676
    %v683 = vadd.s32 %v675, %v681
    %vm684 = vc.u32 %v682, %v678
    %v685 = vsel %vm684, 1, 0
    %v686 = vadd.s32 %v682, %v678
    %v687 = vadd.s32 %v683, %v685
    %v688 = vadd.s32 %v687, %v677
    %v689 = vadd.s32 %v688, %v679
    %v690 = vand.u32 %v667, 65535
    %v691 = vshrl.u32 %v667, 16
    %v692 = vand.u32 %v662, 65535
    %v693 = vshrl.u32 %v662, 16
    %v694 = vmul.u32 %v690, %v692
    %v695 = vmul.u32 %v690, %v693
    %v696 = vmul.u32 %v691, %v692
    %v697 = vmul.u32 %v691, %v693
    %v698 = vshll.u32 %v695, 16
    %v699 = vshrl.u32 %v695, 16
    %v700 = vshll.u32 %v696, 16
    %v701 = vshrl.u32 %v696, 16
    %vm702 = vc.u32 %v694, %v698
    %v703 = vsel %vm702, 1, 0
    %v704 = vadd.s32 %v694, %v698
    %v705 = vadd.s32 %v697, %v703
    %vm706 = vc.u32 %v704, %v700
    %v707 = vsel %vm706, 1, 0
    %v708 = vadd.s32 %v704, %v700
    %v709 = vadd.s32 %v705, %v707
    %v710 = vadd.s32 %v709, %v699
    %v711 = vadd.s32 %v710, %v701
    %v712 = vmul.u32 %v667, %v658
    %v713 = vadd.s32 %v689, %v708
    %vm714 = vc.u32 %v689, %v708
    %v715 = vadd.s32 %v711, 1
    %v716 = vsel %vm714, %v715, %v711
    %v717 = vadd.s32 %v712, %v716
    %v718 = vadd.s32 %v717, 536870912
    %v719 = vshrl.u32 %v718, 30
    %v720 = vshll.u32 %v719, 30
    %v721 = vsub.s32 %v717, %v720
    %vm722 = vcmp.lt.s32.totalorder %v721, 0
    %v723 = vsub.s32 0, %v721
    %v724 = vsel %vm722, %v723, %v721
    %v725 = vclz %v724
    %v726 = vsub.s32 %v725, 2
    %vm727 = vcmp.gt.s32.totalorder 0, %v726
    %v728 = vsel %vm727, 0, %v726
    %v729 = vsub.s32 32, %v728
    %v730 = vshll.u32 %v721, %v728
    %v731 = vshrl.u32 %v713, %v729
    %v732 = vor.u32 %v730, %v731
    %v733 = vsub.s32 4294967266, %v728
    %v734 = vadd.s32 %v733, 127
    %v735 = vshll.u32 %v734, 23
    %v736 = vor.u32 4788187, %v735
    %v737 = vand.u32 2147483647, %v736
    %v739 = vcvt.s32.f32 %v732
    %v740 = vmul.f32 %v739, %v737
    %v741 = vxor.u32 %v740, 2147483648
    %v742 = vsel %vm621, %v741, %v740
    %v743 = vsub.s32 4, %v719
    %v744 = vsel %vm621, %v743, %v719
    %v745 = vsel %vm620, %v279, %v742
    %v746 = vsel %vm620, 0, %v744
    %v747 = vmul.f32 %v745, %v745
    %v748 = vmul.f32 %v747, -0.001358992
    %v749 = vadd.f32 %v748, 0.041655596
    %v750 = vmul.f32 %v747, %v749
    %v751 = vadd.f32 %v750, -0.4999988
    %v752 = vmul.f32 %v747, %v751
    %v753 = vadd.f32 1.0, %v752
    %v754 = vmul.f32 %v745, %v745
    %v755 = vmul.f32 %v754, -0.00019511016
    %v756 = vadd.f32 %v755, 0.008332121
    %v757 = vmul.f32 %v754, %v756
    %v758 = vadd.f32 %v757, -0.16666654
    %v759 = vmul.f32 %v754, %v758
    %v760 = vadd.f32 %v759, 1.0
    %v761 = vmul.f32 %v760, %v745
    %vm762 = vweird.f32 %v279
    %v763 = vadd.s32 %v746, 3
    %v764 = vand.u32 %v763, 3
    %vm765 = vcmp.lt.s32.totalorder %v764, 2
    %vm766 = vcmp.eq.s32.totalorder %v764, 0
    %v767 = vxor.u32 %v761, 2147483648
    %v768 = vsel %vm766, %v753, %v767
    %vm769 = vcmp.eq.s32.totalorder %v764, 2
    %v770 = vxor.u32 %v753, 2147483648
    %v771 = vsel %vm769, %v770, %v761
    %v772 = vsel %vm765, %v768, %v771
    %v773 = vsel %vm762, nan, %v772
    %v774 = vand.u32 2147483647, %v280
    %vm775 = vcmp.le.f32.partialorder %v774, 0.7853982
    %vm776 = vcmp.lt.s32.totalorder %v280, 0
    %v777 = vand.u32 %v280, 2139095040
    %v778 = vshrl.u32 %v777, 23
    %v779 = vsub.s32 %v778, 127
    %v780 = vand.u32 2147483647, %v280
    %v781 = vand.u32 %v780, 8388607
    %v782 = vor.u32 %v781, 8388608
    %v783 = vsub.s32 0, %v782
    %v784 = vadd.s32 %v779, 1
    %vm785 = vcmp.gt.s32.totalorder %v784, 0
    %v786 = vsel %vm785, %v784, 0
    %v787 = vshrl.u32 %v786, 5
    %v788 = vand.u32 %v786, 31
    %v789 = vsub.s32 32, %v788
    %v790 = vshrl.u32 683565275, %v789
    %v791 = vshll.u32 683565275, %v788
    %v792 = vshrl.u32 2475754826, %v789
    %v793 = vor.u32 %v791, %v792
    %v794 = vshll.u32 2475754826, %v788
    %v795 = vshrl.u32 2131351028, %v789
    %v796 = vor.u32 %v794, %v795
    %v797 = vshll.u32 2131351028, %v788
    %v798 = vshrl.u32 2102212464, %v789
    %v799 = vor.u32 %v797, %v798
    %v800 = vshll.u32 2102212464, %v788
    %v801 = vshrl.u32 920167782, %v789
    %v802 = vor.u32 %v800, %v801
    %v803 = vshll.u32 920167782, %v788
    %v804 = vshrl.u32 1326507024, %v789
    %v805 = vor.u32 %v803, %v804
    %vm806 = vcmp.lt.s32.totalorder %v787, 1
    %vm807 = vcmp.lt.s32.totalorder %v787, 2
    %vm808 = vcmp.lt.s32.totalorder %v787, 3
    %vm809 = vcmp.lt.s32.totalorder %v787, 4
    %v810 = vsel %vm806, %v790, %v793
    %v811 = vsel %vm809, %v799, 2102212464
    %v812 = vsel %vm808, %v796, %v811
    %v813 = vsel %vm807, %v810, %v812
    %v814 = vsel %vm806, %v793, %v796
    %v815 = vsel %vm809, %v802, 920167782
    %v816 = vsel %vm808, %v799, %v815
    %v817 = vsel %vm807, %v814, %v816
    %v818 = vsel %vm806, %v796, %v799
    %v819 = vsel %vm809, %v805, 1326507024
    %v820 = vsel %vm808, %v802, %v819
    %v821 = vsel %vm807, %v818, %v820
    %v822 = vshll.u32 %v782, 8
    %v823 = vand.u32 %v822, 65535
    %v824 = vshrl.u32 %v822, 16
    %v825 = vand.u32 %v821, 65535
    %v826 = vshrl.u32 %v821, 16
    %v827 = vmul.u32 %v823, %v825
    %v828 = vmul.u32 %v823, %v826
    %v829 = vmul.u32 %v824, %v825
    %v830 = vmul.u32 %v824, %v826
    %v831 = vshll.u32 %v828, 16
    %v832 = vshrl.u32 %v828, 16
    %v833 = vshll.u32 %v829, 16
    %v834 = vshrl.u32 %v829, 16
    %vm835 = vc.u32 %v827, %v831
    %v836 = vsel %vm835, 1, 0
    %v837 = vadd.s32 %v827, %v831
    %v838 = vadd.s32 %v830, %v836
    %vm839 = vc.u32 %v837, %v833
    %v840 = vsel %vm839, 1, 0
    %v841 = vadd.s32 %v837, %v833
    %v842 = vadd.s32 %v838, %v840
    %v843 = vadd.s32 %v842, %v832
    %v844 = vadd.s32 %v843, %v834
    %v845 = vand.u32 %v822, 65535
    %v846 = vshrl.u32 %v822, 16
    %v847 = vand.u32 %v817, 65535
    %v848 = vshrl.u32 %v817, 16
    %v849 = vmul.u32 %v845, %v847
    %v850 = vmul.u32 %v845, %v848
    %v851 = vmul.u32 %v846, %v847
    %v852 = vmul.u32 %v846, %v848
    %v853 = vshll.u32 %v850, 16
    %v854 = vshrl.u32 %v850, 16
    %v855 = vshll.u32 %v851, 16
    %v856 = vshrl.u32 %v851, 16
    %vm857 = vc.u32 %v849, %v853
    %v858 = vsel %vm857, 1, 0
    %v859 = vadd.s32 %v849, %v853
    %v860 = vadd.s32 %v852, %v858
    %vm861 = vc.u32 %v859, %v855
    %v862 = vsel %vm861, 1, 0
    %v863 = vadd.s32 %v859, %v855
    %v864 = vadd.s32 %v860, %v862
    %v865 = vadd.s32 %v864, %v854
    %v866 = vadd.s32 %v865, %v856
    %v867 = vmul.u32 %v822, %v813
    %v868 = vadd.s32 %v844, %v863
    %vm869 = vc.u32 %v844, %v863
    %v870 = vadd.s32 %v866, 1
    %v871 = vsel %vm869, %v870, %v866
    %v872 = vadd.s32 %v867, %v871
    %v873 = vadd.s32 %v872, 536870912
    %v874 = vshrl.u32 %v873, 30
    %v875 = vshll.u32 %v874, 30
    %v876 = vsub.s32 %v872, %v875
    %vm877 = vcmp.lt.s32.totalorder %v876, 0
    %v878 = vsub.s32 0, %v876
    %v879 = vsel %vm877, %v878, %v876
    %v880 = vclz %v879
    %v881 = vsub.s32 %v880, 2
    %vm882 = vcmp.gt.s32.totalorder 0, %v881
    %v883 = vsel %vm882, 0, %v881
    %v884 = vsub.s32 32, %v883
    %v885 = vshll.u32 %v876, %v883
    %v886 = vshrl.u32 %v868, %v884
    %v887 = vor.u32 %v885, %v886
    %v888 = vsub.s32 4294967266, %v883
    %v889 = vadd.s32 %v888, 127
    %v890 = vshll.u32 %v889, 23
    %v891 = vor.u32 4788187, %v890
    %v892 = vand.u32 2147483647, %v891
    %v894 = vcvt.s32.f32 %v887
    %v895 = vmul.f32 %v894, %v892
    %v896 = vxor.u32 %v895, 2147483648
    %v897 = vsel %vm776, %v896, %v895
    %v898 = vsub.s32 4, %v874
    %v899 = vsel %vm776, %v898, %v874
    %v900 = vsel %vm775, %v280, %v897
    %v901 = vsel %vm775, 0, %v899
    %v902 = vmul.f32 %v900, %v900
    %v903 = vmul.f32 %v902, -0.001358992
    %v904 = vadd.f32 %v903, 0.041655596
    %v905 = vmul.f32 %v902, %v904
    %v906 = vadd.f32 %v905, -0.4999988
    %v907 = vmul.f32 %v902, %v906
    %v908 = vadd.f32 1.0, %v907
    %v909 = vmul.f32 %v900, %v900
    %v910 = vmul.f32 %v909, -0.00019511016
    %v911 = vadd.f32 %v910, 0.008332121
    %v912 = vmul.f32 %v909, %v911
    %v913 = vadd.f32 %v912, -0.16666654
    %v914 = vmul.f32 %v909, %v913
    %v915 = vadd.f32 %v914, 1.0
    %v916 = vmul.f32 %v915, %v900
    %vm917 = vweird.f32 %v280
    %v918 = vadd.s32 %v901, 3
    %v919 = vand.u32 %v918, 3
    %vm920 = vcmp.lt.s32.totalorder %v919, 2
    %vm921 = vcmp.eq.s32.totalorder %v919, 0
    %v922 = vxor.u32 %v916, 2147483648
    %v923 = vsel %vm921, %v908, %v922
    %vm924 = vcmp.eq.s32.totalorder %v919, 2
    %v925 = vxor.u32 %v908, 2147483648
    %v926 = vsel %vm924, %v925, %v916
    %v927 = vsel %vm920, %v923, %v926
    %v928 = vsel %vm917, nan, %v927
    %v929 = vand.u32 2147483647, %v281
    %vm930 = vcmp.le.f32.partialorder %v929, 0.7853982
    %vm931 = vcmp.lt.s32.totalorder %v281, 0
    %v932 = vand.u32 %v281, 2139095040
    %v933 = vshrl.u32 %v932, 23
    %v934 = vsub.s32 %v933, 127
    %v935 = vand.u32 2147483647, %v281
    %v936 = vand.u32 %v935, 8388607
    %v937 = vor.u32 %v936, 8388608
    %v938 = vsub.s32 0, %v937
    %v939 = vadd.s32 %v934, 1
    %vm940 = vcmp.gt.s32.totalorder %v939, 0
    %v941 = vsel %vm940, %v939, 0
    %v942 = vshrl.u32 %v941, 5
    %v943 = vand.u32 %v941, 31
    %v944 = vsub.s32 32, %v943
    %v945 = vshrl.u32 683565275, %v944
    %v946 = vshll.u32 683565275, %v943
    %v947 = vshrl.u32 2475754826, %v944
    %v948 = vor.u32 %v946, %v947
    %v949 = vshll.u32 2475754826, %v943
    %v950 = vshrl.u32 2131351028, %v944
    %v951 = vor.u32 %v949, %v950
    %v952 = vshll.u32 2131351028, %v943
    %v953 = vshrl.u32 2102212464, %v944
    %v954 = vor.u32 %v952, %v953
    %v955 = vshll.u32 2102212464, %v943
    %v956 = vshrl.u32 920167782, %v944
    %v957 = vor.u32 %v955, %v956
    %v958 = vshll.u32 920167782, %v943
    %v959 = vshrl.u32 1326507024, %v944
    %v960 = vor.u32 %v958, %v959
    %vm961 = vcmp.lt.s32.totalorder %v942, 1
    %vm962 = vcmp.lt.s32.totalorder %v942, 2
    %vm963 = vcmp.lt.s32.totalorder %v942, 3
    %vm964 = vcmp.lt.s32.totalorder %v942, 4
    %v965 = vsel %vm961, %v945, %v948
    %v966 = vsel %vm964, %v954, 2102212464
    %v967 = vsel %vm963, %v951, %v966
    %v968 = vsel %vm962, %v965, %v967
    %v969 = vsel %vm961, %v948, %v951
    %v970 = vsel %vm964, %v957, 920167782
    %v971 = vsel %vm963, %v954, %v970
    %v972 = vsel %vm962, %v969, %v971
    %v973 = vsel %vm961, %v951, %v954
    %v974 = vsel %vm964, %v960, 1326507024
    %v975 = vsel %vm963, %v957, %v974
    %v976 = vsel %vm962, %v973, %v975
    %v977 = vshll.u32 %v937, 8
    %v978 = vand.u32 %v977, 65535
    %v979 = vshrl.u32 %v977, 16
    %v980 = vand.u32 %v976, 65535
    %v981 = vshrl.u32 %v976, 16
    %v982 = vmul.u32 %v978, %v980
    %v983 = vmul.u32 %v978, %v981
    %v984 = vmul.u32 %v979, %v980
    %v985 = vmul.u32 %v979, %v981
    %v986 = vshll.u32 %v983, 16
    %v987 = vshrl.u32 %v983, 16
    %v988 = vshll.u32 %v984, 16
    %v989 = vshrl.u32 %v984, 16
    %vm990 = vc.u32 %v982, %v986
    %v991 = vsel %vm990, 1, 0
    %v992 = vadd.s32 %v982, %v986
    %v993 = vadd.s32 %v985, %v991
    %vm994 = vc.u32 %v992, %v988
    %v995 = vsel %vm994, 1, 0
    %v996 = vadd.s32 %v992, %v988
    %v997 = vadd.s32 %v993, %v995
    %v998 = vadd.s32 %v997, %v987
    %v999 = vadd.s32 %v998, %v989
    %v1000 = vand.u32 %v977, 65535
    %v1001 = vshrl.u32 %v977, 16
    %v1002 = vand.u32 %v972, 65535
    %v1003 = vshrl.u32 %v972, 16
    %v1004 = vmul.u32 %v1000, %v1002
    %v1005 = vmul.u32 %v1000, %v1003
    %v1006 = vmul.u32 %v1001, %v1002
    %v1007 = vmul.u32 %v1001, %v1003
    %v1008 = vshll.u32 %v1005, 16
    %v1009 = vshrl.u32 %v1005, 16
    %v1010 = vshll.u32 %v1006, 16
    %v1011 = vshrl.u32 %v1006, 16
    %vm1012 = vc.u32 %v1004, %v1008
    %v1013 = vsel %vm1012, 1, 0
    %v1014 = vadd.s32 %v1004, %v1008
    %v1015 = vadd.s32 %v1007, %v1013
    %vm1016 = vc.u32 %v1014, %v1010
    %v1017 = vsel %vm1016, 1, 0
    %v1018 = vadd.s32 %v1014, %v1010
    %v1019 = vadd.s32 %v1015, %v1017
    %v1020 = vadd.s32 %v1019, %v1009
    %v1021 = vadd.s32 %v1020, %v1011
    %v1022 = vmul.u32 %v977, %v968
    %v1023 = vadd.s32 %v999, %v1018
    %vm1024 = vc.u32 %v999, %v1018
    %v1025 = vadd.s32 %v1021, 1
    %v1026 = vsel %vm1024, %v1025, %v1021
    %v1027 = vadd.s32 %v1022, %v1026
    %v1028 = vadd.s32 %v1027, 536870912
    %v1029 = vshrl.u32 %v1028, 30
    %v1030 = vshll.u32 %v1029, 30
    %v1031 = vsub.s32 %v1027, %v1030
    %vm1032 = vcmp.lt.s32.totalorder %v1031, 0
    %v1033 = vsub.s32 0, %v1031
    %v1034 = vsel %vm1032, %v1033, %v1031
    %v1035 = vclz %v1034
    %v1036 = vsub.s32 %v1035, 2
    %vm1037 = vcmp.gt.s32.totalorder 0, %v1036
    %v1038 = vsel %vm1037, 0, %v1036
    %v1039 = vsub.s32 32, %v1038
    %v1040 = vshll.u32 %v1031, %v1038
    %v1041 = vshrl.u32 %v1023, %v1039
    %v1042 = vor.u32 %v1040, %v1041
    %v1043 = vsub.s32 4294967266, %v1038
    %v1044 = vadd.s32 %v1043, 127
    %v1045 = vshll.u32 %v1044, 23
    %v1046 = vor.u32 4788187, %v1045
    %v1047 = vand.u32 2147483647, %v1046
    %v1049 = vcvt.s32.f32 %v1042
    %v1050 = vmul.f32 %v1049, %v1047
    %v1051 = vxor.u32 %v1050, 2147483648
    %v1052 = vsel %vm931, %v1051, %v1050
    %v1053 = vsub.s32 4, %v1029
    %v1054 = vsel %vm931, %v1053, %v1029
    %v1055 = vsel %vm930, %v281, %v1052
    %v1056 = vsel %vm930, 0, %v1054
    %v1057 = vmul.f32 %v1055, %v1055
    %v1058 = vmul.f32 %v1057, -0.001358992
    %v1059 = vadd.f32 %v1058, 0.041655596
    %v1060 = vmul.f32 %v1057, %v1059
    %v1061 = vadd.f32 %v1060, -0.4999988
    %v1062 = vmul.f32 %v1057, %v1061
    %v1063 = vadd.f32 1.0, %v1062
    %v1064 = vmul.f32 %v1055, %v1055
    %v1065 = vmul.f32 %v1064, -0.00019511016
    %v1066 = vadd.f32 %v1065, 0.008332121
    %v1067 = vmul.f32 %v1064, %v1066
    %v1068 = vadd.f32 %v1067, -0.16666654
    %v1069 = vmul.f32 %v1064, %v1068
    %v1070 = vadd.f32 %v1069, 1.0
    %v1071 = vmul.f32 %v1070, %v1055
    %vm1072 = vweird.f32 %v281
    %v1073 = vadd.s32 %v1056, 3
    %v1074 = vand.u32 %v1073, 3
    %vm1075 = vcmp.lt.s32.totalorder %v1074, 2
    %vm1076 = vcmp.eq.s32.totalorder %v1074, 0
    %v1077 = vxor.u32 %v1071, 2147483648
    %v1078 = vsel %vm1076, %v1063, %v1077
    %vm1079 = vcmp.eq.s32.totalorder %v1074, 2
    %v1080 = vxor.u32 %v1063, 2147483648
    %v1081 = vsel %vm1079, %v1080, %v1071
    %v1082 = vsel %vm1075, %v1078, %v1081
    %v1083 = vsel %vm1072, nan, %v1082
    %v1084 = vand.u32 2147483647, %v282
    %vm1085 = vcmp.le.f32.partialorder %v1084, 0.7853982
    %vm1086 = vcmp.lt.s32.totalorder %v282, 0
    %v1087 = vand.u32 %v282, 2139095040
    %v1088 = vshrl.u32 %v1087, 23
    %v1089 = vsub.s32 %v1088, 127
    %v1090 = vand.u32 2147483647, %v282
    %v1091 = vand.u32 %v1090, 8388607
    %v1092 = vor.u32 %v1091, 8388608
    %v1093 = vsub.s32 0, %v1092
    %v1094 = vadd.s32 %v1089, 1
    %vm1095 = vcmp.gt.s32.totalorder %v1094, 0
    %v1096 = vsel %vm1095, %v1094, 0
    %v1097 = vshrl.u32 %v1096, 5
    %v1098 = vand.u32 %v1096, 31
    %v1099 = vsub.s32 32, %v1098
    %v1100 = vshrl.u32 683565275, %v1099
    %v1101 = vshll.u32 683565275, %v1098
    %v1102 = vshrl.u32 2475754826, %v1099
    %v1103 = vor.u32 %v1101, %v1102
    %v1104 = vshll.u32 2475754826, %v1098
    %v1105 = vshrl.u32 2131351028, %v1099
    %v1106 = vor.u32 %v1104, %v1105
    %v1107 = vshll.u32 2131351028, %v1098
    %v1108 = vshrl.u32 2102212464, %v1099
    %v1109 = vor.u32 %v1107, %v1108
    %v1110 = vshll.u32 2102212464, %v1098
    %v1111 = vshrl.u32 920167782, %v1099
    %v1112 = vor.u32 %v1110, %v1111
    %v1113 = vshll.u32 920167782, %v1098
    %v1114 = vshrl.u32 1326507024, %v1099
    %v1115 = vor.u32 %v1113, %v1114
    %vm1116 = vcmp.lt.s32.totalorder %v1097, 1
    %vm1117 = vcmp.lt.s32.totalorder %v1097, 2
    %vm1118 = vcmp.lt.s32.totalorder %v1097, 3
    %vm1119 = vcmp.lt.s32.totalorder %v1097, 4
    %v1120 = vsel %vm1116, %v1100, %v1103
    %v1121 = vsel %vm1119, %v1109, 2102212464
    %v1122 = vsel %vm1118, %v1106, %v1121
    %v1123 = vsel %vm1117, %v1120, %v1122
    %v1124 = vsel %vm1116, %v1103, %v1106
    %v1125 = vsel %vm1119, %v1112, 920167782
    %v1126 = vsel %vm1118, %v1109, %v1125
    %v1127 = vsel %vm1117, %v1124, %v1126
    %v1128 = vsel %vm1116, %v1106, %v1109
    %v1129 = vsel %vm1119, %v1115, 1326507024
    %v1130 = vsel %vm1118, %v1112, %v1129
    %v1131 = vsel %vm1117, %v1128, %v1130
    %v1132 = vshll.u32 %v1092, 8
    %v1133 = vand.u32 %v1132, 65535
    %v1134 = vshrl.u32 %v1132, 16
    %v1135 = vand.u32 %v1131, 65535
    %v1136 = vshrl.u32 %v1131, 16
    %v1137 = vmul.u32 %v1133, %v1135
    %v1138 = vmul.u32 %v1133, %v1136
    %v1139 = vmul.u32 %v1134, %v1135
    %v1140 = vmul.u32 %v1134, %v1136
    %v1141 = vshll.u32 %v1138, 16
    %v1142 = vshrl.u32 %v1138, 16
    %v1143 = vshll.u32 %v1139, 16
    %v1144 = vshrl.u32 %v1139, 16
    %vm1145 = vc.u32 %v1137, %v1141
    %v1146 = vsel %vm1145, 1, 0
    %v1147 = vadd.s32 %v1137, %v1141
    %v1148 = vadd.s32 %v1140, %v1146
    %vm1149 = vc.u32 %v1147, %v1143
    %v1150 = vsel %vm1149, 1, 0
    %v1151 = vadd.s32 %v1147, %v1143
    %v1152 = vadd.s32 %v1148, %v1150
    %v1153 = vadd.s32 %v1152, %v1142
    %v1154 = vadd.s32 %v1153, %v1144
    %v1155 = vand.u32 %v1132, 65535
    %v1156 = vshrl.u32 %v1132, 16
    %v1157 = vand.u32 %v1127, 65535
    %v1158 = vshrl.u32 %v1127, 16
    %v1159 = vmul.u32 %v1155, %v1157
    %v1160 = vmul.u32 %v1155, %v1158
    %v1161 = vmul.u32 %v1156, %v1157
    %v1162 = vmul.u32 %v1156, %v1158
    %v1163 = vshll.u32 %v1160, 16
    %v1164 = vshrl.u32 %v1160, 16
    %v1165 = vshll.u32 %v1161, 16
    %v1166 = vshrl.u32 %v1161, 16
    %vm1167 = vc.u32 %v1159, %v1163
    %v1168 = vsel %vm1167, 1, 0
    %v1169 = vadd.s32 %v1159, %v1163
    %v1170 = vadd.s32 %v1162, %v1168
    %vm1171 = vc.u32 %v1169, %v1165
    %v1172 = vsel %vm1171, 1, 0
    %v1173 = vadd.s32 %v1169, %v1165
    %v1174 = vadd.s32 %v1170, %v1172
    %v1175 = vadd.s32 %v1174, %v1164
    %v1176 = vadd.s32 %v1175, %v1166
    %v1177 = vmul.u32 %v1132, %v1123
    %v1178 = vadd.s32 %v1154, %v1173
    %vm1179 = vc.u32 %v1154, %v1173
    %v1180 = vadd.s32 %v1176, 1
    %v1181 = vsel %vm1179, %v1180, %v1176
    %v1182 = vadd.s32 %v1177, %v1181
    %v1183 = vadd.s32 %v1182, 536870912
    %v1184 = vshrl.u32 %v1183, 30
    %v1185 = vshll.u32 %v1184, 30
    %v1186 = vsub.s32 %v1182, %v1185
    %vm1187 = vcmp.lt.s32.totalorder %v1186, 0
    %v1188 = vsub.s32 0, %v1186
    %v1189 = vsel %vm1187, %v1188, %v1186
    %v1190 = vclz %v1189
    %v1191 = vsub.s32 %v1190, 2
    %vm1192 = vcmp.gt.s32.totalorder 0, %v1191
    %v1193 = vsel %vm1192, 0, %v1191
    %v1194 = vsub.s32 32, %v1193
    %v1195 = vshll.u32 %v1186, %v1193
    %v1196 = vshrl.u32 %v1178, %v1194
    %v1197 = vor.u32 %v1195, %v1196
    %v1198 = vsub.s32 4294967266, %v1193
    %v1199 = vadd.s32 %v1198, 127
    %v1200 = vshll.u32 %v1199, 23
    %v1201 = vor.u32 4788187, %v1200
    %v1202 = vand.u32 2147483647, %v1201
    %v1204 = vcvt.s32.f32 %v1197
    %v1205 = vmul.f32 %v1204, %v1202
    %v1206 = vxor.u32 %v1205, 2147483648
    %v1207 = vsel %vm1086, %v1206, %v1205
    %v1208 = vsub.s32 4, %v1184
    %v1209 = vsel %vm1086, %v1208, %v1184
    %v1210 = vsel %vm1085, %v282, %v1207
    %v1211 = vsel %vm1085, 0, %v1209
    %v1212 = vmul.f32 %v1210, %v1210
    %v1213 = vmul.f32 %v1212, -0.001358992
    %v1214 = vadd.f32 %v1213, 0.041655596
    %v1215 = vmul.f32 %v1212, %v1214
    %v1216 = vadd.f32 %v1215, -0.4999988
    %v1217 = vmul.f32 %v1212, %v1216
    %v1218 = vadd.f32 1.0, %v1217
    %v1219 = vmul.f32 %v1210, %v1210
    %v1220 = vmul.f32 %v1219, -0.00019511016
    %v1221 = vadd.f32 %v1220, 0.008332121
    %v1222 = vmul.f32 %v1219, %v1221
    %v1223 = vadd.f32 %v1222, -0.16666654
    %v1224 = vmul.f32 %v1219, %v1223
    %v1225 = vadd.f32 %v1224, 1.0
    %v1226 = vmul.f32 %v1225, %v1210
    %vm1227 = vweird.f32 %v282
    %v1228 = vadd.s32 %v1211, 3
    %v1229 = vand.u32 %v1228, 3
    %vm1230 = vcmp.lt.s32.totalorder %v1229, 2
    %vm1231 = vcmp.eq.s32.totalorder %v1229, 0
    %v1232 = vxor.u32 %v1226, 2147483648
    %v1233 = vsel %vm1231, %v1218, %v1232
    %vm1234 = vcmp.eq.s32.totalorder %v1229, 2
    %v1235 = vxor.u32 %v1218, 2147483648
    %v1236 = vsel %vm1234, %v1235, %v1226
    %v1237 = vsel %vm1230, %v1233, %v1236
    %v1238 = vsel %vm1227, nan, %v1237
    %v1239 = vand.u32 2147483647, %v283
    %vm1240 = vcmp.le.f32.partialorder %v1239, 0.7853982
    %vm1241 = vcmp.lt.s32.totalorder %v283, 0
    %v1242 = vand.u32 %v283, 2139095040
    %v1243 = vshrl.u32 %v1242, 23
    %v1244 = vsub.s32 %v1243, 127
    %v1245 = vand.u32 2147483647, %v283
    %v1246 = vand.u32 %v1245, 8388607
    %v1247 = vor.u32 %v1246, 8388608
    %v1248 = vsub.s32 0, %v1247
    %v1249 = vadd.s32 %v1244, 1
    %vm1250 = vcmp.gt.s32.totalorder %v1249, 0
    %v1251 = vsel %vm1250, %v1249, 0
    %v1252 = vshrl.u32 %v1251, 5
    %v1253 = vand.u32 %v1251, 31
    %v1254 = vsub.s32 32, %v1253
    %v1255 = vshrl.u32 683565275, %v1254
    %v1256 = vshll.u32 683565275, %v1253
    %v1257 = vshrl.u32 2475754826, %v1254
    %v1258 = vor.u32 %v1256, %v1257
    %v1259 = vshll.u32 2475754826, %v1253
    %v1260 = vshrl.u32 2131351028, %v1254
    %v1261 = vor.u32 %v1259, %v1260
    %v1262 = vshll.u32 2131351028, %v1253
    %v1263 = vshrl.u32 2102212464, %v1254
    %v1264 = vor.u32 %v1262, %v1263
    %v1265 = vshll.u32 2102212464, %v1253
    %v1266 = vshrl.u32 920167782, %v1254
    %v1267 = vor.u32 %v1265, %v1266
    %v1268 = vshll.u32 920167782, %v1253
    %v1269 = vshrl.u32 1326507024, %v1254
    %v1270 = vor.u32 %v1268, %v1269
    %vm1271 = vcmp.lt.s32.totalorder %v1252, 1
    %vm1272 = vcmp.lt.s32.totalorder %v1252, 2
    %vm1273 = vcmp.lt.s32.totalorder %v1252, 3
    %vm1274 = vcmp.lt.s32.totalorder %v1252, 4
    %v1275 = vsel %vm1271, %v1255, %v1258
    %v1276 = vsel %vm1274, %v1264, 2102212464
    %v1277 = vsel %vm1273, %v1261, %v1276
    %v1278 = vsel %vm1272, %v1275, %v1277
    %v1279 = vsel %vm1271, %v1258, %v1261
    %v1280 = vsel %vm1274, %v1267, 920167782
    %v1281 = vsel %vm1273, %v1264, %v1280
    %v1282 = vsel %vm1272, %v1279, %v1281
    %v1283 = vsel %vm1271, %v1261, %v1264
    %v1284 = vsel %vm1274, %v1270, 1326507024
    %v1285 = vsel %vm1273, %v1267, %v1284
    %v1286 = vsel %vm1272, %v1283, %v1285
    %v1287 = vshll.u32 %v1247, 8
    %v1288 = vand.u32 %v1287, 65535
    %v1289 = vshrl.u32 %v1287, 16
    %v1290 = vand.u32 %v1286, 65535
    %v1291 = vshrl.u32 %v1286, 16
    %v1292 = vmul.u32 %v1288, %v1290
    %v1293 = vmul.u32 %v1288, %v1291
    %v1294 = vmul.u32 %v1289, %v1290
    %v1295 = vmul.u32 %v1289, %v1291
    %v1296 = vshll.u32 %v1293, 16
    %v1297 = vshrl.u32 %v1293, 16
    %v1298 = vshll.u32 %v1294, 16
    %v1299 = vshrl.u32 %v1294, 16
    %vm1300 = vc.u32 %v1292, %v1296
    %v1301 = vsel %vm1300, 1, 0
    %v1302 = vadd.s32 %v1292, %v1296
    %v1303 = vadd.s32 %v1295, %v1301
    %vm1304 = vc.u32 %v1302, %v1298
    %v1305 = vsel %vm1304, 1, 0
    %v1306 = vadd.s32 %v1302, %v1298
    %v1307 = vadd.s32 %v1303, %v1305
    %v1308 = vadd.s32 %v1307, %v1297
    %v1309 = vadd.s32 %v1308, %v1299
    %v1310 = vand.u32 %v1287, 65535
    %v1311 = vshrl.u32 %v1287, 16
    %v1312 = vand.u32 %v1282, 65535
    %v1313 = vshrl.u32 %v1282, 16
    %v1314 = vmul.u32 %v1310, %v1312
    %v1315 = vmul.u32 %v1310, %v1313
    %v1316 = vmul.u32 %v1311, %v1312
    %v1317 = vmul.u32 %v1311, %v1313
    %v1318 = vshll.u32 %v1315, 16
    %v1319 = vshrl.u32 %v1315, 16
    %v1320 = vshll.u32 %v1316, 16
    %v1321 = vshrl.u32 %v1316, 16
    %vm1322 = vc.u32 %v1314, %v1318
    %v1323 = vsel %vm1322, 1, 0
    %v1324 = vadd.s32 %v1314, %v1318
    %v1325 = vadd.s32 %v1317, %v1323
    %vm1326 = vc.u32 %v1324, %v1320
    %v1327 = vsel %vm1326, 1, 0
    %v1328 = vadd.s32 %v1324, %v1320
    %v1329 = vadd.s32 %v1325, %v1327
    %v1330 = vadd.s32 %v1329, %v1319
    %v1331 = vadd.s32 %v1330, %v1321
    %v1332 = vmul.u32 %v1287, %v1278
    %v1333 = vadd.s32 %v1309, %v1328
    %vm1334 = vc.u32 %v1309, %v1328
    %v1335 = vadd.s32 %v1331, 1
    %v1336 = vsel %vm1334, %v1335, %v1331
    %v1337 = vadd.s32 %v1332, %v1336
    %v1338 = vadd.s32 %v1337, 536870912
    %v1339 = vshrl.u32 %v1338, 30
    %v1340 = vshll.u32 %v1339, 30
    %v1341 = vsub.s32 %v1337, %v1340
    %vm1342 = vcmp.lt.s32.totalorder %v1341, 0
    %v1343 = vsub.s32 0, %v1341
    %v1344 = vsel %vm1342, %v1343, %v1341
    %v1345 = vclz %v1344
    %v1346 = vsub.s32 %v1345, 2
    %vm1347 = vcmp.gt.s32.totalorder 0, %v1346
    %v1348 = vsel %vm1347, 0, %v1346
    %v1349 = vsub.s32 32, %v1348
    %v1350 = vshll.u32 %v1341, %v1348
    %v1351 = vshrl.u32 %v1333, %v1349
    %v1352 = vor.u32 %v1350, %v1351
    %v1353 = vsub.s32 4294967266, %v1348
    %v1354 = vadd.s32 %v1353, 127
    %v1355 = vshll.u32 %v1354, 23
    %v1356 = vor.u32 4788187, %v1355
    %v1357 = vand.u32 2147483647, %v1356
    %v1359 = vcvt.s32.f32 %v1352
    %v1360 = vmul.f32 %v1359, %v1357
    %v1361 = vxor.u32 %v1360, 2147483648
    %v1362 = vsel %vm1241, %v1361, %v1360
    %v1363 = vsub.s32 4, %v1339
    %v1364 = vsel %vm1241, %v1363, %v1339
    %v1365 = vsel %vm1240, %v283, %v1362
    %v1366 = vsel %vm1240, 0, %v1364
    %v1367 = vmul.f32 %v1365, %v1365
    %v1368 = vmul.f32 %v1367, -0.001358992
    %v1369 = vadd.f32 %v1368, 0.041655596
    %v1370 = vmul.f32 %v1367, %v1369
    %v1371 = vadd.f32 %v1370, -0.4999988
    %v1372 = vmul.f32 %v1367, %v1371
    %v1373 = vadd.f32 1.0, %v1372
    %v1374 = vmul.f32 %v1365, %v1365
    %v1375 = vmul.f32 %v1374, -0.00019511016
    %v1376 = vadd.f32 %v1375, 0.008332121
    %v1377 = vmul.f32 %v1374, %v1376
    %v1378 = vadd.f32 %v1377, -0.16666654
    %v1379 = vmul.f32 %v1374, %v1378
    %v1380 = vadd.f32 %v1379, 1.0
    %v1381 = vmul.f32 %v1380, %v1365
    %vm1382 = vweird.f32 %v283
    %v1383 = vadd.s32 %v1366, 3
    %v1384 = vand.u32 %v1383, 3
    %vm1385 = vcmp.lt.s32.totalorder %v1384, 2
    %vm1386 = vcmp.eq.s32.totalorder %v1384, 0
    %v1387 = vxor.u32 %v1381, 2147483648
    %v1388 = vsel %vm1386, %v1373, %v1387
    %vm1389 = vcmp.eq.s32.totalorder %v1384, 2
    %v1390 = vxor.u32 %v1373, 2147483648
    %v1391 = vsel %vm1389, %v1390, %v1381
    %v1392 = vsel %vm1385, %v1388, %v1391
    %v1393 = vsel %vm1382, nan, %v1392
    %v1394 = vand.u32 2147483647, %v284
    %vm1395 = vcmp.le.f32.partialorder %v1394, 0.7853982
    %vm1396 = vcmp.lt.s32.totalorder %v284, 0
    %v1397 = vand.u32 %v284, 2139095040
    %v1398 = vshrl.u32 %v1397, 23
    %v1399 = vsub.s32 %v1398, 127
    %v1400 = vand.u32 2147483647, %v284
    %v1401 = vand.u32 %v1400, 8388607
    %v1402 = vor.u32 %v1401, 8388608
    %v1403 = vsub.s32 0, %v1402
    %v1404 = vadd.s32 %v1399, 1
    %vm1405 = vcmp.gt.s32.totalorder %v1404, 0
    %v1406 = vsel %vm1405, %v1404, 0
    %v1407 = vshrl.u32 %v1406, 5
    %v1408 = vand.u32 %v1406, 31
    %v1409 = vsub.s32 32, %v1408
    %v1410 = vshrl.u32 683565275, %v1409
    %v1411 = vshll.u32 683565275, %v1408
    %v1412 = vshrl.u32 2475754826, %v1409
    %v1413 = vor.u32 %v1411, %v1412
    %v1414 = vshll.u32 2475754826, %v1408
    %v1415 = vshrl.u32 2131351028, %v1409
    %v1416 = vor.u32 %v1414, %v1415
    %v1417 = vshll.u32 2131351028, %v1408
    %v1418 = vshrl.u32 2102212464, %v1409
    %v1419 = vor.u32 %v1417, %v1418
    %v1420 = vshll.u32 2102212464, %v1408
    %v1421 = vshrl.u32 920167782, %v1409
    %v1422 = vor.u32 %v1420, %v1421
    %v1423 = vshll.u32 920167782, %v1408
    %v1424 = vshrl.u32 1326507024, %v1409
    %v1425 = vor.u32 %v1423, %v1424
    %vm1426 = vcmp.lt.s32.totalorder %v1407, 1
    %vm1427 = vcmp.lt.s32.totalorder %v1407, 2
    %vm1428 = vcmp.lt.s32.totalorder %v1407, 3
    %vm1429 = vcmp.lt.s32.totalorder %v1407, 4
    %v1430 = vsel %vm1426, %v1410, %v1413
    %v1431 = vsel %vm1429, %v1419, 2102212464
    %v1432 = vsel %vm1428, %v1416, %v1431
    %v1433 = vsel %vm1427, %v1430, %v1432
    %v1434 = vsel %vm1426, %v1413, %v1416
    %v1435 = vsel %vm1429, %v1422, 920167782
    %v1436 = vsel %vm1428, %v1419, %v1435
    %v1437 = vsel %vm1427, %v1434, %v1436
    %v1438 = vsel %vm1426, %v1416, %v1419
    %v1439 = vsel %vm1429, %v1425, 1326507024
    %v1440 = vsel %vm1428, %v1422, %v1439
    %v1441 = vsel %vm1427, %v1438, %v1440
    %v1442 = vshll.u32 %v1402, 8
    %v1443 = vand.u32 %v1442, 65535
    %v1444 = vshrl.u32 %v1442, 16
    %v1445 = vand.u32 %v1441, 65535
    %v1446 = vshrl.u32 %v1441, 16
    %v1447 = vmul.u32 %v1443, %v1445
    %v1448 = vmul.u32 %v1443, %v1446
    %v1449 = vmul.u32 %v1444, %v1445
    %v1450 = vmul.u32 %v1444, %v1446
    %v1451 = vshll.u32 %v1448, 16
    %v1452 = vshrl.u32 %v1448, 16
    %v1453 = vshll.u32 %v1449, 16
    %v1454 = vshrl.u32 %v1449, 16
    %vm1455 = vc.u32 %v1447, %v1451
    %v1456 = vsel %vm1455, 1, 0
    %v1457 = vadd.s32 %v1447, %v1451
    %v1458 = vadd.s32 %v1450, %v1456
    %vm1459 = vc.u32 %v1457, %v1453
    %v1460 = vsel %vm1459, 1, 0
    %v1461 = vadd.s32 %v1457, %v1453
    %v1462 = vadd.s32 %v1458, %v1460
    %v1463 = vadd.s32 %v1462, %v1452
    %v1464 = vadd.s32 %v1463, %v1454
    %v1465 = vand.u32 %v1442, 65535
    %v1466 = vshrl.u32 %v1442, 16
    %v1467 = vand.u32 %v1437, 65535
    %v1468 = vshrl.u32 %v1437, 16
    %v1469 = vmul.u32 %v1465, %v1467
    %v1470 = vmul.u32 %v1465, %v1468
    %v1471 = vmul.u32 %v1466, %v1467
    %v1472 = vmul.u32 %v1466, %v1468
    %v1473 = vshll.u32 %v1470, 16
    %v1474 = vshrl.u32 %v1470, 16
    %v1475 = vshll.u32 %v1471, 16
    %v1476 = vshrl.u32 %v1471, 16
    %vm1477 = vc.u32 %v1469, %v1473
    %v1478 = vsel %vm1477, 1, 0
    %v1479 = vadd.s32 %v1469, %v1473
    %v1480 = vadd.s32 %v1472, %v1478
    %vm1481 = vc.u32 %v1479, %v1475
    %v1482 = vsel %vm1481, 1, 0
    %v1483 = vadd.s32 %v1479, %v1475
    %v1484 = vadd.s32 %v1480, %v1482
    %v1485 = vadd.s32 %v1484, %v1474
    %v1486 = vadd.s32 %v1485, %v1476
    %v1487 = vmul.u32 %v1442, %v1433
    %v1488 = vadd.s32 %v1464, %v1483
    %vm1489 = vc.u32 %v1464, %v1483
    %v1490 = vadd.s32 %v1486, 1
    %v1491 = vsel %vm1489, %v1490, %v1486
    %v1492 = vadd.s32 %v1487, %v1491
    %v1493 = vadd.s32 %v1492, 536870912
    %v1494 = vshrl.u32 %v1493, 30
    %v1495 = vshll.u32 %v1494, 30
    %v1496 = vsub.s32 %v1492, %v1495
    %vm1497 = vcmp.lt.s32.totalorder %v1496, 0
    %v1498 = vsub.s32 0, %v1496
    %v1499 = vsel %vm1497, %v1498, %v1496
    %v1500 = vclz %v1499
    %v1501 = vsub.s32 %v1500, 2
    %vm1502 = vcmp.gt.s32.totalorder 0, %v1501
    %v1503 = vsel %vm1502, 0, %v1501
    %v1504 = vsub.s32 32, %v1503
    %v1505 = vshll.u32 %v1496, %v1503
    %v1506 = vshrl.u32 %v1488, %v1504
    %v1507 = vor.u32 %v1505, %v1506
    %v1508 = vsub.s32 4294967266, %v1503
    %v1509 = vadd.s32 %v1508, 127
    %v1510 = vshll.u32 %v1509, 23
    %v1511 = vor.u32 4788187, %v1510
    %v1512 = vand.u32 2147483647, %v1511
    %v1514 = vcvt.s32.f32 %v1507
    %v1515 = vmul.f32 %v1514, %v1512
    %v1516 = vxor.u32 %v1515, 2147483648
    %v1517 = vsel %vm1396, %v1516, %v1515
    %v1518 = vsub.s32 4, %v1494
    %v1519 = vsel %vm1396, %v1518, %v1494
    %v1520 = vsel %vm1395, %v284, %v1517
    %v1521 = vsel %vm1395, 0, %v1519
    %v1522 = vmul.f32 %v1520, %v1520
    %v1523 = vmul.f32 %v1522, -0.001358992
    %v1524 = vadd.f32 %v1523, 0.041655596
    %v1525 = vmul.f32 %v1522, %v1524
    %v1526 = vadd.f32 %v1525, -0.4999988
    %v1527 = vmul.f32 %v1522, %v1526
    %v1528 = vadd.f32 1.0, %v1527
    %v1529 = vmul.f32 %v1520, %v1520
    %v1530 = vmul.f32 %v1529, -0.00019511016
    %v1531 = vadd.f32 %v1530, 0.008332121
    %v1532 = vmul.f32 %v1529, %v1531
    %v1533 = vadd.f32 %v1532, -0.16666654
    %v1534 = vmul.f32 %v1529, %v1533
    %v1535 = vadd.f32 %v1534, 1.0
    %v1536 = vmul.f32 %v1535, %v1520
    %vm1537 = vweird.f32 %v284
    %v1538 = vadd.s32 %v1521, 3
    %v1539 = vand.u32 %v1538, 3
    %vm1540 = vcmp.lt.s32.totalorder %v1539, 2
    %vm1541 = vcmp.eq.s32.totalorder %v1539, 0
    %v1542 = vxor.u32 %v1536, 2147483648
    %v1543 = vsel %vm1541, %v1528, %v1542
    %vm1544 = vcmp.eq.s32.totalorder %v1539, 2
    %v1545 = vxor.u32 %v1528, 2147483648
    %v1546 = vsel %vm1544, %v1545, %v1536
    %v1547 = vsel %vm1540, %v1543, %v1546
    %v1548 = vsel %vm1537, nan, %v1547
    %v1549 = vand.u32 2147483647, %v285
    %vm1550 = vcmp.le.f32.partialorder %v1549, 0.7853982
    %vm1551 = vcmp.lt.s32.totalorder %v285, 0
    %v1552 = vand.u32 %v285, 2139095040
    %v1553 = vshrl.u32 %v1552, 23
    %v1554 = vsub.s32 %v1553, 127
    %v1555 = vand.u32 2147483647, %v285
    %v1556 = vand.u32 %v1555, 8388607
    %v1557 = vor.u32 %v1556, 8388608
    %v1558 = vsub.s32 0, %v1557
    %v1559 = vadd.s32 %v1554, 1
    %vm1560 = vcmp.gt.s32.totalorder %v1559, 0
    %v1561 = vsel %vm1560, %v1559, 0
    %v1562 = vshrl.u32 %v1561, 5
    %v1563 = vand.u32 %v1561, 31
    %v1564 = vsub.s32 32, %v1563
    %v1565 = vshrl.u32 683565275, %v1564
    %v1566 = vshll.u32 683565275, %v1563
    %v1567 = vshrl.u32 2475754826, %v1564
    %v1568 = vor.u32 %v1566, %v1567
    %v1569 = vshll.u32 2475754826, %v1563
    %v1570 = vshrl.u32 2131351028, %v1564
    %v1571 = vor.u32 %v1569, %v1570
    %v1572 = vshll.u32 2131351028, %v1563
    %v1573 = vshrl.u32 2102212464, %v1564
    %v1574 = vor.u32 %v1572, %v1573
    %v1575 = vshll.u32 2102212464, %v1563
    %v1576 = vshrl.u32 920167782, %v1564
    %v1577 = vor.u32 %v1575, %v1576
    %v1578 = vshll.u32 920167782, %v1563
    %v1579 = vshrl.u32 1326507024, %v1564
    %v1580 = vor.u32 %v1578, %v1579
    %vm1581 = vcmp.lt.s32.totalorder %v1562, 1
    %vm1582 = vcmp.lt.s32.totalorder %v1562, 2
    %vm1583 = vcmp.lt.s32.totalorder %v1562, 3
    %vm1584 = vcmp.lt.s32.totalorder %v1562, 4
    %v1585 = vsel %vm1581, %v1565, %v1568
    %v1586 = vsel %vm1584, %v1574, 2102212464
    %v1587 = vsel %vm1583, %v1571, %v1586
    %v1588 = vsel %vm1582, %v1585, %v1587
    %v1589 = vsel %vm1581, %v1568, %v1571
    %v1590 = vsel %vm1584, %v1577, 920167782
    %v1591 = vsel %vm1583, %v1574, %v1590
    %v1592 = vsel %vm1582, %v1589, %v1591
    %v1593 = vsel %vm1581, %v1571, %v1574
    %v1594 = vsel %vm1584, %v1580, 1326507024
    %v1595 = vsel %vm1583, %v1577, %v1594
    %v1596 = vsel %vm1582, %v1593, %v1595
    %v1597 = vshll.u32 %v1557, 8
    %v1598 = vand.u32 %v1597, 65535
    %v1599 = vshrl.u32 %v1597, 16
    %v1600 = vand.u32 %v1596, 65535
    %v1601 = vshrl.u32 %v1596, 16
    %v1602 = vmul.u32 %v1598, %v1600
    %v1603 = vmul.u32 %v1598, %v1601
    %v1604 = vmul.u32 %v1599, %v1600
    %v1605 = vmul.u32 %v1599, %v1601
    %v1606 = vshll.u32 %v1603, 16
    %v1607 = vshrl.u32 %v1603, 16
    %v1608 = vshll.u32 %v1604, 16
    %v1609 = vshrl.u32 %v1604, 16
    %vm1610 = vc.u32 %v1602, %v1606
    %v1611 = vsel %vm1610, 1, 0
    %v1612 = vadd.s32 %v1602, %v1606
    %v1613 = vadd.s32 %v1605, %v1611
    %vm1614 = vc.u32 %v1612, %v1608
    %v1615 = vsel %vm1614, 1, 0
    %v1616 = vadd.s32 %v1612, %v1608
    %v1617 = vadd.s32 %v1613, %v1615
    %v1618 = vadd.s32 %v1617, %v1607
    %v1619 = vadd.s32 %v1618, %v1609
    %v1620 = vand.u32 %v1597, 65535
    %v1621 = vshrl.u32 %v1597, 16
    %v1622 = vand.u32 %v1592, 65535
    %v1623 = vshrl.u32 %v1592, 16
    %v1624 = vmul.u32 %v1620, %v1622
    %v1625 = vmul.u32 %v1620, %v1623
    %v1626 = vmul.u32 %v1621, %v1622
    %v1627 = vmul.u32 %v1621, %v1623
    %v1628 = vshll.u32 %v1625, 16
    %v1629 = vshrl.u32 %v1625, 16
    %v1630 = vshll.u32 %v1626, 16
    %v1631 = vshrl.u32 %v1626, 16
    %vm1632 = vc.u32 %v1624, %v1628
    %v1633 = vsel %vm1632, 1, 0
    %v1634 = vadd.s32 %v1624, %v1628
    %v1635 = vadd.s32 %v1627, %v1633
    %vm1636 = vc.u32 %v1634, %v1630
    %v1637 = vsel %vm1636, 1, 0
    %v1638 = vadd.s32 %v1634, %v1630
    %v1639 = vadd.s32 %v1635, %v1637
    %v1640 = vadd.s32 %v1639, %v1629
    %v1641 = vadd.s32 %v1640, %v1631
    %v1642 = vmul.u32 %v1597, %v1588
    %v1643 = vadd.s32 %v1619, %v1638
    %vm1644 = vc.u32 %v1619, %v1638
    %v1645 = vadd.s32 %v1641, 1
    %v1646 = vsel %vm1644, %v1645, %v1641
    %v1647 = vadd.s32 %v1642, %v1646
    %v1648 = vadd.s32 %v1647, 536870912
    %v1649 = vshrl.u32 %v1648, 30
    %v1650 = vshll.u32 %v1649, 30
    %v1651 = vsub.s32 %v1647, %v1650
    %vm1652 = vcmp.lt.s32.totalorder %v1651, 0
    %v1653 = vsub.s32 0, %v1651
    %v1654 = vsel %vm1652, %v1653, %v1651
    %v1655 = vclz %v1654
    %v1656 = vsub.s32 %v1655, 2
    %vm1657 = vcmp.gt.s32.totalorder 0, %v1656
    %v1658 = vsel %vm1657, 0, %v1656
    %v1659 = vsub.s32 32, %v1658
    %v1660 = vshll.u32 %v1651, %v1658
    %v1661 = vshrl.u32 %v1643, %v1659
    %v1662 = vor.u32 %v1660, %v1661
    %v1663 = vsub.s32 4294967266, %v1658
    %v1664 = vadd.s32 %v1663, 127
    %v1665 = vshll.u32 %v1664, 23
    %v1666 = vor.u32 4788187, %v1665
    %v1667 = vand.u32 2147483647, %v1666
    %v1669 = vcvt.s32.f32 %v1662
    %v1670 = vmul.f32 %v1669, %v1667
    %v1671 = vxor.u32 %v1670, 2147483648
    %v1672 = vsel %vm1551, %v1671, %v1670
    %v1673 = vsub.s32 4, %v1649
    %v1674 = vsel %vm1551, %v1673, %v1649
    %v1675 = vsel %vm1550, %v285, %v1672
    %v1676 = vsel %vm1550, 0, %v1674
    %v1677 = vmul.f32 %v1675, %v1675
    %v1678 = vmul.f32 %v1677, -0.001358992
    %v1679 = vadd.f32 %v1678, 0.041655596
    %v1680 = vmul.f32 %v1677, %v1679
    %v1681 = vadd.f32 %v1680, -0.4999988
    %v1682 = vmul.f32 %v1677, %v1681
    %v1683 = vadd.f32 1.0, %v1682
    %v1684 = vmul.f32 %v1675, %v1675
    %v1685 = vmul.f32 %v1684, -0.00019511016
    %v1686 = vadd.f32 %v1685, 0.008332121
    %v1687 = vmul.f32 %v1684, %v1686
    %v1688 = vadd.f32 %v1687, -0.16666654
    %v1689 = vmul.f32 %v1684, %v1688
    %v1690 = vadd.f32 %v1689, 1.0
    %v1691 = vmul.f32 %v1690, %v1675
    %vm1692 = vweird.f32 %v285
    %v1693 = vadd.s32 %v1676, 3
    %v1694 = vand.u32 %v1693, 3
    %vm1695 = vcmp.lt.s32.totalorder %v1694, 2
    %vm1696 = vcmp.eq.s32.totalorder %v1694, 0
    %v1697 = vxor.u32 %v1691, 2147483648
    %v1698 = vsel %vm1696, %v1683, %v1697
    %vm1699 = vcmp.eq.s32.totalorder %v1694, 2
    %v1700 = vxor.u32 %v1683, 2147483648
    %v1701 = vsel %vm1699, %v1700, %v1691
    %v1702 = vsel %vm1695, %v1698, %v1701
    %v1703 = vsel %vm1692, nan, %v1702
    %v1704 = vand.u32 2147483647, %v286
    %vm1705 = vcmp.le.f32.partialorder %v1704, 0.7853982
    %vm1706 = vcmp.lt.s32.totalorder %v286, 0
    %v1707 = vand.u32 %v286, 2139095040
    %v1708 = vshrl.u32 %v1707, 23
    %v1709 = vsub.s32 %v1708, 127
    %v1710 = vand.u32 2147483647, %v286
    %v1711 = vand.u32 %v1710, 8388607
    %v1712 = vor.u32 %v1711, 8388608
    %v1713 = vsub.s32 0, %v1712
    %v1714 = vadd.s32 %v1709, 1
    %vm1715 = vcmp.gt.s32.totalorder %v1714, 0
    %v1716 = vsel %vm1715, %v1714, 0
    %v1717 = vshrl.u32 %v1716, 5
    %v1718 = vand.u32 %v1716, 31
    %v1719 = vsub.s32 32, %v1718
    %v1720 = vshrl.u32 683565275, %v1719
    %v1721 = vshll.u32 683565275, %v1718
    %v1722 = vshrl.u32 2475754826, %v1719
    %v1723 = vor.u32 %v1721, %v1722
    %v1724 = vshll.u32 2475754826, %v1718
    %v1725 = vshrl.u32 2131351028, %v1719
    %v1726 = vor.u32 %v1724, %v1725
    %v1727 = vshll.u32 2131351028, %v1718
    %v1728 = vshrl.u32 2102212464, %v1719
    %v1729 = vor.u32 %v1727, %v1728
    %v1730 = vshll.u32 2102212464, %v1718
    %v1731 = vshrl.u32 920167782, %v1719
    %v1732 = vor.u32 %v1730, %v1731
    %v1733 = vshll.u32 920167782, %v1718
    %v1734 = vshrl.u32 1326507024, %v1719
    %v1735 = vor.u32 %v1733, %v1734
    %vm1736 = vcmp.lt.s32.totalorder %v1717, 1
    %vm1737 = vcmp.lt.s32.totalorder %v1717, 2
    %vm1738 = vcmp.lt.s32.totalorder %v1717, 3
    %vm1739 = vcmp.lt.s32.totalorder %v1717, 4
    %v1740 = vsel %vm1736, %v1720, %v1723
    %v1741 = vsel %vm1739, %v1729, 2102212464
    %v1742 = vsel %vm1738, %v1726, %v1741
    %v1743 = vsel %vm1737, %v1740, %v1742
    %v1744 = vsel %vm1736, %v1723, %v1726
    %v1745 = vsel %vm1739, %v1732, 920167782
    %v1746 = vsel %vm1738, %v1729, %v1745
    %v1747 = vsel %vm1737, %v1744, %v1746
    %v1748 = vsel %vm1736, %v1726, %v1729
    %v1749 = vsel %vm1739, %v1735, 1326507024
    %v1750 = vsel %vm1738, %v1732, %v1749
    %v1751 = vsel %vm1737, %v1748, %v1750
    %v1752 = vshll.u32 %v1712, 8
    %v1753 = vand.u32 %v1752, 65535
    %v1754 = vshrl.u32 %v1752, 16
    %v1755 = vand.u32 %v1751, 65535
    %v1756 = vshrl.u32 %v1751, 16
    %v1757 = vmul.u32 %v1753, %v1755
    %v1758 = vmul.u32 %v1753, %v1756
    %v1759 = vmul.u32 %v1754, %v1755
    %v1760 = vmul.u32 %v1754, %v1756
    %v1761 = vshll.u32 %v1758, 16
    %v1762 = vshrl.u32 %v1758, 16
    %v1763 = vshll.u32 %v1759, 16
    %v1764 = vshrl.u32 %v1759, 16
    %vm1765 = vc.u32 %v1757, %v1761
    %v1766 = vsel %vm1765, 1, 0
    %v1767 = vadd.s32 %v1757, %v1761
    %v1768 = vadd.s32 %v1760, %v1766
    %vm1769 = vc.u32 %v1767, %v1763
    %v1770 = vsel %vm1769, 1, 0
    %v1771 = vadd.s32 %v1767, %v1763
    %v1772 = vadd.s32 %v1768, %v1770
    %v1773 = vadd.s32 %v1772, %v1762
    %v1774 = vadd.s32 %v1773, %v1764
    %v1775 = vand.u32 %v1752, 65535
    %v1776 = vshrl.u32 %v1752, 16
    %v1777 = vand.u32 %v1747, 65535
    %v1778 = vshrl.u32 %v1747, 16
    %v1779 = vmul.u32 %v1775, %v1777
    %v1780 = vmul.u32 %v1775, %v1778
    %v1781 = vmul.u32 %v1776, %v1777
    %v1782 = vmul.u32 %v1776, %v1778
    %v1783 = vshll.u32 %v1780, 16
    %v1784 = vshrl.u32 %v1780, 16
    %v1785 = vshll.u32 %v1781, 16
    %v1786 = vshrl.u32 %v1781, 16
    %vm1787 = vc.u32 %v1779, %v1783
    %v1788 = vsel %vm1787, 1, 0
    %v1789 = vadd.s32 %v1779, %v1783
    %v1790 = vadd.s32 %v1782, %v1788
    %vm1791 = vc.u32 %v1789, %v1785
    %v1792 = vsel %vm1791, 1, 0
    %v1793 = vadd.s32 %v1789, %v1785
    %v1794 = vadd.s32 %v1790, %v1792
    %v1795 = vadd.s32 %v1794, %v1784
    %v1796 = vadd.s32 %v1795, %v1786
    %v1797 = vmul.u32 %v1752, %v1743
    %v1798 = vadd.s32 %v1774, %v1793
    %vm1799 = vc.u32 %v1774, %v1793
    %v1800 = vadd.s32 %v1796, 1
    %v1801 = vsel %vm1799, %v1800, %v1796
    %v1802 = vadd.s32 %v1797, %v1801
    %v1803 = vadd.s32 %v1802, 536870912
    %v1804 = vshrl.u32 %v1803, 30
    %v1805 = vshll.u32 %v1804, 30
    %v1806 = vsub.s32 %v1802, %v1805
    %vm1807 = vcmp.lt.s32.totalorder %v1806, 0
    %v1808 = vsub.s32 0, %v1806
    %v1809 = vsel %vm1807, %v1808, %v1806
    %v1810 = vclz %v1809
    %v1811 = vsub.s32 %v1810, 2
    %vm1812 = vcmp.gt.s32.totalorder 0, %v1811
    %v1813 = vsel %vm1812, 0, %v1811
    %v1814 = vsub.s32 32, %v1813
    %v1815 = vshll.u32 %v1806, %v1813
    %v1816 = vshrl.u32 %v1798, %v1814
    %v1817 = vor.u32 %v1815, %v1816
    %v1818 = vsub.s32 4294967266, %v1813
    %v1819 = vadd.s32 %v1818, 127
    %v1820 = vshll.u32 %v1819, 23
    %v1821 = vor.u32 4788187, %v1820
    %v1822 = vand.u32 2147483647, %v1821
    %v1824 = vcvt.s32.f32 %v1817
    %v1825 = vmul.f32 %v1824, %v1822
    %v1826 = vxor.u32 %v1825, 2147483648
    %v1827 = vsel %vm1706, %v1826, %v1825
    %v1828 = vsub.s32 4, %v1804
    %v1829 = vsel %vm1706, %v1828, %v1804
    %v1830 = vsel %vm1705, %v286, %v1827
    %v1831 = vsel %vm1705, 0, %v1829
    %v1832 = vmul.f32 %v1830, %v1830
    %v1833 = vmul.f32 %v1832, -0.001358992
    %v1834 = vadd.f32 %v1833, 0.041655596
    %v1835 = vmul.f32 %v1832, %v1834
    %v1836 = vadd.f32 %v1835, -0.4999988
    %v1837 = vmul.f32 %v1832, %v1836
    %v1838 = vadd.f32 1.0, %v1837
    %v1839 = vmul.f32 %v1830, %v1830
    %v1840 = vmul.f32 %v1839, -0.00019511016
    %v1841 = vadd.f32 %v1840, 0.008332121
    %v1842 = vmul.f32 %v1839, %v1841
    %v1843 = vadd.f32 %v1842, -0.16666654
    %v1844 = vmul.f32 %v1839, %v1843
    %v1845 = vadd.f32 %v1844, 1.0
    %v1846 = vmul.f32 %v1845, %v1830
    %vm1847 = vweird.f32 %v286
    %v1848 = vadd.s32 %v1831, 3
    %v1849 = vand.u32 %v1848, 3
    %vm1850 = vcmp.lt.s32.totalorder %v1849, 2
    %vm1851 = vcmp.eq.s32.totalorder %v1849, 0
    %v1852 = vxor.u32 %v1846, 2147483648
    %v1853 = vsel %vm1851, %v1838, %v1852
    %vm1854 = vcmp.eq.s32.totalorder %v1849, 2
    %v1855 = vxor.u32 %v1838, 2147483648
    %v1856 = vsel %vm1854, %v1855, %v1846
    %v1857 = vsel %vm1850, %v1853, %v1856
    %v1858 = vsel %vm1847, nan, %v1857
    %v1859 = vand.u32 2147483647, %v287
    %vm1860 = vcmp.le.f32.partialorder %v1859, 0.7853982
    %vm1861 = vcmp.lt.s32.totalorder %v287, 0
    %v1862 = vand.u32 %v287, 2139095040
    %v1863 = vshrl.u32 %v1862, 23
    %v1864 = vsub.s32 %v1863, 127
    %v1865 = vand.u32 2147483647, %v287
    %v1866 = vand.u32 %v1865, 8388607
    %v1867 = vor.u32 %v1866, 8388608
    %v1868 = vsub.s32 0, %v1867
    %v1869 = vadd.s32 %v1864, 1
    %vm1870 = vcmp.gt.s32.totalorder %v1869, 0
    %v1871 = vsel %vm1870, %v1869, 0
    %v1872 = vshrl.u32 %v1871, 5
    %v1873 = vand.u32 %v1871, 31
    %v1874 = vsub.s32 32, %v1873
    %v1875 = vshrl.u32 683565275, %v1874
    %v1876 = vshll.u32 683565275, %v1873
    %v1877 = vshrl.u32 2475754826, %v1874
    %v1878 = vor.u32 %v1876, %v1877
    %v1879 = vshll.u32 2475754826, %v1873
    %v1880 = vshrl.u32 2131351028, %v1874
    %v1881 = vor.u32 %v1879, %v1880
    %v1882 = vshll.u32 2131351028, %v1873
    %v1883 = vshrl.u32 2102212464, %v1874
    %v1884 = vor.u32 %v1882, %v1883
    %v1885 = vshll.u32 2102212464, %v1873
    %v1886 = vshrl.u32 920167782, %v1874
    %v1887 = vor.u32 %v1885, %v1886
    %v1888 = vshll.u32 920167782, %v1873
    %v1889 = vshrl.u32 1326507024, %v1874
    %v1890 = vor.u32 %v1888, %v1889
    %vm1891 = vcmp.lt.s32.totalorder %v1872, 1
    %vm1892 = vcmp.lt.s32.totalorder %v1872, 2
    %vm1893 = vcmp.lt.s32.totalorder %v1872, 3
    %vm1894 = vcmp.lt.s32.totalorder %v1872, 4
    %v1895 = vsel %vm1891, %v1875, %v1878
    %v1896 = vsel %vm1894, %v1884, 2102212464
    %v1897 = vsel %vm1893, %v1881, %v1896
    %v1898 = vsel %vm1892, %v1895, %v1897
    %v1899 = vsel %vm1891, %v1878, %v1881
    %v1900 = vsel %vm1894, %v1887, 920167782
    %v1901 = vsel %vm1893, %v1884, %v1900
    %v1902 = vsel %vm1892, %v1899, %v1901
    %v1903 = vsel %vm1891, %v1881, %v1884
    %v1904 = vsel %vm1894, %v1890, 1326507024
    %v1905 = vsel %vm1893, %v1887, %v1904
    %v1906 = vsel %vm1892, %v1903, %v1905
    %v1907 = vshll.u32 %v1867, 8
    %v1908 = vand.u32 %v1907, 65535
    %v1909 = vshrl.u32 %v1907, 16
    %v1910 = vand.u32 %v1906, 65535
    %v1911 = vshrl.u32 %v1906, 16
    %v1912 = vmul.u32 %v1908, %v1910
    %v1913 = vmul.u32 %v1908, %v1911
    %v1914 = vmul.u32 %v1909, %v1910
    %v1915 = vmul.u32 %v1909, %v1911
    %v1916 = vshll.u32 %v1913, 16
    %v1917 = vshrl.u32 %v1913, 16
    %v1918 = vshll.u32 %v1914, 16
    %v1919 = vshrl.u32 %v1914, 16
    %vm1920 = vc.u32 %v1912, %v1916
    %v1921 = vsel %vm1920, 1, 0
    %v1922 = vadd.s32 %v1912, %v1916
    %v1923 = vadd.s32 %v1915, %v1921
    %vm1924 = vc.u32 %v1922, %v1918
    %v1925 = vsel %vm1924, 1, 0
    %v1926 = vadd.s32 %v1922, %v1918
    %v1927 = vadd.s32 %v1923, %v1925
    %v1928 = vadd.s32 %v1927, %v1917
    %v1929 = vadd.s32 %v1928, %v1919
    %v1930 = vand.u32 %v1907, 65535
    %v1931 = vshrl.u32 %v1907, 16
    %v1932 = vand.u32 %v1902, 65535
    %v1933 = vshrl.u32 %v1902, 16
    %v1934 = vmul.u32 %v1930, %v1932
    %v1935 = vmul.u32 %v1930, %v1933
    %v1936 = vmul.u32 %v1931, %v1932
    %v1937 = vmul.u32 %v1931, %v1933
    %v1938 = vshll.u32 %v1935, 16
    %v1939 = vshrl.u32 %v1935, 16
    %v1940 = vshll.u32 %v1936, 16
    %v1941 = vshrl.u32 %v1936, 16
    %vm1942 = vc.u32 %v1934, %v1938
    %v1943 = vsel %vm1942, 1, 0
    %v1944 = vadd.s32 %v1934, %v1938
    %v1945 = vadd.s32 %v1937, %v1943
    %vm1946 = vc.u32 %v1944, %v1940
    %v1947 = vsel %vm1946, 1, 0
    %v1948 = vadd.s32 %v1944, %v1940
    %v1949 = vadd.s32 %v1945, %v1947
    %v1950 = vadd.s32 %v1949, %v1939
    %v1951 = vadd.s32 %v1950, %v1941
    %v1952 = vmul.u32 %v1907, %v1898
    %v1953 = vadd.s32 %v1929, %v1948
    %vm1954 = vc.u32 %v1929, %v1948
    %v1955 = vadd.s32 %v1951, 1
    %v1956 = vsel %vm1954, %v1955, %v1951
    %v1957 = vadd.s32 %v1952, %v1956
    %v1958 = vadd.s32 %v1957, 536870912
    %v1959 = vshrl.u32 %v1958, 30
    %v1960 = vshll.u32 %v1959, 30
    %v1961 = vsub.s32 %v1957, %v1960
    %vm1962 = vcmp.lt.s32.totalorder %v1961, 0
    %v1963 = vsub.s32 0, %v1961
    %v1964 = vsel %vm1962, %v1963, %v1961
    %v1965 = vclz %v1964
    %v1966 = vsub.s32 %v1965, 2
    %vm1967 = vcmp.gt.s32.totalorder 0, %v1966
    %v1968 = vsel %vm1967, 0, %v1966
    %v1969 = vsub.s32 32, %v1968
    %v1970 = vshll.u32 %v1961, %v1968
    %v1971 = vshrl.u32 %v1953, %v1969
    %v1972 = vor.u32 %v1970, %v1971
    %v1973 = vsub.s32 4294967266, %v1968
    %v1974 = vadd.s32 %v1973, 127
    %v1975 = vshll.u32 %v1974, 23
    %v1976 = vor.u32 4788187, %v1975
    %v1977 = vand.u32 2147483647, %v1976
    %v1979 = vcvt.s32.f32 %v1972
    %v1980 = vmul.f32 %v1979, %v1977
    %v1981 = vxor.u32 %v1980, 2147483648
    %v1982 = vsel %vm1861, %v1981, %v1980
    %v1983 = vsub.s32 4, %v1959
    %v1984 = vsel %vm1861, %v1983, %v1959
    %v1985 = vsel %vm1860, %v287, %v1982
    %v1986 = vsel %vm1860, 0, %v1984
    %v1987 = vmul.f32 %v1985, %v1985
    %v1988 = vmul.f32 %v1987, -0.001358992
    %v1989 = vadd.f32 %v1988, 0.041655596
    %v1990 = vmul.f32 %v1987, %v1989
    %v1991 = vadd.f32 %v1990, -0.4999988
    %v1992 = vmul.f32 %v1987, %v1991
    %v1993 = vadd.f32 1.0, %v1992
    %v1994 = vmul.f32 %v1985, %v1985
    %v1995 = vmul.f32 %v1994, -0.00019511016
    %v1996 = vadd.f32 %v1995, 0.008332121
    %v1997 = vmul.f32 %v1994, %v1996
    %v1998 = vadd.f32 %v1997, -0.16666654
    %v1999 = vmul.f32 %v1994, %v1998
    %v2000 = vadd.f32 %v1999, 1.0
    %v2001 = vmul.f32 %v2000, %v1985
    %vm2002 = vweird.f32 %v287
    %v2003 = vadd.s32 %v1986, 3
    %v2004 = vand.u32 %v2003, 3
    %vm2005 = vcmp.lt.s32.totalorder %v2004, 2
    %vm2006 = vcmp.eq.s32.totalorder %v2004, 0
    %v2007 = vxor.u32 %v2001, 2147483648
    %v2008 = vsel %vm2006, %v1993, %v2007
    %vm2009 = vcmp.eq.s32.totalorder %v2004, 2
    %v2010 = vxor.u32 %v1993, 2147483648
    %v2011 = vsel %vm2009, %v2010, %v2001
    %v2012 = vsel %vm2005, %v2008, %v2011
    %v2013 = vsel %vm2002, nan, %v2012
    %v2014 = vand.u32 2147483647, %v288
    %vm2015 = vcmp.le.f32.partialorder %v2014, 0.7853982
    %vm2016 = vcmp.lt.s32.totalorder %v288, 0
    %v2017 = vand.u32 %v288, 2139095040
    %v2018 = vshrl.u32 %v2017, 23
    %v2019 = vsub.s32 %v2018, 127
    %v2020 = vand.u32 2147483647, %v288
    %v2021 = vand.u32 %v2020, 8388607
    %v2022 = vor.u32 %v2021, 8388608
    %v2023 = vsub.s32 0, %v2022
    %v2024 = vadd.s32 %v2019, 1
    %vm2025 = vcmp.gt.s32.totalorder %v2024, 0
    %v2026 = vsel %vm2025, %v2024, 0
    %v2027 = vshrl.u32 %v2026, 5
    %v2028 = vand.u32 %v2026, 31
    %v2029 = vsub.s32 32, %v2028
    %v2030 = vshrl.u32 683565275, %v2029
    %v2031 = vshll.u32 683565275, %v2028
    %v2032 = vshrl.u32 2475754826, %v2029
    %v2033 = vor.u32 %v2031, %v2032
    %v2034 = vshll.u32 2475754826, %v2028
    %v2035 = vshrl.u32 2131351028, %v2029
    %v2036 = vor.u32 %v2034, %v2035
    %v2037 = vshll.u32 2131351028, %v2028
    %v2038 = vshrl.u32 2102212464, %v2029
    %v2039 = vor.u32 %v2037, %v2038
    %v2040 = vshll.u32 2102212464, %v2028
    %v2041 = vshrl.u32 920167782, %v2029
    %v2042 = vor.u32 %v2040, %v2041
    %v2043 = vshll.u32 920167782, %v2028
    %v2044 = vshrl.u32 1326507024, %v2029
    %v2045 = vor.u32 %v2043, %v2044
    %vm2046 = vcmp.lt.s32.totalorder %v2027, 1
    %vm2047 = vcmp.lt.s32.totalorder %v2027, 2
    %vm2048 = vcmp.lt.s32.totalorder %v2027, 3
    %vm2049 = vcmp.lt.s32.totalorder %v2027, 4
    %v2050 = vsel %vm2046, %v2030, %v2033
    %v2051 = vsel %vm2049, %v2039, 2102212464
    %v2052 = vsel %vm2048, %v2036, %v2051
    %v2053 = vsel %vm2047, %v2050, %v2052
    %v2054 = vsel %vm2046, %v2033, %v2036
    %v2055 = vsel %vm2049, %v2042, 920167782
    %v2056 = vsel %vm2048, %v2039, %v2055
    %v2057 = vsel %vm2047, %v2054, %v2056
    %v2058 = vsel %vm2046, %v2036, %v2039
    %v2059 = vsel %vm2049, %v2045, 1326507024
    %v2060 = vsel %vm2048, %v2042, %v2059
    %v2061 = vsel %vm2047, %v2058, %v2060
    %v2062 = vshll.u32 %v2022, 8
    %v2063 = vand.u32 %v2062, 65535
    %v2064 = vshrl.u32 %v2062, 16
    %v2065 = vand.u32 %v2061, 65535
    %v2066 = vshrl.u32 %v2061, 16
    %v2067 = vmul.u32 %v2063, %v2065
    %v2068 = vmul.u32 %v2063, %v2066
    %v2069 = vmul.u32 %v2064, %v2065
    %v2070 = vmul.u32 %v2064, %v2066
    %v2071 = vshll.u32 %v2068, 16
    %v2072 = vshrl.u32 %v2068, 16
    %v2073 = vshll.u32 %v2069, 16
    %v2074 = vshrl.u32 %v2069, 16
    %vm2075 = vc.u32 %v2067, %v2071
    %v2076 = vsel %vm2075, 1, 0
    %v2077 = vadd.s32 %v2067, %v2071
    %v2078 = vadd.s32 %v2070, %v2076
    %vm2079 = vc.u32 %v2077, %v2073
    %v2080 = vsel %vm2079, 1, 0
    %v2081 = vadd.s32 %v2077, %v2073
    %v2082 = vadd.s32 %v2078, %v2080
    %v2083 = vadd.s32 %v2082, %v2072
    %v2084 = vadd.s32 %v2083, %v2074
    %v2085 = vand.u32 %v2062, 65535
    %v2086 = vshrl.u32 %v2062, 16
    %v2087 = vand.u32 %v2057, 65535
    %v2088 = vshrl.u32 %v2057, 16
    %v2089 = vmul.u32 %v2085, %v2087
    %v2090 = vmul.u32 %v2085, %v2088
    %v2091 = vmul.u32 %v2086, %v2087
    %v2092 = vmul.u32 %v2086, %v2088
    %v2093 = vshll.u32 %v2090, 16
    %v2094 = vshrl.u32 %v2090, 16
    %v2095 = vshll.u32 %v2091, 16
    %v2096 = vshrl.u32 %v2091, 16
    %vm2097 = vc.u32 %v2089, %v2093
    %v2098 = vsel %vm2097, 1, 0
    %v2099 = vadd.s32 %v2089, %v2093
    %v2100 = vadd.s32 %v2092, %v2098
    %vm2101 = vc.u32 %v2099, %v2095
    %v2102 = vsel %vm2101, 1, 0
    %v2103 = vadd.s32 %v2099, %v2095
    %v2104 = vadd.s32 %v2100, %v2102
    %v2105 = vadd.s32 %v2104, %v2094
    %v2106 = vadd.s32 %v2105, %v2096
    %v2107 = vmul.u32 %v2062, %v2053
    %v2108 = vadd.s32 %v2084, %v2103
    %vm2109 = vc.u32 %v2084, %v2103
    %v2110 = vadd.s32 %v2106, 1
    %v2111 = vsel %vm2109, %v2110, %v2106
    %v2112 = vadd.s32 %v2107, %v2111
    %v2113 = vadd.s32 %v2112, 536870912
    %v2114 = vshrl.u32 %v2113, 30
    %v2115 = vshll.u32 %v2114, 30
    %v2116 = vsub.s32 %v2112, %v2115
    %vm2117 = vcmp.lt.s32.totalorder %v2116, 0
    %v2118 = vsub.s32 0, %v2116
    %v2119 = vsel %vm2117, %v2118, %v2116
    %v2120 = vclz %v2119
    %v2121 = vsub.s32 %v2120, 2
    %vm2122 = vcmp.gt.s32.totalorder 0, %v2121
    %v2123 = vsel %vm2122, 0, %v2121
    %v2124 = vsub.s32 32, %v2123
    %v2125 = vshll.u32 %v2116, %v2123
    %v2126 = vshrl.u32 %v2108, %v2124
    %v2127 = vor.u32 %v2125, %v2126
    %v2128 = vsub.s32 4294967266, %v2123
    %v2129 = vadd.s32 %v2128, 127
    %v2130 = vshll.u32 %v2129, 23
    %v2131 = vor.u32 4788187, %v2130
    %v2132 = vand.u32 2147483647, %v2131
    %v2134 = vcvt.s32.f32 %v2127
    %v2135 = vmul.f32 %v2134, %v2132
    %v2136 = vxor.u32 %v2135, 2147483648
    %v2137 = vsel %vm2016, %v2136, %v2135
    %v2138 = vsub.s32 4, %v2114
    %v2139 = vsel %vm2016, %v2138, %v2114
    %v2140 = vsel %vm2015, %v288, %v2137
    %v2141 = vsel %vm2015, 0, %v2139
    %v2142 = vmul.f32 %v2140, %v2140
    %v2143 = vmul.f32 %v2142, -0.001358992
    %v2144 = vadd.f32 %v2143, 0.041655596
    %v2145 = vmul.f32 %v2142, %v2144
    %v2146 = vadd.f32 %v2145, -0.4999988
    %v2147 = vmul.f32 %v2142, %v2146
    %v2148 = vadd.f32 1.0, %v2147
    %v2149 = vmul.f32 %v2140, %v2140
    %v2150 = vmul.f32 %v2149, -0.00019511016
    %v2151 = vadd.f32 %v2150, 0.008332121
    %v2152 = vmul.f32 %v2149, %v2151
    %v2153 = vadd.f32 %v2152, -0.16666654
    %v2154 = vmul.f32 %v2149, %v2153
    %v2155 = vadd.f32 %v2154, 1.0
    %v2156 = vmul.f32 %v2155, %v2140
    %vm2157 = vweird.f32 %v288
    %v2158 = vadd.s32 %v2141, 3
    %v2159 = vand.u32 %v2158, 3
    %vm2160 = vcmp.lt.s32.totalorder %v2159, 2
    %vm2161 = vcmp.eq.s32.totalorder %v2159, 0
    %v2162 = vxor.u32 %v2156, 2147483648
    %v2163 = vsel %vm2161, %v2148, %v2162
    %vm2164 = vcmp.eq.s32.totalorder %v2159, 2
    %v2165 = vxor.u32 %v2148, 2147483648
    %v2166 = vsel %vm2164, %v2165, %v2156
    %v2167 = vsel %vm2160, %v2163, %v2166
    %v2168 = vsel %vm2157, nan, %v2167
    %v2169 = vand.u32 2147483647, %v289
    %vm2170 = vcmp.le.f32.partialorder %v2169, 0.7853982
    %vm2171 = vcmp.lt.s32.totalorder %v289, 0
    %v2172 = vand.u32 %v289, 2139095040
    %v2173 = vshrl.u32 %v2172, 23
    %v2174 = vsub.s32 %v2173, 127
    %v2175 = vand.u32 2147483647, %v289
    %v2176 = vand.u32 %v2175, 8388607
    %v2177 = vor.u32 %v2176, 8388608
    %v2178 = vsub.s32 0, %v2177
    %v2179 = vadd.s32 %v2174, 1
    %vm2180 = vcmp.gt.s32.totalorder %v2179, 0
    %v2181 = vsel %vm2180, %v2179, 0
    %v2182 = vshrl.u32 %v2181, 5
    %v2183 = vand.u32 %v2181, 31
    %v2184 = vsub.s32 32, %v2183
    %v2185 = vshrl.u32 683565275, %v2184
    %v2186 = vshll.u32 683565275, %v2183
    %v2187 = vshrl.u32 2475754826, %v2184
    %v2188 = vor.u32 %v2186, %v2187
    %v2189 = vshll.u32 2475754826, %v2183
    %v2190 = vshrl.u32 2131351028, %v2184
    %v2191 = vor.u32 %v2189, %v2190
    %v2192 = vshll.u32 2131351028, %v2183
    %v2193 = vshrl.u32 2102212464, %v2184
    %v2194 = vor.u32 %v2192, %v2193
    %v2195 = vshll.u32 2102212464, %v2183
    %v2196 = vshrl.u32 920167782, %v2184
    %v2197 = vor.u32 %v2195, %v2196
    %v2198 = vshll.u32 920167782, %v2183
    %v2199 = vshrl.u32 1326507024, %v2184
    %v2200 = vor.u32 %v2198, %v2199
    %vm2201 = vcmp.lt.s32.totalorder %v2182, 1
    %vm2202 = vcmp.lt.s32.totalorder %v2182, 2
    %vm2203 = vcmp.lt.s32.totalorder %v2182, 3
    %vm2204 = vcmp.lt.s32.totalorder %v2182, 4
    %v2205 = vsel %vm2201, %v2185, %v2188
    %v2206 = vsel %vm2204, %v2194, 2102212464
    %v2207 = vsel %vm2203, %v2191, %v2206
    %v2208 = vsel %vm2202, %v2205, %v2207
    %v2209 = vsel %vm2201, %v2188, %v2191
    %v2210 = vsel %vm2204, %v2197, 920167782
    %v2211 = vsel %vm2203, %v2194, %v2210
    %v2212 = vsel %vm2202, %v2209, %v2211
    %v2213 = vsel %vm2201, %v2191, %v2194
    %v2214 = vsel %vm2204, %v2200, 1326507024
    %v2215 = vsel %vm2203, %v2197, %v2214
    %v2216 = vsel %vm2202, %v2213, %v2215
    %v2217 = vshll.u32 %v2177, 8
    %v2218 = vand.u32 %v2217, 65535
    %v2219 = vshrl.u32 %v2217, 16
    %v2220 = vand.u32 %v2216, 65535
    %v2221 = vshrl.u32 %v2216, 16
    %v2222 = vmul.u32 %v2218, %v2220
    %v2223 = vmul.u32 %v2218, %v2221
    %v2224 = vmul.u32 %v2219, %v2220
    %v2225 = vmul.u32 %v2219, %v2221
    %v2226 = vshll.u32 %v2223, 16
    %v2227 = vshrl.u32 %v2223, 16
    %v2228 = vshll.u32 %v2224, 16
    %v2229 = vshrl.u32 %v2224, 16
    %vm2230 = vc.u32 %v2222, %v2226
    %v2231 = vsel %vm2230, 1, 0
    %v2232 = vadd.s32 %v2222, %v2226
    %v2233 = vadd.s32 %v2225, %v2231
    %vm2234 = vc.u32 %v2232, %v2228
    %v2235 = vsel %vm2234, 1, 0
    %v2236 = vadd.s32 %v2232, %v2228
    %v2237 = vadd.s32 %v2233, %v2235
    %v2238 = vadd.s32 %v2237, %v2227
    %v2239 = vadd.s32 %v2238, %v2229
    %v2240 = vand.u32 %v2217, 65535
    %v2241 = vshrl.u32 %v2217, 16
    %v2242 = vand.u32 %v2212, 65535
    %v2243 = vshrl.u32 %v2212, 16
    %v2244 = vmul.u32 %v2240, %v2242
    %v2245 = vmul.u32 %v2240, %v2243
    %v2246 = vmul.u32 %v2241, %v2242
    %v2247 = vmul.u32 %v2241, %v2243
    %v2248 = vshll.u32 %v2245, 16
    %v2249 = vshrl.u32 %v2245, 16
    %v2250 = vshll.u32 %v2246, 16
    %v2251 = vshrl.u32 %v2246, 16
    %vm2252 = vc.u32 %v2244, %v2248
    %v2253 = vsel %vm2252, 1, 0
    %v2254 = vadd.s32 %v2244, %v2248
    %v2255 = vadd.s32 %v2247, %v2253
    %vm2256 = vc.u32 %v2254, %v2250
    %v2257 = vsel %vm2256, 1, 0
    %v2258 = vadd.s32 %v2254, %v2250
    %v2259 = vadd.s32 %v2255, %v2257
    %v2260 = vadd.s32 %v2259, %v2249
    %v2261 = vadd.s32 %v2260, %v2251
    %v2262 = vmul.u32 %v2217, %v2208
    %v2263 = vadd.s32 %v2239, %v2258
    %vm2264 = vc.u32 %v2239, %v2258
    %v2265 = vadd.s32 %v2261, 1
    %v2266 = vsel %vm2264, %v2265, %v2261
    %v2267 = vadd.s32 %v2262, %v2266
    %v2268 = vadd.s32 %v2267, 536870912
    %v2269 = vshrl.u32 %v2268, 30
    %v2270 = vshll.u32 %v2269, 30
    %v2271 = vsub.s32 %v2267, %v2270
    %vm2272 = vcmp.lt.s32.totalorder %v2271, 0
    %v2273 = vsub.s32 0, %v2271
    %v2274 = vsel %vm2272, %v2273, %v2271
    %v2275 = vclz %v2274
    %v2276 = vsub.s32 %v2275, 2
    %vm2277 = vcmp.gt.s32.totalorder 0, %v2276
    %v2278 = vsel %vm2277, 0, %v2276
    %v2279 = vsub.s32 32, %v2278
    %v2280 = vshll.u32 %v2271, %v2278
    %v2281 = vshrl.u32 %v2263, %v2279
    %v2282 = vor.u32 %v2280, %v2281
    %v2283 = vsub.s32 4294967266, %v2278
    %v2284 = vadd.s32 %v2283, 127
    %v2285 = vshll.u32 %v2284, 23
    %v2286 = vor.u32 4788187, %v2285
    %v2287 = vand.u32 2147483647, %v2286
    %v2289 = vcvt.s32.f32 %v2282
    %v2290 = vmul.f32 %v2289, %v2287
    %v2291 = vxor.u32 %v2290, 2147483648
    %v2292 = vsel %vm2171, %v2291, %v2290
    %v2293 = vsub.s32 4, %v2269
    %v2294 = vsel %vm2171, %v2293, %v2269
    %v2295 = vsel %vm2170, %v289, %v2292
    %v2296 = vsel %vm2170, 0, %v2294
    %v2297 = vmul.f32 %v2295, %v2295
    %v2298 = vmul.f32 %v2297, -0.001358992
    %v2299 = vadd.f32 %v2298, 0.041655596
    %v2300 = vmul.f32 %v2297, %v2299
    %v2301 = vadd.f32 %v2300, -0.4999988
    %v2302 = vmul.f32 %v2297, %v2301
    %v2303 = vadd.f32 1.0, %v2302
    %v2304 = vmul.f32 %v2295, %v2295
    %v2305 = vmul.f32 %v2304, -0.00019511016
    %v2306 = vadd.f32 %v2305, 0.008332121
    %v2307 = vmul.f32 %v2304, %v2306
    %v2308 = vadd.f32 %v2307, -0.16666654
    %v2309 = vmul.f32 %v2304, %v2308
    %v2310 = vadd.f32 %v2309, 1.0
    %v2311 = vmul.f32 %v2310, %v2295
    %vm2312 = vweird.f32 %v289
    %v2313 = vadd.s32 %v2296, 3
    %v2314 = vand.u32 %v2313, 3
    %vm2315 = vcmp.lt.s32.totalorder %v2314, 2
    %vm2316 = vcmp.eq.s32.totalorder %v2314, 0
    %v2317 = vxor.u32 %v2311, 2147483648
    %v2318 = vsel %vm2316, %v2303, %v2317
    %vm2319 = vcmp.eq.s32.totalorder %v2314, 2
    %v2320 = vxor.u32 %v2303, 2147483648
    %v2321 = vsel %vm2319, %v2320, %v2311
    %v2322 = vsel %vm2315, %v2318, %v2321
    %v2323 = vsel %vm2312, nan, %v2322
    %v2324 = vand.u32 2147483647, %v290
    %vm2325 = vcmp.le.f32.partialorder %v2324, 0.7853982
    %vm2326 = vcmp.lt.s32.totalorder %v290, 0
    %v2327 = vand.u32 %v290, 2139095040
    %v2328 = vshrl.u32 %v2327, 23
    %v2329 = vsub.s32 %v2328, 127
    %v2330 = vand.u32 2147483647, %v290
    %v2331 = vand.u32 %v2330, 8388607
    %v2332 = vor.u32 %v2331, 8388608
    %v2333 = vsub.s32 0, %v2332
    %v2334 = vadd.s32 %v2329, 1
    %vm2335 = vcmp.gt.s32.totalorder %v2334, 0
    %v2336 = vsel %vm2335, %v2334, 0
    %v2337 = vshrl.u32 %v2336, 5
    %v2338 = vand.u32 %v2336, 31
    %v2339 = vsub.s32 32, %v2338
    %v2340 = vshrl.u32 683565275, %v2339
    %v2341 = vshll.u32 683565275, %v2338
    %v2342 = vshrl.u32 2475754826, %v2339
    %v2343 = vor.u32 %v2341, %v2342
    %v2344 = vshll.u32 2475754826, %v2338
    %v2345 = vshrl.u32 2131351028, %v2339
    %v2346 = vor.u32 %v2344, %v2345
    %v2347 = vshll.u32 2131351028, %v2338
    %v2348 = vshrl.u32 2102212464, %v2339
    %v2349 = vor.u32 %v2347, %v2348
    %v2350 = vshll.u32 2102212464, %v2338
    %v2351 = vshrl.u32 920167782, %v2339
    %v2352 = vor.u32 %v2350, %v2351
    %v2353 = vshll.u32 920167782, %v2338
    %v2354 = vshrl.u32 1326507024, %v2339
    %v2355 = vor.u32 %v2353, %v2354
    %vm2356 = vcmp.lt.s32.totalorder %v2337, 1
    %vm2357 = vcmp.lt.s32.totalorder %v2337, 2
    %vm2358 = vcmp.lt.s32.totalorder %v2337, 3
    %vm2359 = vcmp.lt.s32.totalorder %v2337, 4
    %v2360 = vsel %vm2356, %v2340, %v2343
    %v2361 = vsel %vm2359, %v2349, 2102212464
    %v2362 = vsel %vm2358, %v2346, %v2361
    %v2363 = vsel %vm2357, %v2360, %v2362
    %v2364 = vsel %vm2356, %v2343, %v2346
    %v2365 = vsel %vm2359, %v2352, 920167782
    %v2366 = vsel %vm2358, %v2349, %v2365
    %v2367 = vsel %vm2357, %v2364, %v2366
    %v2368 = vsel %vm2356, %v2346, %v2349
    %v2369 = vsel %vm2359, %v2355, 1326507024
    %v2370 = vsel %vm2358, %v2352, %v2369
    %v2371 = vsel %vm2357, %v2368, %v2370
    %v2372 = vshll.u32 %v2332, 8
    %v2373 = vand.u32 %v2372, 65535
    %v2374 = vshrl.u32 %v2372, 16
    %v2375 = vand.u32 %v2371, 65535
    %v2376 = vshrl.u32 %v2371, 16
    %v2377 = vmul.u32 %v2373, %v2375
    %v2378 = vmul.u32 %v2373, %v2376
    %v2379 = vmul.u32 %v2374, %v2375
    %v2380 = vmul.u32 %v2374, %v2376
    %v2381 = vshll.u32 %v2378, 16
    %v2382 = vshrl.u32 %v2378, 16
    %v2383 = vshll.u32 %v2379, 16
    %v2384 = vshrl.u32 %v2379, 16
    %vm2385 = vc.u32 %v2377, %v2381
    %v2386 = vsel %vm2385, 1, 0
    %v2387 = vadd.s32 %v2377, %v2381
    %v2388 = vadd.s32 %v2380, %v2386
    %vm2389 = vc.u32 %v2387, %v2383
    %v2390 = vsel %vm2389, 1, 0
    %v2391 = vadd.s32 %v2387, %v2383
    %v2392 = vadd.s32 %v2388, %v2390
    %v2393 = vadd.s32 %v2392, %v2382
    %v2394 = vadd.s32 %v2393, %v2384
    %v2395 = vand.u32 %v2372, 65535
    %v2396 = vshrl.u32 %v2372, 16
    %v2397 = vand.u32 %v2367, 65535
    %v2398 = vshrl.u32 %v2367, 16
    %v2399 = vmul.u32 %v2395, %v2397
    %v2400 = vmul.u32 %v2395, %v2398
    %v2401 = vmul.u32 %v2396, %v2397
    %v2402 = vmul.u32 %v2396, %v2398
    %v2403 = vshll.u32 %v2400, 16
    %v2404 = vshrl.u32 %v2400, 16
    %v2405 = vshll.u32 %v2401, 16
    %v2406 = vshrl.u32 %v2401, 16
    %vm2407 = vc.u32 %v2399, %v2403
    %v2408 = vsel %vm2407, 1, 0
    %v2409 = vadd.s32 %v2399, %v2403
    %v2410 = vadd.s32 %v2402, %v2408
    %vm2411 = vc.u32 %v2409, %v2405
    %v2412 = vsel %vm2411, 1, 0
    %v2413 = vadd.s32 %v2409, %v2405
    %v2414 = vadd.s32 %v2410, %v2412
    %v2415 = vadd.s32 %v2414, %v2404
    %v2416 = vadd.s32 %v2415, %v2406
    %v2417 = vmul.u32 %v2372, %v2363
    %v2418 = vadd.s32 %v2394, %v2413
    %vm2419 = vc.u32 %v2394, %v2413
    %v2420 = vadd.s32 %v2416, 1
    %v2421 = vsel %vm2419, %v2420, %v2416
    %v2422 = vadd.s32 %v2417, %v2421
    %v2423 = vadd.s32 %v2422, 536870912
    %v2424 = vshrl.u32 %v2423, 30
    %v2425 = vshll.u32 %v2424, 30
    %v2426 = vsub.s32 %v2422, %v2425
    %vm2427 = vcmp.lt.s32.totalorder %v2426, 0
    %v2428 = vsub.s32 0, %v2426
    %v2429 = vsel %vm2427, %v2428, %v2426
    %v2430 = vclz %v2429
    %v2431 = vsub.s32 %v2430, 2
    %vm2432 = vcmp.gt.s32.totalorder 0, %v2431
    %v2433 = vsel %vm2432, 0, %v2431
    %v2434 = vsub.s32 32, %v2433
    %v2435 = vshll.u32 %v2426, %v2433
    %v2436 = vshrl.u32 %v2418, %v2434
    %v2437 = vor.u32 %v2435, %v2436
    %v2438 = vsub.s32 4294967266, %v2433
    %v2439 = vadd.s32 %v2438, 127
    %v2440 = vshll.u32 %v2439, 23
    %v2441 = vor.u32 4788187, %v2440
    %v2442 = vand.u32 2147483647, %v2441
    %v2444 = vcvt.s32.f32 %v2437
    %v2445 = vmul.f32 %v2444, %v2442
    %v2446 = vxor.u32 %v2445, 2147483648
    %v2447 = vsel %vm2326, %v2446, %v2445
    %v2448 = vsub.s32 4, %v2424
    %v2449 = vsel %vm2326, %v2448, %v2424
    %v2450 = vsel %vm2325, %v290, %v2447
    %v2451 = vsel %vm2325, 0, %v2449
    %v2452 = vmul.f32 %v2450, %v2450
    %v2453 = vmul.f32 %v2452, -0.001358992
    %v2454 = vadd.f32 %v2453, 0.041655596
    %v2455 = vmul.f32 %v2452, %v2454
    %v2456 = vadd.f32 %v2455, -0.4999988
    %v2457 = vmul.f32 %v2452, %v2456
    %v2458 = vadd.f32 1.0, %v2457
    %v2459 = vmul.f32 %v2450, %v2450
    %v2460 = vmul.f32 %v2459, -0.00019511016
    %v2461 = vadd.f32 %v2460, 0.008332121
    %v2462 = vmul.f32 %v2459, %v2461
    %v2463 = vadd.f32 %v2462, -0.16666654
    %v2464 = vmul.f32 %v2459, %v2463
    %v2465 = vadd.f32 %v2464, 1.0
    %v2466 = vmul.f32 %v2465, %v2450
    %vm2467 = vweird.f32 %v290
    %v2468 = vadd.s32 %v2451, 3
    %v2469 = vand.u32 %v2468, 3
    %vm2470 = vcmp.lt.s32.totalorder %v2469, 2
    %vm2471 = vcmp.eq.s32.totalorder %v2469, 0
    %v2472 = vxor.u32 %v2466, 2147483648
    %v2473 = vsel %vm2471, %v2458, %v2472
    %vm2474 = vcmp.eq.s32.totalorder %v2469, 2
    %v2475 = vxor.u32 %v2458, 2147483648
    %v2476 = vsel %vm2474, %v2475, %v2466
    %v2477 = vsel %vm2470, %v2473, %v2476
    %v2478 = vsel %vm2467, nan, %v2477
    %v2479 = vand.u32 2147483647, %v291
    %vm2480 = vcmp.le.f32.partialorder %v2479, 0.7853982
    %vm2481 = vcmp.lt.s32.totalorder %v291, 0
    %v2482 = vand.u32 %v291, 2139095040
    %v2483 = vshrl.u32 %v2482, 23
    %v2484 = vsub.s32 %v2483, 127
    %v2485 = vand.u32 2147483647, %v291
    %v2486 = vand.u32 %v2485, 8388607
    %v2487 = vor.u32 %v2486, 8388608
    %v2488 = vsub.s32 0, %v2487
    %v2489 = vadd.s32 %v2484, 1
    %vm2490 = vcmp.gt.s32.totalorder %v2489, 0
    %v2491 = vsel %vm2490, %v2489, 0
    %v2492 = vshrl.u32 %v2491, 5
    %v2493 = vand.u32 %v2491, 31
    %v2494 = vsub.s32 32, %v2493
    %v2495 = vshrl.u32 683565275, %v2494
    %v2496 = vshll.u32 683565275, %v2493
    %v2497 = vshrl.u32 2475754826, %v2494
    %v2498 = vor.u32 %v2496, %v2497
    %v2499 = vshll.u32 2475754826, %v2493
    %v2500 = vshrl.u32 2131351028, %v2494
    %v2501 = vor.u32 %v2499, %v2500
    %v2502 = vshll.u32 2131351028, %v2493
    %v2503 = vshrl.u32 2102212464, %v2494
    %v2504 = vor.u32 %v2502, %v2503
    %v2505 = vshll.u32 2102212464, %v2493
    %v2506 = vshrl.u32 920167782, %v2494
    %v2507 = vor.u32 %v2505, %v2506
    %v2508 = vshll.u32 920167782, %v2493
    %v2509 = vshrl.u32 1326507024, %v2494
    %v2510 = vor.u32 %v2508, %v2509
    %vm2511 = vcmp.lt.s32.totalorder %v2492, 1
    %vm2512 = vcmp.lt.s32.totalorder %v2492, 2
    %vm2513 = vcmp.lt.s32.totalorder %v2492, 3
    %vm2514 = vcmp.lt.s32.totalorder %v2492, 4
    %v2515 = vsel %vm2511, %v2495, %v2498
    %v2516 = vsel %vm2514, %v2504, 2102212464
    %v2517 = vsel %vm2513, %v2501, %v2516
    %v2518 = vsel %vm2512, %v2515, %v2517
    %v2519 = vsel %vm2511, %v2498, %v2501
    %v2520 = vsel %vm2514, %v2507, 920167782
    %v2521 = vsel %vm2513, %v2504, %v2520
    %v2522 = vsel %vm2512, %v2519, %v2521
    %v2523 = vsel %vm2511, %v2501, %v2504
    %v2524 = vsel %vm2514, %v2510, 1326507024
    %v2525 = vsel %vm2513, %v2507, %v2524
    %v2526 = vsel %vm2512, %v2523, %v2525
    %v2527 = vshll.u32 %v2487, 8
    %v2528 = vand.u32 %v2527, 65535
    %v2529 = vshrl.u32 %v2527, 16
    %v2530 = vand.u32 %v2526, 65535
    %v2531 = vshrl.u32 %v2526, 16
    %v2532 = vmul.u32 %v2528, %v2530
    %v2533 = vmul.u32 %v2528, %v2531
    %v2534 = vmul.u32 %v2529, %v2530
    %v2535 = vmul.u32 %v2529, %v2531
    %v2536 = vshll.u32 %v2533, 16
    %v2537 = vshrl.u32 %v2533, 16
    %v2538 = vshll.u32 %v2534, 16
    %v2539 = vshrl.u32 %v2534, 16
    %vm2540 = vc.u32 %v2532, %v2536
    %v2541 = vsel %vm2540, 1, 0
    %v2542 = vadd.s32 %v2532, %v2536
    %v2543 = vadd.s32 %v2535, %v2541
    %vm2544 = vc.u32 %v2542, %v2538
    %v2545 = vsel %vm2544, 1, 0
    %v2546 = vadd.s32 %v2542, %v2538
    %v2547 = vadd.s32 %v2543, %v2545
    %v2548 = vadd.s32 %v2547, %v2537
    %v2549 = vadd.s32 %v2548, %v2539
    %v2550 = vand.u32 %v2527, 65535
    %v2551 = vshrl.u32 %v2527, 16
    %v2552 = vand.u32 %v2522, 65535
    %v2553 = vshrl.u32 %v2522, 16
    %v2554 = vmul.u32 %v2550, %v2552
    %v2555 = vmul.u32 %v2550, %v2553
    %v2556 = vmul.u32 %v2551, %v2552
    %v2557 = vmul.u32 %v2551, %v2553
    %v2558 = vshll.u32 %v2555, 16
    %v2559 = vshrl.u32 %v2555, 16
    %v2560 = vshll.u32 %v2556, 16
    %v2561 = vshrl.u32 %v2556, 16
    %vm2562 = vc.u32 %v2554, %v2558
    %v2563 = vsel %vm2562, 1, 0
    %v2564 = vadd.s32 %v2554, %v2558
    %v2565 = vadd.s32 %v2557, %v2563
    %vm2566 = vc.u32 %v2564, %v2560
    %v2567 = vsel %vm2566, 1, 0
    %v2568 = vadd.s32 %v2564, %v2560
    %v2569 = vadd.s32 %v2565, %v2567
    %v2570 = vadd.s32 %v2569, %v2559
    %v2571 = vadd.s32 %v2570, %v2561
    %v2572 = vmul.u32 %v2527, %v2518
    %v2573 = vadd.s32 %v2549, %v2568
    %vm2574 = vc.u32 %v2549, %v2568
    %v2575 = vadd.s32 %v2571, 1
    %v2576 = vsel %vm2574, %v2575, %v2571
    %v2577 = vadd.s32 %v2572, %v2576
    %v2578 = vadd.s32 %v2577, 536870912
    %v2579 = vshrl.u32 %v2578, 30
    %v2580 = vshll.u32 %v2579, 30
    %v2581 = vsub.s32 %v2577, %v2580
    %vm2582 = vcmp.lt.s32.totalorder %v2581, 0
    %v2583 = vsub.s32 0, %v2581
    %v2584 = vsel %vm2582, %v2583, %v2581
    %v2585 = vclz %v2584
    %v2586 = vsub.s32 %v2585, 2
    %vm2587 = vcmp.gt.s32.totalorder 0, %v2586
    %v2588 = vsel %vm2587, 0, %v2586
    %v2589 = vsub.s32 32, %v2588
    %v2590 = vshll.u32 %v2581, %v2588
    %v2591 = vshrl.u32 %v2573, %v2589
    %v2592 = vor.u32 %v2590, %v2591
    %v2593 = vsub.s32 4294967266, %v2588
    %v2594 = vadd.s32 %v2593, 127
    %v2595 = vshll.u32 %v2594, 23
    %v2596 = vor.u32 4788187, %v2595
    %v2597 = vand.u32 2147483647, %v2596
    %v2599 = vcvt.s32.f32 %v2592
    %v2600 = vmul.f32 %v2599, %v2597
    %v2601 = vxor.u32 %v2600, 2147483648
    %v2602 = vsel %vm2481, %v2601, %v2600
    %v2603 = vsub.s32 4, %v2579
    %v2604 = vsel %vm2481, %v2603, %v2579
    %v2605 = vsel %vm2480, %v291, %v2602
    %v2606 = vsel %vm2480, 0, %v2604
    %v2607 = vmul.f32 %v2605, %v2605
    %v2608 = vmul.f32 %v2607, -0.001358992
    %v2609 = vadd.f32 %v2608, 0.041655596
    %v2610 = vmul.f32 %v2607, %v2609
    %v2611 = vadd.f32 %v2610, -0.4999988
    %v2612 = vmul.f32 %v2607, %v2611
    %v2613 = vadd.f32 1.0, %v2612
    %v2614 = vmul.f32 %v2605, %v2605
    %v2615 = vmul.f32 %v2614, -0.00019511016
    %v2616 = vadd.f32 %v2615, 0.008332121
    %v2617 = vmul.f32 %v2614, %v2616
    %v2618 = vadd.f32 %v2617, -0.16666654
    %v2619 = vmul.f32 %v2614, %v2618
    %v2620 = vadd.f32 %v2619, 1.0
    %v2621 = vmul.f32 %v2620, %v2605
    %vm2622 = vweird.f32 %v291
    %v2623 = vadd.s32 %v2606, 3
    %v2624 = vand.u32 %v2623, 3
    %vm2625 = vcmp.lt.s32.totalorder %v2624, 2
    %vm2626 = vcmp.eq.s32.totalorder %v2624, 0
    %v2627 = vxor.u32 %v2621, 2147483648
    %v2628 = vsel %vm2626, %v2613, %v2627
    %vm2629 = vcmp.eq.s32.totalorder %v2624, 2
    %v2630 = vxor.u32 %v2613, 2147483648
    %v2631 = vsel %vm2629, %v2630, %v2621
    %v2632 = vsel %vm2625, %v2628, %v2631
    %v2633 = vsel %vm2622, nan, %v2632
    %v2634 = vand.u32 2147483647, %v292
    %vm2635 = vcmp.le.f32.partialorder %v2634, 0.7853982
    %vm2636 = vcmp.lt.s32.totalorder %v292, 0
    %v2637 = vand.u32 %v292, 2139095040
    %v2638 = vshrl.u32 %v2637, 23
    %v2639 = vsub.s32 %v2638, 127
    %v2640 = vand.u32 2147483647, %v292
    %v2641 = vand.u32 %v2640, 8388607
    %v2642 = vor.u32 %v2641, 8388608
    %v2643 = vsub.s32 0, %v2642
    %v2644 = vadd.s32 %v2639, 1
    %vm2645 = vcmp.gt.s32.totalorder %v2644, 0
    %v2646 = vsel %vm2645, %v2644, 0
    %v2647 = vshrl.u32 %v2646, 5
    %v2648 = vand.u32 %v2646, 31
    %v2649 = vsub.s32 32, %v2648
    %v2650 = vshrl.u32 683565275, %v2649
    %v2651 = vshll.u32 683565275, %v2648
    %v2652 = vshrl.u32 2475754826, %v2649
    %v2653 = vor.u32 %v2651, %v2652
    %v2654 = vshll.u32 2475754826, %v2648
    %v2655 = vshrl.u32 2131351028, %v2649
    %v2656 = vor.u32 %v2654, %v2655
    %v2657 = vshll.u32 2131351028, %v2648
    %v2658 = vshrl.u32 2102212464, %v2649
    %v2659 = vor.u32 %v2657, %v2658
    %v2660 = vshll.u32 2102212464, %v2648
    %v2661 = vshrl.u32 920167782, %v2649
    %v2662 = vor.u32 %v2660, %v2661
    %v2663 = vshll.u32 920167782, %v2648
    %v2664 = vshrl.u32 1326507024, %v2649
    %v2665 = vor.u32 %v2663, %v2664
    %vm2666 = vcmp.lt.s32.totalorder %v2647, 1
    %vm2667 = vcmp.lt.s32.totalorder %v2647, 2
    %vm2668 = vcmp.lt.s32.totalorder %v2647, 3
    %vm2669 = vcmp.lt.s32.totalorder %v2647, 4
    %v2670 = vsel %vm2666, %v2650, %v2653
    %v2671 = vsel %vm2669, %v2659, 2102212464
    %v2672 = vsel %vm2668, %v2656, %v2671
    %v2673 = vsel %vm2667, %v2670, %v2672
    %v2674 = vsel %vm2666, %v2653, %v2656
    %v2675 = vsel %vm2669, %v2662, 920167782
    %v2676 = vsel %vm2668, %v2659, %v2675
    %v2677 = vsel %vm2667, %v2674, %v2676
    %v2678 = vsel %vm2666, %v2656, %v2659
    %v2679 = vsel %vm2669, %v2665, 1326507024
    %v2680 = vsel %vm2668, %v2662, %v2679
    %v2681 = vsel %vm2667, %v2678, %v2680
    %v2682 = vshll.u32 %v2642, 8
    %v2683 = vand.u32 %v2682, 65535
    %v2684 = vshrl.u32 %v2682, 16
    %v2685 = vand.u32 %v2681, 65535
    %v2686 = vshrl.u32 %v2681, 16
    %v2687 = vmul.u32 %v2683, %v2685
    %v2688 = vmul.u32 %v2683, %v2686
    %v2689 = vmul.u32 %v2684, %v2685
    %v2690 = vmul.u32 %v2684, %v2686
    %v2691 = vshll.u32 %v2688, 16
    %v2692 = vshrl.u32 %v2688, 16
    %v2693 = vshll.u32 %v2689, 16
    %v2694 = vshrl.u32 %v2689, 16
    %vm2695 = vc.u32 %v2687, %v2691
    %v2696 = vsel %vm2695, 1, 0
    %v2697 = vadd.s32 %v2687, %v2691
    %v2698 = vadd.s32 %v2690, %v2696
    %vm2699 = vc.u32 %v2697, %v2693
    %v2700 = vsel %vm2699, 1, 0
    %v2701 = vadd.s32 %v2697, %v2693
    %v2702 = vadd.s32 %v2698, %v2700
    %v2703 = vadd.s32 %v2702, %v2692
    %v2704 = vadd.s32 %v2703, %v2694
    %v2705 = vand.u32 %v2682, 65535
    %v2706 = vshrl.u32 %v2682, 16
    %v2707 = vand.u32 %v2677, 65535
    %v2708 = vshrl.u32 %v2677, 16
    %v2709 = vmul.u32 %v2705, %v2707
    %v2710 = vmul.u32 %v2705, %v2708
    %v2711 = vmul.u32 %v2706, %v2707
    %v2712 = vmul.u32 %v2706, %v2708
    %v2713 = vshll.u32 %v2710, 16
    %v2714 = vshrl.u32 %v2710, 16
    %v2715 = vshll.u32 %v2711, 16
    %v2716 = vshrl.u32 %v2711, 16
    %vm2717 = vc.u32 %v2709, %v2713
    %v2718 = vsel %vm2717, 1, 0
    %v2719 = vadd.s32 %v2709, %v2713
    %v2720 = vadd.s32 %v2712, %v2718
    %vm2721 = vc.u32 %v2719, %v2715
    %v2722 = vsel %vm2721, 1, 0
    %v2723 = vadd.s32 %v2719, %v2715
    %v2724 = vadd.s32 %v2720, %v2722
    %v2725 = vadd.s32 %v2724, %v2714
    %v2726 = vadd.s32 %v2725, %v2716
    %v2727 = vmul.u32 %v2682, %v2673
    %v2728 = vadd.s32 %v2704, %v2723
    %vm2729 = vc.u32 %v2704, %v2723
    %v2730 = vadd.s32 %v2726, 1
    %v2731 = vsel %vm2729, %v2730, %v2726
    %v2732 = vadd.s32 %v2727, %v2731
    %v2733 = vadd.s32 %v2732, 536870912
    %v2734 = vshrl.u32 %v2733, 30
    %v2735 = vshll.u32 %v2734, 30
    %v2736 = vsub.s32 %v2732, %v2735
    %vm2737 = vcmp.lt.s32.totalorder %v2736, 0
    %v2738 = vsub.s32 0, %v2736
    %v2739 = vsel %vm2737, %v2738, %v2736
    %v2740 = vclz %v2739
    %v2741 = vsub.s32 %v2740, 2
    %vm2742 = vcmp.gt.s32.totalorder 0, %v2741
    %v2743 = vsel %vm2742, 0, %v2741
    %v2744 = vsub.s32 32, %v2743
    %v2745 = vshll.u32 %v2736, %v2743
    %v2746 = vshrl.u32 %v2728, %v2744
    %v2747 = vor.u32 %v2745, %v2746
    %v2748 = vsub.s32 4294967266, %v2743
    %v2749 = vadd.s32 %v2748, 127
    %v2750 = vshll.u32 %v2749, 23
    %v2751 = vor.u32 4788187, %v2750
    %v2752 = vand.u32 2147483647, %v2751
    %v2754 = vcvt.s32.f32 %v2747
    %v2755 = vmul.f32 %v2754, %v2752
    %v2756 = vxor.u32 %v2755, 2147483648
    %v2757 = vsel %vm2636, %v2756, %v2755
    %v2758 = vsub.s32 4, %v2734
    %v2759 = vsel %vm2636, %v2758, %v2734
    %v2760 = vsel %vm2635, %v292, %v2757
    %v2761 = vsel %vm2635, 0, %v2759
    %v2762 = vmul.f32 %v2760, %v2760
    %v2763 = vmul.f32 %v2762, -0.001358992
    %v2764 = vadd.f32 %v2763, 0.041655596
    %v2765 = vmul.f32 %v2762, %v2764
    %v2766 = vadd.f32 %v2765, -0.4999988
    %v2767 = vmul.f32 %v2762, %v2766
    %v2768 = vadd.f32 1.0, %v2767
    %v2769 = vmul.f32 %v2760, %v2760
    %v2770 = vmul.f32 %v2769, -0.00019511016
    %v2771 = vadd.f32 %v2770, 0.008332121
    %v2772 = vmul.f32 %v2769, %v2771
    %v2773 = vadd.f32 %v2772, -0.16666654
    %v2774 = vmul.f32 %v2769, %v2773
    %v2775 = vadd.f32 %v2774, 1.0
    %v2776 = vmul.f32 %v2775, %v2760
    %vm2777 = vweird.f32 %v292
    %v2778 = vadd.s32 %v2761, 3
    %v2779 = vand.u32 %v2778, 3
    %vm2780 = vcmp.lt.s32.totalorder %v2779, 2
    %vm2781 = vcmp.eq.s32.totalorder %v2779, 0
    %v2782 = vxor.u32 %v2776, 2147483648
    %v2783 = vsel %vm2781, %v2768, %v2782
    %vm2784 = vcmp.eq.s32.totalorder %v2779, 2
    %v2785 = vxor.u32 %v2768, 2147483648
    %v2786 = vsel %vm2784, %v2785, %v2776
    %v2787 = vsel %vm2780, %v2783, %v2786
    %v2788 = vsel %vm2777, nan, %v2787
    %v2789 = vand.u32 2147483647, %v293
    %vm2790 = vcmp.le.f32.partialorder %v2789, 0.7853982
    %vm2791 = vcmp.lt.s32.totalorder %v293, 0
    %v2792 = vand.u32 %v293, 2139095040
    %v2793 = vshrl.u32 %v2792, 23
    %v2794 = vsub.s32 %v2793, 127
    %v2795 = vand.u32 2147483647, %v293
    %v2796 = vand.u32 %v2795, 8388607
    %v2797 = vor.u32 %v2796, 8388608
    %v2798 = vsub.s32 0, %v2797
    %v2799 = vadd.s32 %v2794, 1
    %vm2800 = vcmp.gt.s32.totalorder %v2799, 0
    %v2801 = vsel %vm2800, %v2799, 0
    %v2802 = vshrl.u32 %v2801, 5
    %v2803 = vand.u32 %v2801, 31
    %v2804 = vsub.s32 32, %v2803
    %v2805 = vshrl.u32 683565275, %v2804
    %v2806 = vshll.u32 683565275, %v2803
    %v2807 = vshrl.u32 2475754826, %v2804
    %v2808 = vor.u32 %v2806, %v2807
    %v2809 = vshll.u32 2475754826, %v2803
    %v2810 = vshrl.u32 2131351028, %v2804
    %v2811 = vor.u32 %v2809, %v2810
    %v2812 = vshll.u32 2131351028, %v2803
    %v2813 = vshrl.u32 2102212464, %v2804
    %v2814 = vor.u32 %v2812, %v2813
    %v2815 = vshll.u32 2102212464, %v2803
    %v2816 = vshrl.u32 920167782, %v2804
    %v2817 = vor.u32 %v2815, %v2816
    %v2818 = vshll.u32 920167782, %v2803
    %v2819 = vshrl.u32 1326507024, %v2804
    %v2820 = vor.u32 %v2818, %v2819
    %vm2821 = vcmp.lt.s32.totalorder %v2802, 1
    %vm2822 = vcmp.lt.s32.totalorder %v2802, 2
    %vm2823 = vcmp.lt.s32.totalorder %v2802, 3
    %vm2824 = vcmp.lt.s32.totalorder %v2802, 4
    %v2825 = vsel %vm2821, %v2805, %v2808
    %v2826 = vsel %vm2824, %v2814, 2102212464
    %v2827 = vsel %vm2823, %v2811, %v2826
    %v2828 = vsel %vm2822, %v2825, %v2827
    %v2829 = vsel %vm2821, %v2808, %v2811
    %v2830 = vsel %vm2824, %v2817, 920167782
    %v2831 = vsel %vm2823, %v2814, %v2830
    %v2832 = vsel %vm2822, %v2829, %v2831
    %v2833 = vsel %vm2821, %v2811, %v2814
    %v2834 = vsel %vm2824, %v2820, 1326507024
    %v2835 = vsel %vm2823, %v2817, %v2834
    %v2836 = vsel %vm2822, %v2833, %v2835
    %v2837 = vshll.u32 %v2797, 8
    %v2838 = vand.u32 %v2837, 65535
    %v2839 = vshrl.u32 %v2837, 16
    %v2840 = vand.u32 %v2836, 65535
    %v2841 = vshrl.u32 %v2836, 16
    %v2842 = vmul.u32 %v2838, %v2840
    %v2843 = vmul.u32 %v2838, %v2841
    %v2844 = vmul.u32 %v2839, %v2840
    %v2845 = vmul.u32 %v2839, %v2841
    %v2846 = vshll.u32 %v2843, 16
    %v2847 = vshrl.u32 %v2843, 16
    %v2848 = vshll.u32 %v2844, 16
    %v2849 = vshrl.u32 %v2844, 16
    %vm2850 = vc.u32 %v2842, %v2846
    %v2851 = vsel %vm2850, 1, 0
    %v2852 = vadd.s32 %v2842, %v2846
    %v2853 = vadd.s32 %v2845, %v2851
    %vm2854 = vc.u32 %v2852, %v2848
    %v2855 = vsel %vm2854, 1, 0
    %v2856 = vadd.s32 %v2852, %v2848
    %v2857 = vadd.s32 %v2853, %v2855
    %v2858 = vadd.s32 %v2857, %v2847
    %v2859 = vadd.s32 %v2858, %v2849
    %v2860 = vand.u32 %v2837, 65535
    %v2861 = vshrl.u32 %v2837, 16
    %v2862 = vand.u32 %v2832, 65535
    %v2863 = vshrl.u32 %v2832, 16
    %v2864 = vmul.u32 %v2860, %v2862
    %v2865 = vmul.u32 %v2860, %v2863
    %v2866 = vmul.u32 %v2861, %v2862
    %v2867 = vmul.u32 %v2861, %v2863
    %v2868 = vshll.u32 %v2865, 16
    %v2869 = vshrl.u32 %v2865, 16
    %v2870 = vshll.u32 %v2866, 16
    %v2871 = vshrl.u32 %v2866, 16
    %vm2872 = vc.u32 %v2864, %v2868
    %v2873 = vsel %vm2872, 1, 0
    %v2874 = vadd.s32 %v2864, %v2868
    %v2875 = vadd.s32 %v2867, %v2873
    %vm2876 = vc.u32 %v2874, %v2870
    %v2877 = vsel %vm2876, 1, 0
    %v2878 = vadd.s32 %v2874, %v2870
    %v2879 = vadd.s32 %v2875, %v2877
    %v2880 = vadd.s32 %v2879, %v2869
    %v2881 = vadd.s32 %v2880, %v2871
    %v2882 = vmul.u32 %v2837, %v2828
    %v2883 = vadd.s32 %v2859, %v2878
    %vm2884 = vc.u32 %v2859, %v2878
    %v2885 = vadd.s32 %v2881, 1
    %v2886 = vsel %vm2884, %v2885, %v2881
    %v2887 = vadd.s32 %v2882, %v2886
    %v2888 = vadd.s32 %v2887, 536870912
    %v2889 = vshrl.u32 %v2888, 30
    %v2890 = vshll.u32 %v2889, 30
    %v2891 = vsub.s32 %v2887, %v2890
    %vm2892 = vcmp.lt.s32.totalorder %v2891, 0
    %v2893 = vsub.s32 0, %v2891
    %v2894 = vsel %vm2892, %v2893, %v2891
    %v2895 = vclz %v2894
    %v2896 = vsub.s32 %v2895, 2
    %vm2897 = vcmp.gt.s32.totalorder 0, %v2896
    %v2898 = vsel %vm2897, 0, %v2896
    %v2899 = vsub.s32 32, %v2898
    %v2900 = vshll.u32 %v2891, %v2898
    %v2901 = vshrl.u32 %v2883, %v2899
    %v2902 = vor.u32 %v2900, %v2901
    %v2903 = vsub.s32 4294967266, %v2898
    %v2904 = vadd.s32 %v2903, 127
    %v2905 = vshll.u32 %v2904, 23
    %v2906 = vor.u32 4788187, %v2905
    %v2907 = vand.u32 2147483647, %v2906
    %v2909 = vcvt.s32.f32 %v2902
    %v2910 = vmul.f32 %v2909, %v2907
    %v2911 = vxor.u32 %v2910, 2147483648
    %v2912 = vsel %vm2791, %v2911, %v2910
    %v2913 = vsub.s32 4, %v2889
    %v2914 = vsel %vm2791, %v2913, %v2889
    %v2915 = vsel %vm2790, %v293, %v2912
    %v2916 = vsel %vm2790, 0, %v2914
    %v2917 = vmul.f32 %v2915, %v2915
    %v2918 = vmul.f32 %v2917, -0.001358992
    %v2919 = vadd.f32 %v2918, 0.041655596
    %v2920 = vmul.f32 %v2917, %v2919
    %v2921 = vadd.f32 %v2920, -0.4999988
    %v2922 = vmul.f32 %v2917, %v2921
    %v2923 = vadd.f32 1.0, %v2922
    %v2924 = vmul.f32 %v2915, %v2915
    %v2925 = vmul.f32 %v2924, -0.00019511016
    %v2926 = vadd.f32 %v2925, 0.008332121
    %v2927 = vmul.f32 %v2924, %v2926
    %v2928 = vadd.f32 %v2927, -0.16666654
    %v2929 = vmul.f32 %v2924, %v2928
    %v2930 = vadd.f32 %v2929, 1.0
    %v2931 = vmul.f32 %v2930, %v2915
    %vm2932 = vweird.f32 %v293
    %v2933 = vadd.s32 %v2916, 3
    %v2934 = vand.u32 %v2933, 3
    %vm2935 = vcmp.lt.s32.totalorder %v2934, 2
    %vm2936 = vcmp.eq.s32.totalorder %v2934, 0
    %v2937 = vxor.u32 %v2931, 2147483648
    %v2938 = vsel %vm2936, %v2923, %v2937
    %vm2939 = vcmp.eq.s32.totalorder %v2934, 2
    %v2940 = vxor.u32 %v2923, 2147483648
    %v2941 = vsel %vm2939, %v2940, %v2931
    %v2942 = vsel %vm2935, %v2938, %v2941
    %v2943 = vsel %vm2932, nan, %v2942
    %v2944 = vand.u32 2147483647, %v294
    %vm2945 = vcmp.le.f32.partialorder %v2944, 0.7853982
    %vm2946 = vcmp.lt.s32.totalorder %v294, 0
    %v2947 = vand.u32 %v294, 2139095040
    %v2948 = vshrl.u32 %v2947, 23
    %v2949 = vsub.s32 %v2948, 127
    %v2950 = vand.u32 2147483647, %v294
    %v2951 = vand.u32 %v2950, 8388607
    %v2952 = vor.u32 %v2951, 8388608
    %v2953 = vsub.s32 0, %v2952
    %v2954 = vadd.s32 %v2949, 1
    %vm2955 = vcmp.gt.s32.totalorder %v2954, 0
    %v2956 = vsel %vm2955, %v2954, 0
    %v2957 = vshrl.u32 %v2956, 5
    %v2958 = vand.u32 %v2956, 31
    %v2959 = vsub.s32 32, %v2958
    %v2960 = vshrl.u32 683565275, %v2959
    %v2961 = vshll.u32 683565275, %v2958
    %v2962 = vshrl.u32 2475754826, %v2959
    %v2963 = vor.u32 %v2961, %v2962
    %v2964 = vshll.u32 2475754826, %v2958
    %v2965 = vshrl.u32 2131351028, %v2959
    %v2966 = vor.u32 %v2964, %v2965
    %v2967 = vshll.u32 2131351028, %v2958
    %v2968 = vshrl.u32 2102212464, %v2959
    %v2969 = vor.u32 %v2967, %v2968
    %v2970 = vshll.u32 2102212464, %v2958
    %v2971 = vshrl.u32 920167782, %v2959
    %v2972 = vor.u32 %v2970, %v2971
    %v2973 = vshll.u32 920167782, %v2958
    %v2974 = vshrl.u32 1326507024, %v2959
    %v2975 = vor.u32 %v2973, %v2974
    %vm2976 = vcmp.lt.s32.totalorder %v2957, 1
    %vm2977 = vcmp.lt.s32.totalorder %v2957, 2
    %vm2978 = vcmp.lt.s32.totalorder %v2957, 3
    %vm2979 = vcmp.lt.s32.totalorder %v2957, 4
    %v2980 = vsel %vm2976, %v2960, %v2963
    %v2981 = vsel %vm2979, %v2969, 2102212464
    %v2982 = vsel %vm2978, %v2966, %v2981
    %v2983 = vsel %vm2977, %v2980, %v2982
    %v2984 = vsel %vm2976, %v2963, %v2966
    %v2985 = vsel %vm2979, %v2972, 920167782
    %v2986 = vsel %vm2978, %v2969, %v2985
    %v2987 = vsel %vm2977, %v2984, %v2986
    %v2988 = vsel %vm2976, %v2966, %v2969
    %v2989 = vsel %vm2979, %v2975, 1326507024
    %v2990 = vsel %vm2978, %v2972, %v2989
    %v2991 = vsel %vm2977, %v2988, %v2990
    %v2992 = vshll.u32 %v2952, 8
    %v2993 = vand.u32 %v2992, 65535
    %v2994 = vshrl.u32 %v2992, 16
    %v2995 = vand.u32 %v2991, 65535
    %v2996 = vshrl.u32 %v2991, 16
    %v2997 = vmul.u32 %v2993, %v2995
    %v2998 = vmul.u32 %v2993, %v2996
    %v2999 = vmul.u32 %v2994, %v2995
    %v3000 = vmul.u32 %v2994, %v2996
    %v3001 = vshll.u32 %v2998, 16
    %v3002 = vshrl.u32 %v2998, 16
    %v3003 = vshll.u32 %v2999, 16
    %v3004 = vshrl.u32 %v2999, 16
    %vm3005 = vc.u32 %v2997, %v3001
    %v3006 = vsel %vm3005, 1, 0
    %v3007 = vadd.s32 %v2997, %v3001
    %v3008 = vadd.s32 %v3000, %v3006
    %vm3009 = vc.u32 %v3007, %v3003
    %v3010 = vsel %vm3009, 1, 0
    %v3011 = vadd.s32 %v3007, %v3003
    %v3012 = vadd.s32 %v3008, %v3010
    %v3013 = vadd.s32 %v3012, %v3002
    %v3014 = vadd.s32 %v3013, %v3004
    %v3015 = vand.u32 %v2992, 65535
    %v3016 = vshrl.u32 %v2992, 16
    %v3017 = vand.u32 %v2987, 65535
    %v3018 = vshrl.u32 %v2987, 16
    %v3019 = vmul.u32 %v3015, %v3017
    %v3020 = vmul.u32 %v3015, %v3018
    %v3021 = vmul.u32 %v3016, %v3017
    %v3022 = vmul.u32 %v3016, %v3018
    %v3023 = vshll.u32 %v3020, 16
    %v3024 = vshrl.u32 %v3020, 16
    %v3025 = vshll.u32 %v3021, 16
    %v3026 = vshrl.u32 %v3021, 16
    %vm3027 = vc.u32 %v3019, %v3023
    %v3028 = vsel %vm3027, 1, 0
    %v3029 = vadd.s32 %v3019, %v3023
    %v3030 = vadd.s32 %v3022, %v3028
    %vm3031 = vc.u32 %v3029, %v3025
    %v3032 = vsel %vm3031, 1, 0
    %v3033 = vadd.s32 %v3029, %v3025
    %v3034 = vadd.s32 %v3030, %v3032
    %v3035 = vadd.s32 %v3034, %v3024
    %v3036 = vadd.s32 %v3035, %v3026
    %v3037 = vmul.u32 %v2992, %v2983
    %v3038 = vadd.s32 %v3014, %v3033
    %vm3039 = vc.u32 %v3014, %v3033
    %v3040 = vadd.s32 %v3036, 1
    %v3041 = vsel %vm3039, %v3040, %v3036
    %v3042 = vadd.s32 %v3037, %v3041
    %v3043 = vadd.s32 %v3042, 536870912
    %v3044 = vshrl.u32 %v3043, 30
    %v3045 = vshll.u32 %v3044, 30
    %v3046 = vsub.s32 %v3042, %v3045
    %vm3047 = vcmp.lt.s32.totalorder %v3046, 0
    %v3048 = vsub.s32 0, %v3046
    %v3049 = vsel %vm3047, %v3048, %v3046
    %v3050 = vclz %v3049
    %v3051 = vsub.s32 %v3050, 2
    %vm3052 = vcmp.gt.s32.totalorder 0, %v3051
    %v3053 = vsel %vm3052, 0, %v3051
    %v3054 = vsub.s32 32, %v3053
    %v3055 = vshll.u32 %v3046, %v3053
    %v3056 = vshrl.u32 %v3038, %v3054
    %v3057 = vor.u32 %v3055, %v3056
    %v3058 = vsub.s32 4294967266, %v3053
    %v3059 = vadd.s32 %v3058, 127
    %v3060 = vshll.u32 %v3059, 23
    %v3061 = vor.u32 4788187, %v3060
    %v3062 = vand.u32 2147483647, %v3061
    %v3064 = vcvt.s32.f32 %v3057
    %v3065 = vmul.f32 %v3064, %v3062
    %v3066 = vxor.u32 %v3065, 2147483648
    %v3067 = vsel %vm2946, %v3066, %v3065
    %v3068 = vsub.s32 4, %v3044
    %v3069 = vsel %vm2946, %v3068, %v3044
    %v3070 = vsel %vm2945, %v294, %v3067
    %v3071 = vsel %vm2945, 0, %v3069
    %v3072 = vmul.f32 %v3070, %v3070
    %v3073 = vmul.f32 %v3072, -0.001358992
    %v3074 = vadd.f32 %v3073, 0.041655596
    %v3075 = vmul.f32 %v3072, %v3074
    %v3076 = vadd.f32 %v3075, -0.4999988
    %v3077 = vmul.f32 %v3072, %v3076
    %v3078 = vadd.f32 1.0, %v3077
    %v3079 = vmul.f32 %v3070, %v3070
    %v3080 = vmul.f32 %v3079, -0.00019511016
    %v3081 = vadd.f32 %v3080, 0.008332121
    %v3082 = vmul.f32 %v3079, %v3081
    %v3083 = vadd.f32 %v3082, -0.16666654
    %v3084 = vmul.f32 %v3079, %v3083
    %v3085 = vadd.f32 %v3084, 1.0
    %v3086 = vmul.f32 %v3085, %v3070
    %vm3087 = vweird.f32 %v294
    %v3088 = vadd.s32 %v3071, 3
    %v3089 = vand.u32 %v3088, 3
    %vm3090 = vcmp.lt.s32.totalorder %v3089, 2
    %vm3091 = vcmp.eq.s32.totalorder %v3089, 0
    %v3092 = vxor.u32 %v3086, 2147483648
    %v3093 = vsel %vm3091, %v3078, %v3092
    %vm3094 = vcmp.eq.s32.totalorder %v3089, 2
    %v3095 = vxor.u32 %v3078, 2147483648
    %v3096 = vsel %vm3094, %v3095, %v3086
    %v3097 = vsel %vm3090, %v3093, %v3096
    %v3098 = vsel %vm3087, nan, %v3097
    %v3099 = vand.u32 2147483647, %v295
    %vm3100 = vcmp.le.f32.partialorder %v3099, 0.7853982
    %vm3101 = vcmp.lt.s32.totalorder %v295, 0
    %v3102 = vand.u32 %v295, 2139095040
    %v3103 = vshrl.u32 %v3102, 23
    %v3104 = vsub.s32 %v3103, 127
    %v3105 = vand.u32 2147483647, %v295
    %v3106 = vand.u32 %v3105, 8388607
    %v3107 = vor.u32 %v3106, 8388608
    %v3108 = vsub.s32 0, %v3107
    %v3109 = vadd.s32 %v3104, 1
    %vm3110 = vcmp.gt.s32.totalorder %v3109, 0
    %v3111 = vsel %vm3110, %v3109, 0
    %v3112 = vshrl.u32 %v3111, 5
    %v3113 = vand.u32 %v3111, 31
    %v3114 = vsub.s32 32, %v3113
    %v3115 = vshrl.u32 683565275, %v3114
    %v3116 = vshll.u32 683565275, %v3113
    %v3117 = vshrl.u32 2475754826, %v3114
    %v3118 = vor.u32 %v3116, %v3117
    %v3119 = vshll.u32 2475754826, %v3113
    %v3120 = vshrl.u32 2131351028, %v3114
    %v3121 = vor.u32 %v3119, %v3120
    %v3122 = vshll.u32 2131351028, %v3113
    %v3123 = vshrl.u32 2102212464, %v3114
    %v3124 = vor.u32 %v3122, %v3123
    %v3125 = vshll.u32 2102212464, %v3113
    %v3126 = vshrl.u32 920167782, %v3114
    %v3127 = vor.u32 %v3125, %v3126
    %v3128 = vshll.u32 920167782, %v3113
    %v3129 = vshrl.u32 1326507024, %v3114
    %v3130 = vor.u32 %v3128, %v3129
    %vm3131 = vcmp.lt.s32.totalorder %v3112, 1
    %vm3132 = vcmp.lt.s32.totalorder %v3112, 2
    %vm3133 = vcmp.lt.s32.totalorder %v3112, 3
    %vm3134 = vcmp.lt.s32.totalorder %v3112, 4
    %v3135 = vsel %vm3131, %v3115, %v3118
    %v3136 = vsel %vm3134, %v3124, 2102212464
    %v3137 = vsel %vm3133, %v3121, %v3136
    %v3138 = vsel %vm3132, %v3135, %v3137
    %v3139 = vsel %vm3131, %v3118, %v3121
    %v3140 = vsel %vm3134, %v3127, 920167782
    %v3141 = vsel %vm3133, %v3124, %v3140
    %v3142 = vsel %vm3132, %v3139, %v3141
    %v3143 = vsel %vm3131, %v3121, %v3124
    %v3144 = vsel %vm3134, %v3130, 1326507024
    %v3145 = vsel %vm3133, %v3127, %v3144
    %v3146 = vsel %vm3132, %v3143, %v3145
    %v3147 = vshll.u32 %v3107, 8
    %v3148 = vand.u32 %v3147, 65535
    %v3149 = vshrl.u32 %v3147, 16
    %v3150 = vand.u32 %v3146, 65535
    %v3151 = vshrl.u32 %v3146, 16
    %v3152 = vmul.u32 %v3148, %v3150
    %v3153 = vmul.u32 %v3148, %v3151
    %v3154 = vmul.u32 %v3149, %v3150
    %v3155 = vmul.u32 %v3149, %v3151
    %v3156 = vshll.u32 %v3153, 16
    %v3157 = vshrl.u32 %v3153, 16
    %v3158 = vshll.u32 %v3154, 16
    %v3159 = vshrl.u32 %v3154, 16
    %vm3160 = vc.u32 %v3152, %v3156
    %v3161 = vsel %vm3160, 1, 0
    %v3162 = vadd.s32 %v3152, %v3156
    %v3163 = vadd.s32 %v3155, %v3161
    %vm3164 = vc.u32 %v3162, %v3158
    %v3165 = vsel %vm3164, 1, 0
    %v3166 = vadd.s32 %v3162, %v3158
    %v3167 = vadd.s32 %v3163, %v3165
    %v3168 = vadd.s32 %v3167, %v3157
    %v3169 = vadd.s32 %v3168, %v3159
    %v3170 = vand.u32 %v3147, 65535
    %v3171 = vshrl.u32 %v3147, 16
    %v3172 = vand.u32 %v3142, 65535
    %v3173 = vshrl.u32 %v3142, 16
    %v3174 = vmul.u32 %v3170, %v3172
    %v3175 = vmul.u32 %v3170, %v3173
    %v3176 = vmul.u32 %v3171, %v3172
    %v3177 = vmul.u32 %v3171, %v3173
    %v3178 = vshll.u32 %v3175, 16
    %v3179 = vshrl.u32 %v3175, 16
    %v3180 = vshll.u32 %v3176, 16
    %v3181 = vshrl.u32 %v3176, 16
    %vm3182 = vc.u32 %v3174, %v3178
    %v3183 = vsel %vm3182, 1, 0
    %v3184 = vadd.s32 %v3174, %v3178
    %v3185 = vadd.s32 %v3177, %v3183
    %vm3186 = vc.u32 %v3184, %v3180
    %v3187 = vsel %vm3186, 1, 0
    %v3188 = vadd.s32 %v3184, %v3180
    %v3189 = vadd.s32 %v3185, %v3187
    %v3190 = vadd.s32 %v3189, %v3179
    %v3191 = vadd.s32 %v3190, %v3181
    %v3192 = vmul.u32 %v3147, %v3138
    %v3193 = vadd.s32 %v3169, %v3188
    %vm3194 = vc.u32 %v3169, %v3188
    %v3195 = vadd.s32 %v3191, 1
    %v3196 = vsel %vm3194, %v3195, %v3191
    %v3197 = vadd.s32 %v3192, %v3196
    %v3198 = vadd.s32 %v3197, 536870912
    %v3199 = vshrl.u32 %v3198, 30
    %v3200 = vshll.u32 %v3199, 30
    %v3201 = vsub.s32 %v3197, %v3200
    %vm3202 = vcmp.lt.s32.totalorder %v3201, 0
    %v3203 = vsub.s32 0, %v3201
    %v3204 = vsel %vm3202, %v3203, %v3201
    %v3205 = vclz %v3204
    %v3206 = vsub.s32 %v3205, 2
    %vm3207 = vcmp.gt.s32.totalorder 0, %v3206
    %v3208 = vsel %vm3207, 0, %v3206
    %v3209 = vsub.s32 32, %v3208
    %v3210 = vshll.u32 %v3201, %v3208
    %v3211 = vshrl.u32 %v3193, %v3209
    %v3212 = vor.u32 %v3210, %v3211
    %v3213 = vsub.s32 4294967266, %v3208
    %v3214 = vadd.s32 %v3213, 127
    %v3215 = vshll.u32 %v3214, 23
    %v3216 = vor.u32 4788187, %v3215
    %v3217 = vand.u32 2147483647, %v3216
    %v3219 = vcvt.s32.f32 %v3212
    %v3220 = vmul.f32 %v3219, %v3217
    %v3221 = vxor.u32 %v3220, 2147483648
    %v3222 = vsel %vm3101, %v3221, %v3220
    %v3223 = vsub.s32 4, %v3199
    %v3224 = vsel %vm3101, %v3223, %v3199
    %v3225 = vsel %vm3100, %v295, %v3222
    %v3226 = vsel %vm3100, 0, %v3224
    %v3227 = vmul.f32 %v3225, %v3225
    %v3228 = vmul.f32 %v3227, -0.001358992
    %v3229 = vadd.f32 %v3228, 0.041655596
    %v3230 = vmul.f32 %v3227, %v3229
    %v3231 = vadd.f32 %v3230, -0.4999988
    %v3232 = vmul.f32 %v3227, %v3231
    %v3233 = vadd.f32 1.0, %v3232
    %v3234 = vmul.f32 %v3225, %v3225
    %v3235 = vmul.f32 %v3234, -0.00019511016
    %v3236 = vadd.f32 %v3235, 0.008332121
    %v3237 = vmul.f32 %v3234, %v3236
    %v3238 = vadd.f32 %v3237, -0.16666654
    %v3239 = vmul.f32 %v3234, %v3238
    %v3240 = vadd.f32 %v3239, 1.0
    %v3241 = vmul.f32 %v3240, %v3225
    %vm3242 = vweird.f32 %v295
    %v3243 = vadd.s32 %v3226, 3
    %v3244 = vand.u32 %v3243, 3
    %vm3245 = vcmp.lt.s32.totalorder %v3244, 2
    %vm3246 = vcmp.eq.s32.totalorder %v3244, 0
    %v3247 = vxor.u32 %v3241, 2147483648
    %v3248 = vsel %vm3246, %v3233, %v3247
    %vm3249 = vcmp.eq.s32.totalorder %v3244, 2
    %v3250 = vxor.u32 %v3233, 2147483648
    %v3251 = vsel %vm3249, %v3250, %v3241
    %v3252 = vsel %vm3245, %v3248, %v3251
    %v3253 = vsel %vm3242, nan, %v3252
    %v3254 = vand.u32 2147483647, %v296
    %vm3255 = vcmp.le.f32.partialorder %v3254, 0.7853982
    %vm3256 = vcmp.lt.s32.totalorder %v296, 0
    %v3257 = vand.u32 %v296, 2139095040
    %v3258 = vshrl.u32 %v3257, 23
    %v3259 = vsub.s32 %v3258, 127
    %v3260 = vand.u32 2147483647, %v296
    %v3261 = vand.u32 %v3260, 8388607
    %v3262 = vor.u32 %v3261, 8388608
    %v3263 = vsub.s32 0, %v3262
    %v3264 = vadd.s32 %v3259, 1
    %vm3265 = vcmp.gt.s32.totalorder %v3264, 0
    %v3266 = vsel %vm3265, %v3264, 0
    %v3267 = vshrl.u32 %v3266, 5
    %v3268 = vand.u32 %v3266, 31
    %v3269 = vsub.s32 32, %v3268
    %v3270 = vshrl.u32 683565275, %v3269
    %v3271 = vshll.u32 683565275, %v3268
    %v3272 = vshrl.u32 2475754826, %v3269
    %v3273 = vor.u32 %v3271, %v3272
    %v3274 = vshll.u32 2475754826, %v3268
    %v3275 = vshrl.u32 2131351028, %v3269
    %v3276 = vor.u32 %v3274, %v3275
    %v3277 = vshll.u32 2131351028, %v3268
    %v3278 = vshrl.u32 2102212464, %v3269
    %v3279 = vor.u32 %v3277, %v3278
    %v3280 = vshll.u32 2102212464, %v3268
    %v3281 = vshrl.u32 920167782, %v3269
    %v3282 = vor.u32 %v3280, %v3281
    %v3283 = vshll.u32 920167782, %v3268
    %v3284 = vshrl.u32 1326507024, %v3269
    %v3285 = vor.u32 %v3283, %v3284
    %vm3286 = vcmp.lt.s32.totalorder %v3267, 1
    %vm3287 = vcmp.lt.s32.totalorder %v3267, 2
    %vm3288 = vcmp.lt.s32.totalorder %v3267, 3
    %vm3289 = vcmp.lt.s32.totalorder %v3267, 4
    %v3290 = vsel %vm3286, %v3270, %v3273
    %v3291 = vsel %vm3289, %v3279, 2102212464
    %v3292 = vsel %vm3288, %v3276, %v3291
    %v3293 = vsel %vm3287, %v3290, %v3292
    %v3294 = vsel %vm3286, %v3273, %v3276
    %v3295 = vsel %vm3289, %v3282, 920167782
    %v3296 = vsel %vm3288, %v3279, %v3295
    %v3297 = vsel %vm3287, %v3294, %v3296
    %v3298 = vsel %vm3286, %v3276, %v3279
    %v3299 = vsel %vm3289, %v3285, 1326507024
    %v3300 = vsel %vm3288, %v3282, %v3299
    %v3301 = vsel %vm3287, %v3298, %v3300
    %v3302 = vshll.u32 %v3262, 8
    %v3303 = vand.u32 %v3302, 65535
    %v3304 = vshrl.u32 %v3302, 16
    %v3305 = vand.u32 %v3301, 65535
    %v3306 = vshrl.u32 %v3301, 16
    %v3307 = vmul.u32 %v3303, %v3305
    %v3308 = vmul.u32 %v3303, %v3306
    %v3309 = vmul.u32 %v3304, %v3305
    %v3310 = vmul.u32 %v3304, %v3306
    %v3311 = vshll.u32 %v3308, 16
    %v3312 = vshrl.u32 %v3308, 16
    %v3313 = vshll.u32 %v3309, 16
    %v3314 = vshrl.u32 %v3309, 16
    %vm3315 = vc.u32 %v3307, %v3311
    %v3316 = vsel %vm3315, 1, 0
    %v3317 = vadd.s32 %v3307, %v3311
    %v3318 = vadd.s32 %v3310, %v3316
    %vm3319 = vc.u32 %v3317, %v3313
    %v3320 = vsel %vm3319, 1, 0
    %v3321 = vadd.s32 %v3317, %v3313
    %v3322 = vadd.s32 %v3318, %v3320
    %v3323 = vadd.s32 %v3322, %v3312
    %v3324 = vadd.s32 %v3323, %v3314
    %v3325 = vand.u32 %v3302, 65535
    %v3326 = vshrl.u32 %v3302, 16
    %v3327 = vand.u32 %v3297, 65535
    %v3328 = vshrl.u32 %v3297, 16
    %v3329 = vmul.u32 %v3325, %v3327
    %v3330 = vmul.u32 %v3325, %v3328
    %v3331 = vmul.u32 %v3326, %v3327
    %v3332 = vmul.u32 %v3326, %v3328
    %v3333 = vshll.u32 %v3330, 16
    %v3334 = vshrl.u32 %v3330, 16
    %v3335 = vshll.u32 %v3331, 16
    %v3336 = vshrl.u32 %v3331, 16
    %vm3337 = vc.u32 %v3329, %v3333
    %v3338 = vsel %vm3337, 1, 0
    %v3339 = vadd.s32 %v3329, %v3333
    %v3340 = vadd.s32 %v3332, %v3338
    %vm3341 = vc.u32 %v3339, %v3335
    %v3342 = vsel %vm3341, 1, 0
    %v3343 = vadd.s32 %v3339, %v3335
    %v3344 = vadd.s32 %v3340, %v3342
    %v3345 = vadd.s32 %v3344, %v3334
    %v3346 = vadd.s32 %v3345, %v3336
    %v3347 = vmul.u32 %v3302, %v3293
    %v3348 = vadd.s32 %v3324, %v3343
    %vm3349 = vc.u32 %v3324, %v3343
    %v3350 = vadd.s32 %v3346, 1
    %v3351 = vsel %vm3349, %v3350, %v3346
    %v3352 = vadd.s32 %v3347, %v3351
    %v3353 = vadd.s32 %v3352, 536870912
    %v3354 = vshrl.u32 %v3353, 30
    %v3355 = vshll.u32 %v3354, 30
    %v3356 = vsub.s32 %v3352, %v3355
    %vm3357 = vcmp.lt.s32.totalorder %v3356, 0
    %v3358 = vsub.s32 0, %v3356
    %v3359 = vsel %vm3357, %v3358, %v3356
    %v3360 = vclz %v3359
    %v3361 = vsub.s32 %v3360, 2
    %vm3362 = vcmp.gt.s32.totalorder 0, %v3361
    %v3363 = vsel %vm3362, 0, %v3361
    %v3364 = vsub.s32 32, %v3363
    %v3365 = vshll.u32 %v3356, %v3363
    %v3366 = vshrl.u32 %v3348, %v3364
    %v3367 = vor.u32 %v3365, %v3366
    %v3368 = vsub.s32 4294967266, %v3363
    %v3369 = vadd.s32 %v3368, 127
    %v3370 = vshll.u32 %v3369, 23
    %v3371 = vor.u32 4788187, %v3370
    %v3372 = vand.u32 2147483647, %v3371
    %v3374 = vcvt.s32.f32 %v3367
    %v3375 = vmul.f32 %v3374, %v3372
    %v3376 = vxor.u32 %v3375, 2147483648
    %v3377 = vsel %vm3256, %v3376, %v3375
    %v3378 = vsub.s32 4, %v3354
    %v3379 = vsel %vm3256, %v3378, %v3354
    %v3380 = vsel %vm3255, %v296, %v3377
    %v3381 = vsel %vm3255, 0, %v3379
    %v3382 = vmul.f32 %v3380, %v3380
    %v3383 = vmul.f32 %v3382, -0.001358992
    %v3384 = vadd.f32 %v3383, 0.041655596
    %v3385 = vmul.f32 %v3382, %v3384
    %v3386 = vadd.f32 %v3385, -0.4999988
    %v3387 = vmul.f32 %v3382, %v3386
    %v3388 = vadd.f32 1.0, %v3387
    %v3389 = vmul.f32 %v3380, %v3380
    %v3390 = vmul.f32 %v3389, -0.00019511016
    %v3391 = vadd.f32 %v3390, 0.008332121
    %v3392 = vmul.f32 %v3389, %v3391
    %v3393 = vadd.f32 %v3392, -0.16666654
    %v3394 = vmul.f32 %v3389, %v3393
    %v3395 = vadd.f32 %v3394, 1.0
    %v3396 = vmul.f32 %v3395, %v3380
    %vm3397 = vweird.f32 %v296
    %v3398 = vadd.s32 %v3381, 3
    %v3399 = vand.u32 %v3398, 3
    %vm3400 = vcmp.lt.s32.totalorder %v3399, 2
    %vm3401 = vcmp.eq.s32.totalorder %v3399, 0
    %v3402 = vxor.u32 %v3396, 2147483648
    %v3403 = vsel %vm3401, %v3388, %v3402
    %vm3404 = vcmp.eq.s32.totalorder %v3399, 2
    %v3405 = vxor.u32 %v3388, 2147483648
    %v3406 = vsel %vm3404, %v3405, %v3396
    %v3407 = vsel %vm3400, %v3403, %v3406
    %v3408 = vsel %vm3397, nan, %v3407
    %v3409 = vand.u32 2147483647, %v297
    %vm3410 = vcmp.le.f32.partialorder %v3409, 0.7853982
    %vm3411 = vcmp.lt.s32.totalorder %v297, 0
    %v3412 = vand.u32 %v297, 2139095040
    %v3413 = vshrl.u32 %v3412, 23
    %v3414 = vsub.s32 %v3413, 127
    %v3415 = vand.u32 2147483647, %v297
    %v3416 = vand.u32 %v3415, 8388607
    %v3417 = vor.u32 %v3416, 8388608
    %v3418 = vsub.s32 0, %v3417
    %v3419 = vadd.s32 %v3414, 1
    %vm3420 = vcmp.gt.s32.totalorder %v3419, 0
    %v3421 = vsel %vm3420, %v3419, 0
    %v3422 = vshrl.u32 %v3421, 5
    %v3423 = vand.u32 %v3421, 31
    %v3424 = vsub.s32 32, %v3423
    %v3425 = vshrl.u32 683565275, %v3424
    %v3426 = vshll.u32 683565275, %v3423
    %v3427 = vshrl.u32 2475754826, %v3424
    %v3428 = vor.u32 %v3426, %v3427
    %v3429 = vshll.u32 2475754826, %v3423
    %v3430 = vshrl.u32 2131351028, %v3424
    %v3431 = vor.u32 %v3429, %v3430
    %v3432 = vshll.u32 2131351028, %v3423
    %v3433 = vshrl.u32 2102212464, %v3424
    %v3434 = vor.u32 %v3432, %v3433
    %v3435 = vshll.u32 2102212464, %v3423
    %v3436 = vshrl.u32 920167782, %v3424
    %v3437 = vor.u32 %v3435, %v3436
    %v3438 = vshll.u32 920167782, %v3423
    %v3439 = vshrl.u32 1326507024, %v3424
    %v3440 = vor.u32 %v3438, %v3439
    %vm3441 = vcmp.lt.s32.totalorder %v3422, 1
    %vm3442 = vcmp.lt.s32.totalorder %v3422, 2
    %vm3443 = vcmp.lt.s32.totalorder %v3422, 3
    %vm3444 = vcmp.lt.s32.totalorder %v3422, 4
    %v3445 = vsel %vm3441, %v3425, %v3428
    %v3446 = vsel %vm3444, %v3434, 2102212464
    %v3447 = vsel %vm3443, %v3431, %v3446
    %v3448 = vsel %vm3442, %v3445, %v3447
    %v3449 = vsel %vm3441, %v3428, %v3431
    %v3450 = vsel %vm3444, %v3437, 920167782
    %v3451 = vsel %vm3443, %v3434, %v3450
    %v3452 = vsel %vm3442, %v3449, %v3451
    %v3453 = vsel %vm3441, %v3431, %v3434
    %v3454 = vsel %vm3444, %v3440, 1326507024
    %v3455 = vsel %vm3443, %v3437, %v3454
    %v3456 = vsel %vm3442, %v3453, %v3455
    %v3457 = vshll.u32 %v3417, 8
    %v3458 = vand.u32 %v3457, 65535
    %v3459 = vshrl.u32 %v3457, 16
    %v3460 = vand.u32 %v3456, 65535
    %v3461 = vshrl.u32 %v3456, 16
    %v3462 = vmul.u32 %v3458, %v3460
    %v3463 = vmul.u32 %v3458, %v3461
    %v3464 = vmul.u32 %v3459, %v3460
    %v3465 = vmul.u32 %v3459, %v3461
    %v3466 = vshll.u32 %v3463, 16
    %v3467 = vshrl.u32 %v3463, 16
    %v3468 = vshll.u32 %v3464, 16
    %v3469 = vshrl.u32 %v3464, 16
    %vm3470 = vc.u32 %v3462, %v3466
    %v3471 = vsel %vm3470, 1, 0
    %v3472 = vadd.s32 %v3462, %v3466
    %v3473 = vadd.s32 %v3465, %v3471
    %vm3474 = vc.u32 %v3472, %v3468
    %v3475 = vsel %vm3474, 1, 0
    %v3476 = vadd.s32 %v3472, %v3468
    %v3477 = vadd.s32 %v3473, %v3475
    %v3478 = vadd.s32 %v3477, %v3467
    %v3479 = vadd.s32 %v3478, %v3469
    %v3480 = vand.u32 %v3457, 65535
    %v3481 = vshrl.u32 %v3457, 16
    %v3482 = vand.u32 %v3452, 65535
    %v3483 = vshrl.u32 %v3452, 16
    %v3484 = vmul.u32 %v3480, %v3482
    %v3485 = vmul.u32 %v3480, %v3483
    %v3486 = vmul.u32 %v3481, %v3482
    %v3487 = vmul.u32 %v3481, %v3483
    %v3488 = vshll.u32 %v3485, 16
    %v3489 = vshrl.u32 %v3485, 16
    %v3490 = vshll.u32 %v3486, 16
    %v3491 = vshrl.u32 %v3486, 16
    %vm3492 = vc.u32 %v3484, %v3488
    %v3493 = vsel %vm3492, 1, 0
    %v3494 = vadd.s32 %v3484, %v3488
    %v3495 = vadd.s32 %v3487, %v3493
    %vm3496 = vc.u32 %v3494, %v3490
    %v3497 = vsel %vm3496, 1, 0
    %v3498 = vadd.s32 %v3494, %v3490
    %v3499 = vadd.s32 %v3495, %v3497
    %v3500 = vadd.s32 %v3499, %v3489
    %v3501 = vadd.s32 %v3500, %v3491
    %v3502 = vmul.u32 %v3457, %v3448
    %v3503 = vadd.s32 %v3479, %v3498
    %vm3504 = vc.u32 %v3479, %v3498
    %v3505 = vadd.s32 %v3501, 1
    %v3506 = vsel %vm3504, %v3505, %v3501
    %v3507 = vadd.s32 %v3502, %v3506
    %v3508 = vadd.s32 %v3507, 536870912
    %v3509 = vshrl.u32 %v3508, 30
    %v3510 = vshll.u32 %v3509, 30
    %v3511 = vsub.s32 %v3507, %v3510
    %vm3512 = vcmp.lt.s32.totalorder %v3511, 0
    %v3513 = vsub.s32 0, %v3511
    %v3514 = vsel %vm3512, %v3513, %v3511
    %v3515 = vclz %v3514
    %v3516 = vsub.s32 %v3515, 2
    %vm3517 = vcmp.gt.s32.totalorder 0, %v3516
    %v3518 = vsel %vm3517, 0, %v3516
    %v3519 = vsub.s32 32, %v3518
    %v3520 = vshll.u32 %v3511, %v3518
    %v3521 = vshrl.u32 %v3503, %v3519
    %v3522 = vor.u32 %v3520, %v3521
    %v3523 = vsub.s32 4294967266, %v3518
    %v3524 = vadd.s32 %v3523, 127
    %v3525 = vshll.u32 %v3524, 23
    %v3526 = vor.u32 4788187, %v3525
    %v3527 = vand.u32 2147483647, %v3526
    %v3529 = vcvt.s32.f32 %v3522
    %v3530 = vmul.f32 %v3529, %v3527
    %v3531 = vxor.u32 %v3530, 2147483648
    %v3532 = vsel %vm3411, %v3531, %v3530
    %v3533 = vsub.s32 4, %v3509
    %v3534 = vsel %vm3411, %v3533, %v3509
    %v3535 = vsel %vm3410, %v297, %v3532
    %v3536 = vsel %vm3410, 0, %v3534
    %v3537 = vmul.f32 %v3535, %v3535
    %v3538 = vmul.f32 %v3537, -0.001358992
    %v3539 = vadd.f32 %v3538, 0.041655596
    %v3540 = vmul.f32 %v3537, %v3539
    %v3541 = vadd.f32 %v3540, -0.4999988
    %v3542 = vmul.f32 %v3537, %v3541
    %v3543 = vadd.f32 1.0, %v3542
    %v3544 = vmul.f32 %v3535, %v3535
    %v3545 = vmul.f32 %v3544, -0.00019511016
    %v3546 = vadd.f32 %v3545, 0.008332121
    %v3547 = vmul.f32 %v3544, %v3546
    %v3548 = vadd.f32 %v3547, -0.16666654
    %v3549 = vmul.f32 %v3544, %v3548
    %v3550 = vadd.f32 %v3549, 1.0
    %v3551 = vmul.f32 %v3550, %v3535
    %vm3552 = vweird.f32 %v297
    %v3553 = vadd.s32 %v3536, 3
    %v3554 = vand.u32 %v3553, 3
    %vm3555 = vcmp.lt.s32.totalorder %v3554, 2
    %vm3556 = vcmp.eq.s32.totalorder %v3554, 0
    %v3557 = vxor.u32 %v3551, 2147483648
    %v3558 = vsel %vm3556, %v3543, %v3557
    %vm3559 = vcmp.eq.s32.totalorder %v3554, 2
    %v3560 = vxor.u32 %v3543, 2147483648
    %v3561 = vsel %vm3559, %v3560, %v3551
    %v3562 = vsel %vm3555, %v3558, %v3561
    %v3563 = vsel %vm3552, nan, %v3562
    %v3564 = vand.u32 2147483647, %v298
    %vm3565 = vcmp.le.f32.partialorder %v3564, 0.7853982
    %vm3566 = vcmp.lt.s32.totalorder %v298, 0
    %v3567 = vand.u32 %v298, 2139095040
    %v3568 = vshrl.u32 %v3567, 23
    %v3569 = vsub.s32 %v3568, 127
    %v3570 = vand.u32 2147483647, %v298
    %v3571 = vand.u32 %v3570, 8388607
    %v3572 = vor.u32 %v3571, 8388608
    %v3573 = vsub.s32 0, %v3572
    %v3574 = vadd.s32 %v3569, 1
    %vm3575 = vcmp.gt.s32.totalorder %v3574, 0
    %v3576 = vsel %vm3575, %v3574, 0
    %v3577 = vshrl.u32 %v3576, 5
    %v3578 = vand.u32 %v3576, 31
    %v3579 = vsub.s32 32, %v3578
    %v3580 = vshrl.u32 683565275, %v3579
    %v3581 = vshll.u32 683565275, %v3578
    %v3582 = vshrl.u32 2475754826, %v3579
    %v3583 = vor.u32 %v3581, %v3582
    %v3584 = vshll.u32 2475754826, %v3578
    %v3585 = vshrl.u32 2131351028, %v3579
    %v3586 = vor.u32 %v3584, %v3585
    %v3587 = vshll.u32 2131351028, %v3578
    %v3588 = vshrl.u32 2102212464, %v3579
    %v3589 = vor.u32 %v3587, %v3588
    %v3590 = vshll.u32 2102212464, %v3578
    %v3591 = vshrl.u32 920167782, %v3579
    %v3592 = vor.u32 %v3590, %v3591
    %v3593 = vshll.u32 920167782, %v3578
    %v3594 = vshrl.u32 1326507024, %v3579
    %v3595 = vor.u32 %v3593, %v3594
    %vm3596 = vcmp.lt.s32.totalorder %v3577, 1
    %vm3597 = vcmp.lt.s32.totalorder %v3577, 2
    %vm3598 = vcmp.lt.s32.totalorder %v3577, 3
    %vm3599 = vcmp.lt.s32.totalorder %v3577, 4
    %v3600 = vsel %vm3596, %v3580, %v3583
    %v3601 = vsel %vm3599, %v3589, 2102212464
    %v3602 = vsel %vm3598, %v3586, %v3601
    %v3603 = vsel %vm3597, %v3600, %v3602
    %v3604 = vsel %vm3596, %v3583, %v3586
    %v3605 = vsel %vm3599, %v3592, 920167782
    %v3606 = vsel %vm3598, %v3589, %v3605
    %v3607 = vsel %vm3597, %v3604, %v3606
    %v3608 = vsel %vm3596, %v3586, %v3589
    %v3609 = vsel %vm3599, %v3595, 1326507024
    %v3610 = vsel %vm3598, %v3592, %v3609
    %v3611 = vsel %vm3597, %v3608, %v3610
    %v3612 = vshll.u32 %v3572, 8
    %v3613 = vand.u32 %v3612, 65535
    %v3614 = vshrl.u32 %v3612, 16
    %v3615 = vand.u32 %v3611, 65535
    %v3616 = vshrl.u32 %v3611, 16
    %v3617 = vmul.u32 %v3613, %v3615
    %v3618 = vmul.u32 %v3613, %v3616
    %v3619 = vmul.u32 %v3614, %v3615
    %v3620 = vmul.u32 %v3614, %v3616
    %v3621 = vshll.u32 %v3618, 16
    %v3622 = vshrl.u32 %v3618, 16
    %v3623 = vshll.u32 %v3619, 16
    %v3624 = vshrl.u32 %v3619, 16
    %vm3625 = vc.u32 %v3617, %v3621
    %v3626 = vsel %vm3625, 1, 0
    %v3627 = vadd.s32 %v3617, %v3621
    %v3628 = vadd.s32 %v3620, %v3626
    %vm3629 = vc.u32 %v3627, %v3623
    %v3630 = vsel %vm3629, 1, 0
    %v3631 = vadd.s32 %v3627, %v3623
    %v3632 = vadd.s32 %v3628, %v3630
    %v3633 = vadd.s32 %v3632, %v3622
    %v3634 = vadd.s32 %v3633, %v3624
    %v3635 = vand.u32 %v3612, 65535
    %v3636 = vshrl.u32 %v3612, 16
    %v3637 = vand.u32 %v3607, 65535
    %v3638 = vshrl.u32 %v3607, 16
    %v3639 = vmul.u32 %v3635, %v3637
    %v3640 = vmul.u32 %v3635, %v3638
    %v3641 = vmul.u32 %v3636, %v3637
    %v3642 = vmul.u32 %v3636, %v3638
    %v3643 = vshll.u32 %v3640, 16
    %v3644 = vshrl.u32 %v3640, 16
    %v3645 = vshll.u32 %v3641, 16
    %v3646 = vshrl.u32 %v3641, 16
    %vm3647 = vc.u32 %v3639, %v3643
    %v3648 = vsel %vm3647, 1, 0
    %v3649 = vadd.s32 %v3639, %v3643
    %v3650 = vadd.s32 %v3642, %v3648
    %vm3651 = vc.u32 %v3649, %v3645
    %v3652 = vsel %vm3651, 1, 0
    %v3653 = vadd.s32 %v3649, %v3645
    %v3654 = vadd.s32 %v3650, %v3652
    %v3655 = vadd.s32 %v3654, %v3644
    %v3656 = vadd.s32 %v3655, %v3646
    %v3657 = vmul.u32 %v3612, %v3603
    %v3658 = vadd.s32 %v3634, %v3653
    %vm3659 = vc.u32 %v3634, %v3653
    %v3660 = vadd.s32 %v3656, 1
    %v3661 = vsel %vm3659, %v3660, %v3656
    %v3662 = vadd.s32 %v3657, %v3661
    %v3663 = vadd.s32 %v3662, 536870912
    %v3664 = vshrl.u32 %v3663, 30
    %v3665 = vshll.u32 %v3664, 30
    %v3666 = vsub.s32 %v3662, %v3665
    %vm3667 = vcmp.lt.s32.totalorder %v3666, 0
    %v3668 = vsub.s32 0, %v3666
    %v3669 = vsel %vm3667, %v3668, %v3666
    %v3670 = vclz %v3669
    %v3671 = vsub.s32 %v3670, 2
    %vm3672 = vcmp.gt.s32.totalorder 0, %v3671
    %v3673 = vsel %vm3672, 0, %v3671
    %v3674 = vsub.s32 32, %v3673
    %v3675 = vshll.u32 %v3666, %v3673
    %v3676 = vshrl.u32 %v3658, %v3674
    %v3677 = vor.u32 %v3675, %v3676
    %v3678 = vsub.s32 4294967266, %v3673
    %v3679 = vadd.s32 %v3678, 127
    %v3680 = vshll.u32 %v3679, 23
    %v3681 = vor.u32 4788187, %v3680
    %v3682 = vand.u32 2147483647, %v3681
    %v3684 = vcvt.s32.f32 %v3677
    %v3685 = vmul.f32 %v3684, %v3682
    %v3686 = vxor.u32 %v3685, 2147483648
    %v3687 = vsel %vm3566, %v3686, %v3685
    %v3688 = vsub.s32 4, %v3664
    %v3689 = vsel %vm3566, %v3688, %v3664
    %v3690 = vsel %vm3565, %v298, %v3687
    %v3691 = vsel %vm3565, 0, %v3689
    %v3692 = vmul.f32 %v3690, %v3690
    %v3693 = vmul.f32 %v3692, -0.001358992
    %v3694 = vadd.f32 %v3693, 0.041655596
    %v3695 = vmul.f32 %v3692, %v3694
    %v3696 = vadd.f32 %v3695, -0.4999988
    %v3697 = vmul.f32 %v3692, %v3696
    %v3698 = vadd.f32 1.0, %v3697
    %v3699 = vmul.f32 %v3690, %v3690
    %v3700 = vmul.f32 %v3699, -0.00019511016
    %v3701 = vadd.f32 %v3700, 0.008332121
    %v3702 = vmul.f32 %v3699, %v3701
    %v3703 = vadd.f32 %v3702, -0.16666654
    %v3704 = vmul.f32 %v3699, %v3703
    %v3705 = vadd.f32 %v3704, 1.0
    %v3706 = vmul.f32 %v3705, %v3690
    %vm3707 = vweird.f32 %v298
    %v3708 = vadd.s32 %v3691, 3
    %v3709 = vand.u32 %v3708, 3
    %vm3710 = vcmp.lt.s32.totalorder %v3709, 2
    %vm3711 = vcmp.eq.s32.totalorder %v3709, 0
    %v3712 = vxor.u32 %v3706, 2147483648
    %v3713 = vsel %vm3711, %v3698, %v3712
    %vm3714 = vcmp.eq.s32.totalorder %v3709, 2
    %v3715 = vxor.u32 %v3698, 2147483648
    %v3716 = vsel %vm3714, %v3715, %v3706
    %v3717 = vsel %vm3710, %v3713, %v3716
    %v3718 = vsel %vm3707, nan, %v3717
    %v3719 = vand.u32 2147483647, %v299
    %vm3720 = vcmp.le.f32.partialorder %v3719, 0.7853982
    %vm3721 = vcmp.lt.s32.totalorder %v299, 0
    %v3722 = vand.u32 %v299, 2139095040
    %v3723 = vshrl.u32 %v3722, 23
    %v3724 = vsub.s32 %v3723, 127
    %v3725 = vand.u32 2147483647, %v299
    %v3726 = vand.u32 %v3725, 8388607
    %v3727 = vor.u32 %v3726, 8388608
    %v3728 = vsub.s32 0, %v3727
    %v3729 = vadd.s32 %v3724, 1
    %vm3730 = vcmp.gt.s32.totalorder %v3729, 0
    %v3731 = vsel %vm3730, %v3729, 0
    %v3732 = vshrl.u32 %v3731, 5
    %v3733 = vand.u32 %v3731, 31
    %v3734 = vsub.s32 32, %v3733
    %v3735 = vshrl.u32 683565275, %v3734
    %v3736 = vshll.u32 683565275, %v3733
    %v3737 = vshrl.u32 2475754826, %v3734
    %v3738 = vor.u32 %v3736, %v3737
    %v3739 = vshll.u32 2475754826, %v3733
    %v3740 = vshrl.u32 2131351028, %v3734
    %v3741 = vor.u32 %v3739, %v3740
    %v3742 = vshll.u32 2131351028, %v3733
    %v3743 = vshrl.u32 2102212464, %v3734
    %v3744 = vor.u32 %v3742, %v3743
    %v3745 = vshll.u32 2102212464, %v3733
    %v3746 = vshrl.u32 920167782, %v3734
    %v3747 = vor.u32 %v3745, %v3746
    %v3748 = vshll.u32 920167782, %v3733
    %v3749 = vshrl.u32 1326507024, %v3734
    %v3750 = vor.u32 %v3748, %v3749
    %vm3751 = vcmp.lt.s32.totalorder %v3732, 1
    %vm3752 = vcmp.lt.s32.totalorder %v3732, 2
    %vm3753 = vcmp.lt.s32.totalorder %v3732, 3
    %vm3754 = vcmp.lt.s32.totalorder %v3732, 4
    %v3755 = vsel %vm3751, %v3735, %v3738
    %v3756 = vsel %vm3754, %v3744, 2102212464
    %v3757 = vsel %vm3753, %v3741, %v3756
    %v3758 = vsel %vm3752, %v3755, %v3757
    %v3759 = vsel %vm3751, %v3738, %v3741
    %v3760 = vsel %vm3754, %v3747, 920167782
    %v3761 = vsel %vm3753, %v3744, %v3760
    %v3762 = vsel %vm3752, %v3759, %v3761
    %v3763 = vsel %vm3751, %v3741, %v3744
    %v3764 = vsel %vm3754, %v3750, 1326507024
    %v3765 = vsel %vm3753, %v3747, %v3764
    %v3766 = vsel %vm3752, %v3763, %v3765
    %v3767 = vshll.u32 %v3727, 8
    %v3768 = vand.u32 %v3767, 65535
    %v3769 = vshrl.u32 %v3767, 16
    %v3770 = vand.u32 %v3766, 65535
    %v3771 = vshrl.u32 %v3766, 16
    %v3772 = vmul.u32 %v3768, %v3770
    %v3773 = vmul.u32 %v3768, %v3771
    %v3774 = vmul.u32 %v3769, %v3770
    %v3775 = vmul.u32 %v3769, %v3771
    %v3776 = vshll.u32 %v3773, 16
    %v3777 = vshrl.u32 %v3773, 16
    %v3778 = vshll.u32 %v3774, 16
    %v3779 = vshrl.u32 %v3774, 16
    %vm3780 = vc.u32 %v3772, %v3776
    %v3781 = vsel %vm3780, 1, 0
    %v3782 = vadd.s32 %v3772, %v3776
    %v3783 = vadd.s32 %v3775, %v3781
    %vm3784 = vc.u32 %v3782, %v3778
    %v3785 = vsel %vm3784, 1, 0
    %v3786 = vadd.s32 %v3782, %v3778
    %v3787 = vadd.s32 %v3783, %v3785
    %v3788 = vadd.s32 %v3787, %v3777
    %v3789 = vadd.s32 %v3788, %v3779
    %v3790 = vand.u32 %v3767, 65535
    %v3791 = vshrl.u32 %v3767, 16
    %v3792 = vand.u32 %v3762, 65535
    %v3793 = vshrl.u32 %v3762, 16
    %v3794 = vmul.u32 %v3790, %v3792
    %v3795 = vmul.u32 %v3790, %v3793
    %v3796 = vmul.u32 %v3791, %v3792
    %v3797 = vmul.u32 %v3791, %v3793
    %v3798 = vshll.u32 %v3795, 16
    %v3799 = vshrl.u32 %v3795, 16
    %v3800 = vshll.u32 %v3796, 16
    %v3801 = vshrl.u32 %v3796, 16
    %vm3802 = vc.u32 %v3794, %v3798
    %v3803 = vsel %vm3802, 1, 0
    %v3804 = vadd.s32 %v3794, %v3798
    %v3805 = vadd.s32 %v3797, %v3803
    %vm3806 = vc.u32 %v3804, %v3800
    %v3807 = vsel %vm3806, 1, 0
    %v3808 = vadd.s32 %v3804, %v3800
    %v3809 = vadd.s32 %v3805, %v3807
    %v3810 = vadd.s32 %v3809, %v3799
    %v3811 = vadd.s32 %v3810, %v3801
    %v3812 = vmul.u32 %v3767, %v3758
    %v3813 = vadd.s32 %v3789, %v3808
    %vm3814 = vc.u32 %v3789, %v3808
    %v3815 = vadd.s32 %v3811, 1
    %v3816 = vsel %vm3814, %v3815, %v3811
    %v3817 = vadd.s32 %v3812, %v3816
    %v3818 = vadd.s32 %v3817, 536870912
    %v3819 = vshrl.u32 %v3818, 30
    %v3820 = vshll.u32 %v3819, 30
    %v3821 = vsub.s32 %v3817, %v3820
    %vm3822 = vcmp.lt.s32.totalorder %v3821, 0
    %v3823 = vsub.s32 0, %v3821
    %v3824 = vsel %vm3822, %v3823, %v3821
    %v3825 = vclz %v3824
    %v3826 = vsub.s32 %v3825, 2
    %vm3827 = vcmp.gt.s32.totalorder 0, %v3826
    %v3828 = vsel %vm3827, 0, %v3826
    %v3829 = vsub.s32 32, %v3828
    %v3830 = vshll.u32 %v3821, %v3828
    %v3831 = vshrl.u32 %v3813, %v3829
    %v3832 = vor.u32 %v3830, %v3831
    %v3833 = vsub.s32 4294967266, %v3828
    %v3834 = vadd.s32 %v3833, 127
    %v3835 = vshll.u32 %v3834, 23
    %v3836 = vor.u32 4788187, %v3835
    %v3837 = vand.u32 2147483647, %v3836
    %v3839 = vcvt.s32.f32 %v3832
    %v3840 = vmul.f32 %v3839, %v3837
    %v3841 = vxor.u32 %v3840, 2147483648
    %v3842 = vsel %vm3721, %v3841, %v3840
    %v3843 = vsub.s32 4, %v3819
    %v3844 = vsel %vm3721, %v3843, %v3819
    %v3845 = vsel %vm3720, %v299, %v3842
    %v3846 = vsel %vm3720, 0, %v3844
    %v3847 = vmul.f32 %v3845, %v3845
    %v3848 = vmul.f32 %v3847, -0.001358992
    %v3849 = vadd.f32 %v3848, 0.041655596
    %v3850 = vmul.f32 %v3847, %v3849
    %v3851 = vadd.f32 %v3850, -0.4999988
    %v3852 = vmul.f32 %v3847, %v3851
    %v3853 = vadd.f32 1.0, %v3852
    %v3854 = vmul.f32 %v3845, %v3845
    %v3855 = vmul.f32 %v3854, -0.00019511016
    %v3856 = vadd.f32 %v3855, 0.008332121
    %v3857 = vmul.f32 %v3854, %v3856
    %v3858 = vadd.f32 %v3857, -0.16666654
    %v3859 = vmul.f32 %v3854, %v3858
    %v3860 = vadd.f32 %v3859, 1.0
    %v3861 = vmul.f32 %v3860, %v3845
    %vm3862 = vweird.f32 %v299
    %v3863 = vadd.s32 %v3846, 3
    %v3864 = vand.u32 %v3863, 3
    %vm3865 = vcmp.lt.s32.totalorder %v3864, 2
    %vm3866 = vcmp.eq.s32.totalorder %v3864, 0
    %v3867 = vxor.u32 %v3861, 2147483648
    %v3868 = vsel %vm3866, %v3853, %v3867
    %vm3869 = vcmp.eq.s32.totalorder %v3864, 2
    %v3870 = vxor.u32 %v3853, 2147483648
    %v3871 = vsel %vm3869, %v3870, %v3861
    %v3872 = vsel %vm3865, %v3868, %v3871
    %v3873 = vsel %vm3862, nan, %v3872
    %v3874 = vand.u32 2147483647, %v300
    %vm3875 = vcmp.le.f32.partialorder %v3874, 0.7853982
    %vm3876 = vcmp.lt.s32.totalorder %v300, 0
    %v3877 = vand.u32 %v300, 2139095040
    %v3878 = vshrl.u32 %v3877, 23
    %v3879 = vsub.s32 %v3878, 127
    %v3880 = vand.u32 2147483647, %v300
    %v3881 = vand.u32 %v3880, 8388607
    %v3882 = vor.u32 %v3881, 8388608
    %v3883 = vsub.s32 0, %v3882
    %v3884 = vadd.s32 %v3879, 1
    %vm3885 = vcmp.gt.s32.totalorder %v3884, 0
    %v3886 = vsel %vm3885, %v3884, 0
    %v3887 = vshrl.u32 %v3886, 5
    %v3888 = vand.u32 %v3886, 31
    %v3889 = vsub.s32 32, %v3888
    %v3890 = vshrl.u32 683565275, %v3889
    %v3891 = vshll.u32 683565275, %v3888
    %v3892 = vshrl.u32 2475754826, %v3889
    %v3893 = vor.u32 %v3891, %v3892
    %v3894 = vshll.u32 2475754826, %v3888
    %v3895 = vshrl.u32 2131351028, %v3889
    %v3896 = vor.u32 %v3894, %v3895
    %v3897 = vshll.u32 2131351028, %v3888
    %v3898 = vshrl.u32 2102212464, %v3889
    %v3899 = vor.u32 %v3897, %v3898
    %v3900 = vshll.u32 2102212464, %v3888
    %v3901 = vshrl.u32 920167782, %v3889
    %v3902 = vor.u32 %v3900, %v3901
    %v3903 = vshll.u32 920167782, %v3888
    %v3904 = vshrl.u32 1326507024, %v3889
    %v3905 = vor.u32 %v3903, %v3904
    %vm3906 = vcmp.lt.s32.totalorder %v3887, 1
    %vm3907 = vcmp.lt.s32.totalorder %v3887, 2
    %vm3908 = vcmp.lt.s32.totalorder %v3887, 3
    %vm3909 = vcmp.lt.s32.totalorder %v3887, 4
    %v3910 = vsel %vm3906, %v3890, %v3893
    %v3911 = vsel %vm3909, %v3899, 2102212464
    %v3912 = vsel %vm3908, %v3896, %v3911
    %v3913 = vsel %vm3907, %v3910, %v3912
    %v3914 = vsel %vm3906, %v3893, %v3896
    %v3915 = vsel %vm3909, %v3902, 920167782
    %v3916 = vsel %vm3908, %v3899, %v3915
    %v3917 = vsel %vm3907, %v3914, %v3916
    %v3918 = vsel %vm3906, %v3896, %v3899
    %v3919 = vsel %vm3909, %v3905, 1326507024
    %v3920 = vsel %vm3908, %v3902, %v3919
    %v3921 = vsel %vm3907, %v3918, %v3920
    %v3922 = vshll.u32 %v3882, 8
    %v3923 = vand.u32 %v3922, 65535
    %v3924 = vshrl.u32 %v3922, 16
    %v3925 = vand.u32 %v3921, 65535
    %v3926 = vshrl.u32 %v3921, 16
    %v3927 = vmul.u32 %v3923, %v3925
    %v3928 = vmul.u32 %v3923, %v3926
    %v3929 = vmul.u32 %v3924, %v3925
    %v3930 = vmul.u32 %v3924, %v3926
    %v3931 = vshll.u32 %v3928, 16
    %v3932 = vshrl.u32 %v3928, 16
    %v3933 = vshll.u32 %v3929, 16
    %v3934 = vshrl.u32 %v3929, 16
    %vm3935 = vc.u32 %v3927, %v3931
    %v3936 = vsel %vm3935, 1, 0
    %v3937 = vadd.s32 %v3927, %v3931
    %v3938 = vadd.s32 %v3930, %v3936
    %vm3939 = vc.u32 %v3937, %v3933
    %v3940 = vsel %vm3939, 1, 0
    %v3941 = vadd.s32 %v3937, %v3933
    %v3942 = vadd.s32 %v3938, %v3940
    %v3943 = vadd.s32 %v3942, %v3932
    %v3944 = vadd.s32 %v3943, %v3934
    %v3945 = vand.u32 %v3922, 65535
    %v3946 = vshrl.u32 %v3922, 16
    %v3947 = vand.u32 %v3917, 65535
    %v3948 = vshrl.u32 %v3917, 16
    %v3949 = vmul.u32 %v3945, %v3947
    %v3950 = vmul.u32 %v3945, %v3948
    %v3951 = vmul.u32 %v3946, %v3947
    %v3952 = vmul.u32 %v3946, %v3948
    %v3953 = vshll.u32 %v3950, 16
    %v3954 = vshrl.u32 %v3950, 16
    %v3955 = vshll.u32 %v3951, 16
    %v3956 = vshrl.u32 %v3951, 16
    %vm3957 = vc.u32 %v3949, %v3953
    %v3958 = vsel %vm3957, 1, 0
    %v3959 = vadd.s32 %v3949, %v3953
    %v3960 = vadd.s32 %v3952, %v3958
    %vm3961 = vc.u32 %v3959, %v3955
    %v3962 = vsel %vm3961, 1, 0
    %v3963 = vadd.s32 %v3959, %v3955
    %v3964 = vadd.s32 %v3960, %v3962
    %v3965 = vadd.s32 %v3964, %v3954
    %v3966 = vadd.s32 %v3965, %v3956
    %v3967 = vmul.u32 %v3922, %v3913
    %v3968 = vadd.s32 %v3944, %v3963
    %vm3969 = vc.u32 %v3944, %v3963
    %v3970 = vadd.s32 %v3966, 1
    %v3971 = vsel %vm3969, %v3970, %v3966
    %v3972 = vadd.s32 %v3967, %v3971
    %v3973 = vadd.s32 %v3972, 536870912
    %v3974 = vshrl.u32 %v3973, 30
    %v3975 = vshll.u32 %v3974, 30
    %v3976 = vsub.s32 %v3972, %v3975
    %vm3977 = vcmp.lt.s32.totalorder %v3976, 0
    %v3978 = vsub.s32 0, %v3976
    %v3979 = vsel %vm3977, %v3978, %v3976
    %v3980 = vclz %v3979
    %v3981 = vsub.s32 %v3980, 2
    %vm3982 = vcmp.gt.s32.totalorder 0, %v3981
    %v3983 = vsel %vm3982, 0, %v3981
    %v3984 = vsub.s32 32, %v3983
    %v3985 = vshll.u32 %v3976, %v3983
    %v3986 = vshrl.u32 %v3968, %v3984
    %v3987 = vor.u32 %v3985, %v3986
    %v3988 = vsub.s32 4294967266, %v3983
    %v3989 = vadd.s32 %v3988, 127
    %v3990 = vshll.u32 %v3989, 23
    %v3991 = vor.u32 4788187, %v3990
    %v3992 = vand.u32 2147483647, %v3991
    %v3994 = vcvt.s32.f32 %v3987
    %v3995 = vmul.f32 %v3994, %v3992
    %v3996 = vxor.u32 %v3995, 2147483648
    %v3997 = vsel %vm3876, %v3996, %v3995
    %v3998 = vsub.s32 4, %v3974
    %v3999 = vsel %vm3876, %v3998, %v3974
    %v4000 = vsel %vm3875, %v300, %v3997
    %v4001 = vsel %vm3875, 0, %v3999
    %v4002 = vmul.f32 %v4000, %v4000
    %v4003 = vmul.f32 %v4002, -0.001358992
    %v4004 = vadd.f32 %v4003, 0.041655596
    %v4005 = vmul.f32 %v4002, %v4004
    %v4006 = vadd.f32 %v4005, -0.4999988
    %v4007 = vmul.f32 %v4002, %v4006
    %v4008 = vadd.f32 1.0, %v4007
    %v4009 = vmul.f32 %v4000, %v4000
    %v4010 = vmul.f32 %v4009, -0.00019511016
    %v4011 = vadd.f32 %v4010, 0.008332121
    %v4012 = vmul.f32 %v4009, %v4011
    %v4013 = vadd.f32 %v4012, -0.16666654
    %v4014 = vmul.f32 %v4009, %v4013
    %v4015 = vadd.f32 %v4014, 1.0
    %v4016 = vmul.f32 %v4015, %v4000
    %vm4017 = vweird.f32 %v300
    %v4018 = vadd.s32 %v4001, 3
    %v4019 = vand.u32 %v4018, 3
    %vm4020 = vcmp.lt.s32.totalorder %v4019, 2
    %vm4021 = vcmp.eq.s32.totalorder %v4019, 0
    %v4022 = vxor.u32 %v4016, 2147483648
    %v4023 = vsel %vm4021, %v4008, %v4022
    %vm4024 = vcmp.eq.s32.totalorder %v4019, 2
    %v4025 = vxor.u32 %v4008, 2147483648
    %v4026 = vsel %vm4024, %v4025, %v4016
    %v4027 = vsel %vm4020, %v4023, %v4026
    %v4028 = vsel %vm4017, nan, %v4027
    %v4029 = vand.u32 2147483647, %v301
    %vm4030 = vcmp.le.f32.partialorder %v4029, 0.7853982
    %vm4031 = vcmp.lt.s32.totalorder %v301, 0
    %v4032 = vand.u32 %v301, 2139095040
    %v4033 = vshrl.u32 %v4032, 23
    %v4034 = vsub.s32 %v4033, 127
    %v4035 = vand.u32 2147483647, %v301
    %v4036 = vand.u32 %v4035, 8388607
    %v4037 = vor.u32 %v4036, 8388608
    %v4038 = vsub.s32 0, %v4037
    %v4039 = vadd.s32 %v4034, 1
    %vm4040 = vcmp.gt.s32.totalorder %v4039, 0
    %v4041 = vsel %vm4040, %v4039, 0
    %v4042 = vshrl.u32 %v4041, 5
    %v4043 = vand.u32 %v4041, 31
    %v4044 = vsub.s32 32, %v4043
    %v4045 = vshrl.u32 683565275, %v4044
    %v4046 = vshll.u32 683565275, %v4043
    %v4047 = vshrl.u32 2475754826, %v4044
    %v4048 = vor.u32 %v4046, %v4047
    %v4049 = vshll.u32 2475754826, %v4043
    %v4050 = vshrl.u32 2131351028, %v4044
    %v4051 = vor.u32 %v4049, %v4050
    %v4052 = vshll.u32 2131351028, %v4043
    %v4053 = vshrl.u32 2102212464, %v4044
    %v4054 = vor.u32 %v4052, %v4053
    %v4055 = vshll.u32 2102212464, %v4043
    %v4056 = vshrl.u32 920167782, %v4044
    %v4057 = vor.u32 %v4055, %v4056
    %v4058 = vshll.u32 920167782, %v4043
    %v4059 = vshrl.u32 1326507024, %v4044
    %v4060 = vor.u32 %v4058, %v4059
    %vm4061 = vcmp.lt.s32.totalorder %v4042, 1
    %vm4062 = vcmp.lt.s32.totalorder %v4042, 2
    %vm4063 = vcmp.lt.s32.totalorder %v4042, 3
    %vm4064 = vcmp.lt.s32.totalorder %v4042, 4
    %v4065 = vsel %vm4061, %v4045, %v4048
    %v4066 = vsel %vm4064, %v4054, 2102212464
    %v4067 = vsel %vm4063, %v4051, %v4066
    %v4068 = vsel %vm4062, %v4065, %v4067
    %v4069 = vsel %vm4061, %v4048, %v4051
    %v4070 = vsel %vm4064, %v4057, 920167782
    %v4071 = vsel %vm4063, %v4054, %v4070
    %v4072 = vsel %vm4062, %v4069, %v4071
    %v4073 = vsel %vm4061, %v4051, %v4054
    %v4074 = vsel %vm4064, %v4060, 1326507024
    %v4075 = vsel %vm4063, %v4057, %v4074
    %v4076 = vsel %vm4062, %v4073, %v4075
    %v4077 = vshll.u32 %v4037, 8
    %v4078 = vand.u32 %v4077, 65535
    %v4079 = vshrl.u32 %v4077, 16
    %v4080 = vand.u32 %v4076, 65535
    %v4081 = vshrl.u32 %v4076, 16
    %v4082 = vmul.u32 %v4078, %v4080
    %v4083 = vmul.u32 %v4078, %v4081
    %v4084 = vmul.u32 %v4079, %v4080
    %v4085 = vmul.u32 %v4079, %v4081
    %v4086 = vshll.u32 %v4083, 16
    %v4087 = vshrl.u32 %v4083, 16
    %v4088 = vshll.u32 %v4084, 16
    %v4089 = vshrl.u32 %v4084, 16
    %vm4090 = vc.u32 %v4082, %v4086
    %v4091 = vsel %vm4090, 1, 0
    %v4092 = vadd.s32 %v4082, %v4086
    %v4093 = vadd.s32 %v4085, %v4091
    %vm4094 = vc.u32 %v4092, %v4088
    %v4095 = vsel %vm4094, 1, 0
    %v4096 = vadd.s32 %v4092, %v4088
    %v4097 = vadd.s32 %v4093, %v4095
    %v4098 = vadd.s32 %v4097, %v4087
    %v4099 = vadd.s32 %v4098, %v4089
    %v4100 = vand.u32 %v4077, 65535
    %v4101 = vshrl.u32 %v4077, 16
    %v4102 = vand.u32 %v4072, 65535
    %v4103 = vshrl.u32 %v4072, 16
    %v4104 = vmul.u32 %v4100, %v4102
    %v4105 = vmul.u32 %v4100, %v4103
    %v4106 = vmul.u32 %v4101, %v4102
    %v4107 = vmul.u32 %v4101, %v4103
    %v4108 = vshll.u32 %v4105, 16
    %v4109 = vshrl.u32 %v4105, 16
    %v4110 = vshll.u32 %v4106, 16
    %v4111 = vshrl.u32 %v4106, 16
    %vm4112 = vc.u32 %v4104, %v4108
    %v4113 = vsel %vm4112, 1, 0
    %v4114 = vadd.s32 %v4104, %v4108
    %v4115 = vadd.s32 %v4107, %v4113
    %vm4116 = vc.u32 %v4114, %v4110
    %v4117 = vsel %vm4116, 1, 0
    %v4118 = vadd.s32 %v4114, %v4110
    %v4119 = vadd.s32 %v4115, %v4117
    %v4120 = vadd.s32 %v4119, %v4109
    %v4121 = vadd.s32 %v4120, %v4111
    %v4122 = vmul.u32 %v4077, %v4068
    %v4123 = vadd.s32 %v4099, %v4118
    %vm4124 = vc.u32 %v4099, %v4118
    %v4125 = vadd.s32 %v4121, 1
    %v4126 = vsel %vm4124, %v4125, %v4121
    %v4127 = vadd.s32 %v4122, %v4126
    %v4128 = vadd.s32 %v4127, 536870912
    %v4129 = vshrl.u32 %v4128, 30
    %v4130 = vshll.u32 %v4129, 30
    %v4131 = vsub.s32 %v4127, %v4130
    %vm4132 = vcmp.lt.s32.totalorder %v4131, 0
    %v4133 = vsub.s32 0, %v4131
    %v4134 = vsel %vm4132, %v4133, %v4131
    %v4135 = vclz %v4134
    %v4136 = vsub.s32 %v4135, 2
    %vm4137 = vcmp.gt.s32.totalorder 0, %v4136
    %v4138 = vsel %vm4137, 0, %v4136
    %v4139 = vsub.s32 32, %v4138
    %v4140 = vshll.u32 %v4131, %v4138
    %v4141 = vshrl.u32 %v4123, %v4139
    %v4142 = vor.u32 %v4140, %v4141
    %v4143 = vsub.s32 4294967266, %v4138
    %v4144 = vadd.s32 %v4143, 127
    %v4145 = vshll.u32 %v4144, 23
    %v4146 = vor.u32 4788187, %v4145
    %v4147 = vand.u32 2147483647, %v4146
    %v4149 = vcvt.s32.f32 %v4142
    %v4150 = vmul.f32 %v4149, %v4147
    %v4151 = vxor.u32 %v4150, 2147483648
    %v4152 = vsel %vm4031, %v4151, %v4150
    %v4153 = vsub.s32 4, %v4129
    %v4154 = vsel %vm4031, %v4153, %v4129
    %v4155 = vsel %vm4030, %v301, %v4152
    %v4156 = vsel %vm4030, 0, %v4154
    %v4157 = vmul.f32 %v4155, %v4155
    %v4158 = vmul.f32 %v4157, -0.001358992
    %v4159 = vadd.f32 %v4158, 0.041655596
    %v4160 = vmul.f32 %v4157, %v4159
    %v4161 = vadd.f32 %v4160, -0.4999988
    %v4162 = vmul.f32 %v4157, %v4161
    %v4163 = vadd.f32 1.0, %v4162
    %v4164 = vmul.f32 %v4155, %v4155
    %v4165 = vmul.f32 %v4164, -0.00019511016
    %v4166 = vadd.f32 %v4165, 0.008332121
    %v4167 = vmul.f32 %v4164, %v4166
    %v4168 = vadd.f32 %v4167, -0.16666654
    %v4169 = vmul.f32 %v4164, %v4168
    %v4170 = vadd.f32 %v4169, 1.0
    %v4171 = vmul.f32 %v4170, %v4155
    %vm4172 = vweird.f32 %v301
    %v4173 = vadd.s32 %v4156, 3
    %v4174 = vand.u32 %v4173, 3
    %vm4175 = vcmp.lt.s32.totalorder %v4174, 2
    %vm4176 = vcmp.eq.s32.totalorder %v4174, 0
    %v4177 = vxor.u32 %v4171, 2147483648
    %v4178 = vsel %vm4176, %v4163, %v4177
    %vm4179 = vcmp.eq.s32.totalorder %v4174, 2
    %v4180 = vxor.u32 %v4163, 2147483648
    %v4181 = vsel %vm4179, %v4180, %v4171
    %v4182 = vsel %vm4175, %v4178, %v4181
    %v4183 = vsel %vm4172, nan, %v4182
    %v4184 = vand.u32 2147483647, %v302
    %vm4185 = vcmp.le.f32.partialorder %v4184, 0.7853982
    %vm4186 = vcmp.lt.s32.totalorder %v302, 0
    %v4187 = vand.u32 %v302, 2139095040
    %v4188 = vshrl.u32 %v4187, 23
    %v4189 = vsub.s32 %v4188, 127
    %v4190 = vand.u32 2147483647, %v302
    %v4191 = vand.u32 %v4190, 8388607
    %v4192 = vor.u32 %v4191, 8388608
    %v4193 = vsub.s32 0, %v4192
    %v4194 = vadd.s32 %v4189, 1
    %vm4195 = vcmp.gt.s32.totalorder %v4194, 0
    %v4196 = vsel %vm4195, %v4194, 0
    %v4197 = vshrl.u32 %v4196, 5
    %v4198 = vand.u32 %v4196, 31
    %v4199 = vsub.s32 32, %v4198
    %v4200 = vshrl.u32 683565275, %v4199
    %v4201 = vshll.u32 683565275, %v4198
    %v4202 = vshrl.u32 2475754826, %v4199
    %v4203 = vor.u32 %v4201, %v4202
    %v4204 = vshll.u32 2475754826, %v4198
    %v4205 = vshrl.u32 2131351028, %v4199
    %v4206 = vor.u32 %v4204, %v4205
    %v4207 = vshll.u32 2131351028, %v4198
    %v4208 = vshrl.u32 2102212464, %v4199
    %v4209 = vor.u32 %v4207, %v4208
    %v4210 = vshll.u32 2102212464, %v4198
    %v4211 = vshrl.u32 920167782, %v4199
    %v4212 = vor.u32 %v4210, %v4211
    %v4213 = vshll.u32 920167782, %v4198
    %v4214 = vshrl.u32 1326507024, %v4199
    %v4215 = vor.u32 %v4213, %v4214
    %vm4216 = vcmp.lt.s32.totalorder %v4197, 1
    %vm4217 = vcmp.lt.s32.totalorder %v4197, 2
    %vm4218 = vcmp.lt.s32.totalorder %v4197, 3
    %vm4219 = vcmp.lt.s32.totalorder %v4197, 4
    %v4220 = vsel %vm4216, %v4200, %v4203
    %v4221 = vsel %vm4219, %v4209, 2102212464
    %v4222 = vsel %vm4218, %v4206, %v4221
    %v4223 = vsel %vm4217, %v4220, %v4222
    %v4224 = vsel %vm4216, %v4203, %v4206
    %v4225 = vsel %vm4219, %v4212, 920167782
    %v4226 = vsel %vm4218, %v4209, %v4225
    %v4227 = vsel %vm4217, %v4224, %v4226
    %v4228 = vsel %vm4216, %v4206, %v4209
    %v4229 = vsel %vm4219, %v4215, 1326507024
    %v4230 = vsel %vm4218, %v4212, %v4229
    %v4231 = vsel %vm4217, %v4228, %v4230
    %v4232 = vshll.u32 %v4192, 8
    %v4233 = vand.u32 %v4232, 65535
    %v4234 = vshrl.u32 %v4232, 16
    %v4235 = vand.u32 %v4231, 65535
    %v4236 = vshrl.u32 %v4231, 16
    %v4237 = vmul.u32 %v4233, %v4235
    %v4238 = vmul.u32 %v4233, %v4236
    %v4239 = vmul.u32 %v4234, %v4235
    %v4240 = vmul.u32 %v4234, %v4236
    %v4241 = vshll.u32 %v4238, 16
    %v4242 = vshrl.u32 %v4238, 16
    %v4243 = vshll.u32 %v4239, 16
    %v4244 = vshrl.u32 %v4239, 16
    %vm4245 = vc.u32 %v4237, %v4241
    %v4246 = vsel %vm4245, 1, 0
    %v4247 = vadd.s32 %v4237, %v4241
    %v4248 = vadd.s32 %v4240, %v4246
    %vm4249 = vc.u32 %v4247, %v4243
    %v4250 = vsel %vm4249, 1, 0
    %v4251 = vadd.s32 %v4247, %v4243
    %v4252 = vadd.s32 %v4248, %v4250
    %v4253 = vadd.s32 %v4252, %v4242
    %v4254 = vadd.s32 %v4253, %v4244
    %v4255 = vand.u32 %v4232, 65535
    %v4256 = vshrl.u32 %v4232, 16
    %v4257 = vand.u32 %v4227, 65535
    %v4258 = vshrl.u32 %v4227, 16
    %v4259 = vmul.u32 %v4255, %v4257
    %v4260 = vmul.u32 %v4255, %v4258
    %v4261 = vmul.u32 %v4256, %v4257
    %v4262 = vmul.u32 %v4256, %v4258
    %v4263 = vshll.u32 %v4260, 16
    %v4264 = vshrl.u32 %v4260, 16
    %v4265 = vshll.u32 %v4261, 16
    %v4266 = vshrl.u32 %v4261, 16
    %vm4267 = vc.u32 %v4259, %v4263
    %v4268 = vsel %vm4267, 1, 0
    %v4269 = vadd.s32 %v4259, %v4263
    %v4270 = vadd.s32 %v4262, %v4268
    %vm4271 = vc.u32 %v4269, %v4265
    %v4272 = vsel %vm4271, 1, 0
    %v4273 = vadd.s32 %v4269, %v4265
    %v4274 = vadd.s32 %v4270, %v4272
    %v4275 = vadd.s32 %v4274, %v4264
    %v4276 = vadd.s32 %v4275, %v4266
    %v4277 = vmul.u32 %v4232, %v4223
    %v4278 = vadd.s32 %v4254, %v4273
    %vm4279 = vc.u32 %v4254, %v4273
    %v4280 = vadd.s32 %v4276, 1
    %v4281 = vsel %vm4279, %v4280, %v4276
    %v4282 = vadd.s32 %v4277, %v4281
    %v4283 = vadd.s32 %v4282, 536870912
    %v4284 = vshrl.u32 %v4283, 30
    %v4285 = vshll.u32 %v4284, 30
    %v4286 = vsub.s32 %v4282, %v4285
    %vm4287 = vcmp.lt.s32.totalorder %v4286, 0
    %v4288 = vsub.s32 0, %v4286
    %v4289 = vsel %vm4287, %v4288, %v4286
    %v4290 = vclz %v4289
    %v4291 = vsub.s32 %v4290, 2
    %vm4292 = vcmp.gt.s32.totalorder 0, %v4291
    %v4293 = vsel %vm4292, 0, %v4291
    %v4294 = vsub.s32 32, %v4293
    %v4295 = vshll.u32 %v4286, %v4293
    %v4296 = vshrl.u32 %v4278, %v4294
    %v4297 = vor.u32 %v4295, %v4296
    %v4298 = vsub.s32 4294967266, %v4293
    %v4299 = vadd.s32 %v4298, 127
    %v4300 = vshll.u32 %v4299, 23
    %v4301 = vor.u32 4788187, %v4300
    %v4302 = vand.u32 2147483647, %v4301
    %v4304 = vcvt.s32.f32 %v4297
    %v4305 = vmul.f32 %v4304, %v4302
    %v4306 = vxor.u32 %v4305, 2147483648
    %v4307 = vsel %vm4186, %v4306, %v4305
    %v4308 = vsub.s32 4, %v4284
    %v4309 = vsel %vm4186, %v4308, %v4284
    %v4310 = vsel %vm4185, %v302, %v4307
    %v4311 = vsel %vm4185, 0, %v4309
    %v4312 = vmul.f32 %v4310, %v4310
    %v4313 = vmul.f32 %v4312, -0.001358992
    %v4314 = vadd.f32 %v4313, 0.041655596
    %v4315 = vmul.f32 %v4312, %v4314
    %v4316 = vadd.f32 %v4315, -0.4999988
    %v4317 = vmul.f32 %v4312, %v4316
    %v4318 = vadd.f32 1.0, %v4317
    %v4319 = vmul.f32 %v4310, %v4310
    %v4320 = vmul.f32 %v4319, -0.00019511016
    %v4321 = vadd.f32 %v4320, 0.008332121
    %v4322 = vmul.f32 %v4319, %v4321
    %v4323 = vadd.f32 %v4322, -0.16666654
    %v4324 = vmul.f32 %v4319, %v4323
    %v4325 = vadd.f32 %v4324, 1.0
    %v4326 = vmul.f32 %v4325, %v4310
    %vm4327 = vweird.f32 %v302
    %v4328 = vadd.s32 %v4311, 3
    %v4329 = vand.u32 %v4328, 3
    %vm4330 = vcmp.lt.s32.totalorder %v4329, 2
    %vm4331 = vcmp.eq.s32.totalorder %v4329, 0
    %v4332 = vxor.u32 %v4326, 2147483648
    %v4333 = vsel %vm4331, %v4318, %v4332
    %vm4334 = vcmp.eq.s32.totalorder %v4329, 2
    %v4335 = vxor.u32 %v4318, 2147483648
    %v4336 = vsel %vm4334, %v4335, %v4326
    %v4337 = vsel %vm4330, %v4333, %v4336
    %v4338 = vsel %vm4327, nan, %v4337
    %v4339 = vand.u32 2147483647, %v303
    %vm4340 = vcmp.le.f32.partialorder %v4339, 0.7853982
    %vm4341 = vcmp.lt.s32.totalorder %v303, 0
    %v4342 = vand.u32 %v303, 2139095040
    %v4343 = vshrl.u32 %v4342, 23
    %v4344 = vsub.s32 %v4343, 127
    %v4345 = vand.u32 2147483647, %v303
    %v4346 = vand.u32 %v4345, 8388607
    %v4347 = vor.u32 %v4346, 8388608
    %v4348 = vsub.s32 0, %v4347
    %v4349 = vadd.s32 %v4344, 1
    %vm4350 = vcmp.gt.s32.totalorder %v4349, 0
    %v4351 = vsel %vm4350, %v4349, 0
    %v4352 = vshrl.u32 %v4351, 5
    %v4353 = vand.u32 %v4351, 31
    %v4354 = vsub.s32 32, %v4353
    %v4355 = vshrl.u32 683565275, %v4354
    %v4356 = vshll.u32 683565275, %v4353
    %v4357 = vshrl.u32 2475754826, %v4354
    %v4358 = vor.u32 %v4356, %v4357
    %v4359 = vshll.u32 2475754826, %v4353
    %v4360 = vshrl.u32 2131351028, %v4354
    %v4361 = vor.u32 %v4359, %v4360
    %v4362 = vshll.u32 2131351028, %v4353
    %v4363 = vshrl.u32 2102212464, %v4354
    %v4364 = vor.u32 %v4362, %v4363
    %v4365 = vshll.u32 2102212464, %v4353
    %v4366 = vshrl.u32 920167782, %v4354
    %v4367 = vor.u32 %v4365, %v4366
    %v4368 = vshll.u32 920167782, %v4353
    %v4369 = vshrl.u32 1326507024, %v4354
    %v4370 = vor.u32 %v4368, %v4369
    %vm4371 = vcmp.lt.s32.totalorder %v4352, 1
    %vm4372 = vcmp.lt.s32.totalorder %v4352, 2
    %vm4373 = vcmp.lt.s32.totalorder %v4352, 3
    %vm4374 = vcmp.lt.s32.totalorder %v4352, 4
    %v4375 = vsel %vm4371, %v4355, %v4358
    %v4376 = vsel %vm4374, %v4364, 2102212464
    %v4377 = vsel %vm4373, %v4361, %v4376
    %v4378 = vsel %vm4372, %v4375, %v4377
    %v4379 = vsel %vm4371, %v4358, %v4361
    %v4380 = vsel %vm4374, %v4367, 920167782
    %v4381 = vsel %vm4373, %v4364, %v4380
    %v4382 = vsel %vm4372, %v4379, %v4381
    %v4383 = vsel %vm4371, %v4361, %v4364
    %v4384 = vsel %vm4374, %v4370, 1326507024
    %v4385 = vsel %vm4373, %v4367, %v4384
    %v4386 = vsel %vm4372, %v4383, %v4385
    %v4387 = vshll.u32 %v4347, 8
    %v4388 = vand.u32 %v4387, 65535
    %v4389 = vshrl.u32 %v4387, 16
    %v4390 = vand.u32 %v4386, 65535
    %v4391 = vshrl.u32 %v4386, 16
    %v4392 = vmul.u32 %v4388, %v4390
    %v4393 = vmul.u32 %v4388, %v4391
    %v4394 = vmul.u32 %v4389, %v4390
    %v4395 = vmul.u32 %v4389, %v4391
    %v4396 = vshll.u32 %v4393, 16
    %v4397 = vshrl.u32 %v4393, 16
    %v4398 = vshll.u32 %v4394, 16
    %v4399 = vshrl.u32 %v4394, 16
    %vm4400 = vc.u32 %v4392, %v4396
    %v4401 = vsel %vm4400, 1, 0
    %v4402 = vadd.s32 %v4392, %v4396
    %v4403 = vadd.s32 %v4395, %v4401
    %vm4404 = vc.u32 %v4402, %v4398
    %v4405 = vsel %vm4404, 1, 0
    %v4406 = vadd.s32 %v4402, %v4398
    %v4407 = vadd.s32 %v4403, %v4405
    %v4408 = vadd.s32 %v4407, %v4397
    %v4409 = vadd.s32 %v4408, %v4399
    %v4410 = vand.u32 %v4387, 65535
    %v4411 = vshrl.u32 %v4387, 16
    %v4412 = vand.u32 %v4382, 65535
    %v4413 = vshrl.u32 %v4382, 16
    %v4414 = vmul.u32 %v4410, %v4412
    %v4415 = vmul.u32 %v4410, %v4413
    %v4416 = vmul.u32 %v4411, %v4412
    %v4417 = vmul.u32 %v4411, %v4413
    %v4418 = vshll.u32 %v4415, 16
    %v4419 = vshrl.u32 %v4415, 16
    %v4420 = vshll.u32 %v4416, 16
    %v4421 = vshrl.u32 %v4416, 16
    %vm4422 = vc.u32 %v4414, %v4418
    %v4423 = vsel %vm4422, 1, 0
    %v4424 = vadd.s32 %v4414, %v4418
    %v4425 = vadd.s32 %v4417, %v4423
    %vm4426 = vc.u32 %v4424, %v4420
    %v4427 = vsel %vm4426, 1, 0
    %v4428 = vadd.s32 %v4424, %v4420
    %v4429 = vadd.s32 %v4425, %v4427
    %v4430 = vadd.s32 %v4429, %v4419
    %v4431 = vadd.s32 %v4430, %v4421
    %v4432 = vmul.u32 %v4387, %v4378
    %v4433 = vadd.s32 %v4409, %v4428
    %vm4434 = vc.u32 %v4409, %v4428
    %v4435 = vadd.s32 %v4431, 1
    %v4436 = vsel %vm4434, %v4435, %v4431
    %v4437 = vadd.s32 %v4432, %v4436
    %v4438 = vadd.s32 %v4437, 536870912
    %v4439 = vshrl.u32 %v4438, 30
    %v4440 = vshll.u32 %v4439, 30
    %v4441 = vsub.s32 %v4437, %v4440
    %vm4442 = vcmp.lt.s32.totalorder %v4441, 0
    %v4443 = vsub.s32 0, %v4441
    %v4444 = vsel %vm4442, %v4443, %v4441
    %v4445 = vclz %v4444
    %v4446 = vsub.s32 %v4445, 2
    %vm4447 = vcmp.gt.s32.totalorder 0, %v4446
    %v4448 = vsel %vm4447, 0, %v4446
    %v4449 = vsub.s32 32, %v4448
    %v4450 = vshll.u32 %v4441, %v4448
    %v4451 = vshrl.u32 %v4433, %v4449
    %v4452 = vor.u32 %v4450, %v4451
    %v4453 = vsub.s32 4294967266, %v4448
    %v4454 = vadd.s32 %v4453, 127
    %v4455 = vshll.u32 %v4454, 23
    %v4456 = vor.u32 4788187, %v4455
    %v4457 = vand.u32 2147483647, %v4456
    %v4459 = vcvt.s32.f32 %v4452
    %v4460 = vmul.f32 %v4459, %v4457
    %v4461 = vxor.u32 %v4460, 2147483648
    %v4462 = vsel %vm4341, %v4461, %v4460
    %v4463 = vsub.s32 4, %v4439
    %v4464 = vsel %vm4341, %v4463, %v4439
    %v4465 = vsel %vm4340, %v303, %v4462
    %v4466 = vsel %vm4340, 0, %v4464
    %v4467 = vmul.f32 %v4465, %v4465
    %v4468 = vmul.f32 %v4467, -0.001358992
    %v4469 = vadd.f32 %v4468, 0.041655596
    %v4470 = vmul.f32 %v4467, %v4469
    %v4471 = vadd.f32 %v4470, -0.4999988
    %v4472 = vmul.f32 %v4467, %v4471
    %v4473 = vadd.f32 1.0, %v4472
    %v4474 = vmul.f32 %v4465, %v4465
    %v4475 = vmul.f32 %v4474, -0.00019511016
    %v4476 = vadd.f32 %v4475, 0.008332121
    %v4477 = vmul.f32 %v4474, %v4476
    %v4478 = vadd.f32 %v4477, -0.16666654
    %v4479 = vmul.f32 %v4474, %v4478
    %v4480 = vadd.f32 %v4479, 1.0
    %v4481 = vmul.f32 %v4480, %v4465
    %vm4482 = vweird.f32 %v303
    %v4483 = vadd.s32 %v4466, 3
    %v4484 = vand.u32 %v4483, 3
    %vm4485 = vcmp.lt.s32.totalorder %v4484, 2
    %vm4486 = vcmp.eq.s32.totalorder %v4484, 0
    %v4487 = vxor.u32 %v4481, 2147483648
    %v4488 = vsel %vm4486, %v4473, %v4487
    %vm4489 = vcmp.eq.s32.totalorder %v4484, 2
    %v4490 = vxor.u32 %v4473, 2147483648
    %v4491 = vsel %vm4489, %v4490, %v4481
    %v4492 = vsel %vm4485, %v4488, %v4491
    %v4493 = vsel %vm4482, nan, %v4492
    %v4494 = vand.u32 2147483647, %v304
    %vm4495 = vcmp.le.f32.partialorder %v4494, 0.7853982
    %vm4496 = vcmp.lt.s32.totalorder %v304, 0
    %v4497 = vand.u32 %v304, 2139095040
    %v4498 = vshrl.u32 %v4497, 23
    %v4499 = vsub.s32 %v4498, 127
    %v4500 = vand.u32 2147483647, %v304
    %v4501 = vand.u32 %v4500, 8388607
    %v4502 = vor.u32 %v4501, 8388608
    %v4503 = vsub.s32 0, %v4502
    %v4504 = vadd.s32 %v4499, 1
    %vm4505 = vcmp.gt.s32.totalorder %v4504, 0
    %v4506 = vsel %vm4505, %v4504, 0
    %v4507 = vshrl.u32 %v4506, 5
    %v4508 = vand.u32 %v4506, 31
    %v4509 = vsub.s32 32, %v4508
    %v4510 = vshrl.u32 683565275, %v4509
    %v4511 = vshll.u32 683565275, %v4508
    %v4512 = vshrl.u32 2475754826, %v4509
    %v4513 = vor.u32 %v4511, %v4512
    %v4514 = vshll.u32 2475754826, %v4508
    %v4515 = vshrl.u32 2131351028, %v4509
    %v4516 = vor.u32 %v4514, %v4515
    %v4517 = vshll.u32 2131351028, %v4508
    %v4518 = vshrl.u32 2102212464, %v4509
    %v4519 = vor.u32 %v4517, %v4518
    %v4520 = vshll.u32 2102212464, %v4508
    %v4521 = vshrl.u32 920167782, %v4509
    %v4522 = vor.u32 %v4520, %v4521
    %v4523 = vshll.u32 920167782, %v4508
    %v4524 = vshrl.u32 1326507024, %v4509
    %v4525 = vor.u32 %v4523, %v4524
    %vm4526 = vcmp.lt.s32.totalorder %v4507, 1
    %vm4527 = vcmp.lt.s32.totalorder %v4507, 2
    %vm4528 = vcmp.lt.s32.totalorder %v4507, 3
    %vm4529 = vcmp.lt.s32.totalorder %v4507, 4
    %v4530 = vsel %vm4526, %v4510, %v4513
    %v4531 = vsel %vm4529, %v4519, 2102212464
    %v4532 = vsel %vm4528, %v4516, %v4531
    %v4533 = vsel %vm4527, %v4530, %v4532
    %v4534 = vsel %vm4526, %v4513, %v4516
    %v4535 = vsel %vm4529, %v4522, 920167782
    %v4536 = vsel %vm4528, %v4519, %v4535
    %v4537 = vsel %vm4527, %v4534, %v4536
    %v4538 = vsel %vm4526, %v4516, %v4519
    %v4539 = vsel %vm4529, %v4525, 1326507024
    %v4540 = vsel %vm4528, %v4522, %v4539
    %v4541 = vsel %vm4527, %v4538, %v4540
    %v4542 = vshll.u32 %v4502, 8
    %v4543 = vand.u32 %v4542, 65535
    %v4544 = vshrl.u32 %v4542, 16
    %v4545 = vand.u32 %v4541, 65535
    %v4546 = vshrl.u32 %v4541, 16
    %v4547 = vmul.u32 %v4543, %v4545
    %v4548 = vmul.u32 %v4543, %v4546
    %v4549 = vmul.u32 %v4544, %v4545
    %v4550 = vmul.u32 %v4544, %v4546
    %v4551 = vshll.u32 %v4548, 16
    %v4552 = vshrl.u32 %v4548, 16
    %v4553 = vshll.u32 %v4549, 16
    %v4554 = vshrl.u32 %v4549, 16
    %vm4555 = vc.u32 %v4547, %v4551
    %v4556 = vsel %vm4555, 1, 0
    %v4557 = vadd.s32 %v4547, %v4551
    %v4558 = vadd.s32 %v4550, %v4556
    %vm4559 = vc.u32 %v4557, %v4553
    %v4560 = vsel %vm4559, 1, 0
    %v4561 = vadd.s32 %v4557, %v4553
    %v4562 = vadd.s32 %v4558, %v4560
    %v4563 = vadd.s32 %v4562, %v4552
    %v4564 = vadd.s32 %v4563, %v4554
    %v4565 = vand.u32 %v4542, 65535
    %v4566 = vshrl.u32 %v4542, 16
    %v4567 = vand.u32 %v4537, 65535
    %v4568 = vshrl.u32 %v4537, 16
    %v4569 = vmul.u32 %v4565, %v4567
    %v4570 = vmul.u32 %v4565, %v4568
    %v4571 = vmul.u32 %v4566, %v4567
    %v4572 = vmul.u32 %v4566, %v4568
    %v4573 = vshll.u32 %v4570, 16
    %v4574 = vshrl.u32 %v4570, 16
    %v4575 = vshll.u32 %v4571, 16
    %v4576 = vshrl.u32 %v4571, 16
    %vm4577 = vc.u32 %v4569, %v4573
    %v4578 = vsel %vm4577, 1, 0
    %v4579 = vadd.s32 %v4569, %v4573
    %v4580 = vadd.s32 %v4572, %v4578
    %vm4581 = vc.u32 %v4579, %v4575
    %v4582 = vsel %vm4581, 1, 0
    %v4583 = vadd.s32 %v4579, %v4575
    %v4584 = vadd.s32 %v4580, %v4582
    %v4585 = vadd.s32 %v4584, %v4574
    %v4586 = vadd.s32 %v4585, %v4576
    %v4587 = vmul.u32 %v4542, %v4533
    %v4588 = vadd.s32 %v4564, %v4583
    %vm4589 = vc.u32 %v4564, %v4583
    %v4590 = vadd.s32 %v4586, 1
    %v4591 = vsel %vm4589, %v4590, %v4586
    %v4592 = vadd.s32 %v4587, %v4591
    %v4593 = vadd.s32 %v4592, 536870912
    %v4594 = vshrl.u32 %v4593, 30
    %v4595 = vshll.u32 %v4594, 30
    %v4596 = vsub.s32 %v4592, %v4595
    %vm4597 = vcmp.lt.s32.totalorder %v4596, 0
    %v4598 = vsub.s32 0, %v4596
    %v4599 = vsel %vm4597, %v4598, %v4596
    %v4600 = vclz %v4599
    %v4601 = vsub.s32 %v4600, 2
    %vm4602 = vcmp.gt.s32.totalorder 0, %v4601
    %v4603 = vsel %vm4602, 0, %v4601
    %v4604 = vsub.s32 32, %v4603
    %v4605 = vshll.u32 %v4596, %v4603
    %v4606 = vshrl.u32 %v4588, %v4604
    %v4607 = vor.u32 %v4605, %v4606
    %v4608 = vsub.s32 4294967266, %v4603
    %v4609 = vadd.s32 %v4608, 127
    %v4610 = vshll.u32 %v4609, 23
    %v4611 = vor.u32 4788187, %v4610
    %v4612 = vand.u32 2147483647, %v4611
    %v4614 = vcvt.s32.f32 %v4607
    %v4615 = vmul.f32 %v4614, %v4612
    %v4616 = vxor.u32 %v4615, 2147483648
    %v4617 = vsel %vm4496, %v4616, %v4615
    %v4618 = vsub.s32 4, %v4594
    %v4619 = vsel %vm4496, %v4618, %v4594
    %v4620 = vsel %vm4495, %v304, %v4617
    %v4621 = vsel %vm4495, 0, %v4619
    %v4622 = vmul.f32 %v4620, %v4620
    %v4623 = vmul.f32 %v4622, -0.001358992
    %v4624 = vadd.f32 %v4623, 0.041655596
    %v4625 = vmul.f32 %v4622, %v4624
    %v4626 = vadd.f32 %v4625, -0.4999988
    %v4627 = vmul.f32 %v4622, %v4626
    %v4628 = vadd.f32 1.0, %v4627
    %v4629 = vmul.f32 %v4620, %v4620
    %v4630 = vmul.f32 %v4629, -0.00019511016
    %v4631 = vadd.f32 %v4630, 0.008332121
    %v4632 = vmul.f32 %v4629, %v4631
    %v4633 = vadd.f32 %v4632, -0.16666654
    %v4634 = vmul.f32 %v4629, %v4633
    %v4635 = vadd.f32 %v4634, 1.0
    %v4636 = vmul.f32 %v4635, %v4620
    %vm4637 = vweird.f32 %v304
    %v4638 = vadd.s32 %v4621, 3
    %v4639 = vand.u32 %v4638, 3
    %vm4640 = vcmp.lt.s32.totalorder %v4639, 2
    %vm4641 = vcmp.eq.s32.totalorder %v4639, 0
    %v4642 = vxor.u32 %v4636, 2147483648
    %v4643 = vsel %vm4641, %v4628, %v4642
    %vm4644 = vcmp.eq.s32.totalorder %v4639, 2
    %v4645 = vxor.u32 %v4628, 2147483648
    %v4646 = vsel %vm4644, %v4645, %v4636
    %v4647 = vsel %vm4640, %v4643, %v4646
    %v4648 = vsel %vm4637, nan, %v4647
    %v4649 = vand.u32 2147483647, %v305
    %vm4650 = vcmp.le.f32.partialorder %v4649, 0.7853982
    %vm4651 = vcmp.lt.s32.totalorder %v305, 0
    %v4652 = vand.u32 %v305, 2139095040
    %v4653 = vshrl.u32 %v4652, 23
    %v4654 = vsub.s32 %v4653, 127
    %v4655 = vand.u32 2147483647, %v305
    %v4656 = vand.u32 %v4655, 8388607
    %v4657 = vor.u32 %v4656, 8388608
    %v4658 = vsub.s32 0, %v4657
    %v4659 = vadd.s32 %v4654, 1
    %vm4660 = vcmp.gt.s32.totalorder %v4659, 0
    %v4661 = vsel %vm4660, %v4659, 0
    %v4662 = vshrl.u32 %v4661, 5
    %v4663 = vand.u32 %v4661, 31
    %v4664 = vsub.s32 32, %v4663
    %v4665 = vshrl.u32 683565275, %v4664
    %v4666 = vshll.u32 683565275, %v4663
    %v4667 = vshrl.u32 2475754826, %v4664
    %v4668 = vor.u32 %v4666, %v4667
    %v4669 = vshll.u32 2475754826, %v4663
    %v4670 = vshrl.u32 2131351028, %v4664
    %v4671 = vor.u32 %v4669, %v4670
    %v4672 = vshll.u32 2131351028, %v4663
    %v4673 = vshrl.u32 2102212464, %v4664
    %v4674 = vor.u32 %v4672, %v4673
    %v4675 = vshll.u32 2102212464, %v4663
    %v4676 = vshrl.u32 920167782, %v4664
    %v4677 = vor.u32 %v4675, %v4676
    %v4678 = vshll.u32 920167782, %v4663
    %v4679 = vshrl.u32 1326507024, %v4664
    %v4680 = vor.u32 %v4678, %v4679
    %vm4681 = vcmp.lt.s32.totalorder %v4662, 1
    %vm4682 = vcmp.lt.s32.totalorder %v4662, 2
    %vm4683 = vcmp.lt.s32.totalorder %v4662, 3
    %vm4684 = vcmp.lt.s32.totalorder %v4662, 4
    %v4685 = vsel %vm4681, %v4665, %v4668
    %v4686 = vsel %vm4684, %v4674, 2102212464
    %v4687 = vsel %vm4683, %v4671, %v4686
    %v4688 = vsel %vm4682, %v4685, %v4687
    %v4689 = vsel %vm4681, %v4668, %v4671
    %v4690 = vsel %vm4684, %v4677, 920167782
    %v4691 = vsel %vm4683, %v4674, %v4690
    %v4692 = vsel %vm4682, %v4689, %v4691
    %v4693 = vsel %vm4681, %v4671, %v4674
    %v4694 = vsel %vm4684, %v4680, 1326507024
    %v4695 = vsel %vm4683, %v4677, %v4694
    %v4696 = vsel %vm4682, %v4693, %v4695
    %v4697 = vshll.u32 %v4657, 8
    %v4698 = vand.u32 %v4697, 65535
    %v4699 = vshrl.u32 %v4697, 16
    %v4700 = vand.u32 %v4696, 65535
    %v4701 = vshrl.u32 %v4696, 16
    %v4702 = vmul.u32 %v4698, %v4700
    %v4703 = vmul.u32 %v4698, %v4701
    %v4704 = vmul.u32 %v4699, %v4700
    %v4705 = vmul.u32 %v4699, %v4701
    %v4706 = vshll.u32 %v4703, 16
    %v4707 = vshrl.u32 %v4703, 16
    %v4708 = vshll.u32 %v4704, 16
    %v4709 = vshrl.u32 %v4704, 16
    %vm4710 = vc.u32 %v4702, %v4706
    %v4711 = vsel %vm4710, 1, 0
    %v4712 = vadd.s32 %v4702, %v4706
    %v4713 = vadd.s32 %v4705, %v4711
    %vm4714 = vc.u32 %v4712, %v4708
    %v4715 = vsel %vm4714, 1, 0
    %v4716 = vadd.s32 %v4712, %v4708
    %v4717 = vadd.s32 %v4713, %v4715
    %v4718 = vadd.s32 %v4717, %v4707
    %v4719 = vadd.s32 %v4718, %v4709
    %v4720 = vand.u32 %v4697, 65535
    %v4721 = vshrl.u32 %v4697, 16
    %v4722 = vand.u32 %v4692, 65535
    %v4723 = vshrl.u32 %v4692, 16
    %v4724 = vmul.u32 %v4720, %v4722
    %v4725 = vmul.u32 %v4720, %v4723
    %v4726 = vmul.u32 %v4721, %v4722
    %v4727 = vmul.u32 %v4721, %v4723
    %v4728 = vshll.u32 %v4725, 16
    %v4729 = vshrl.u32 %v4725, 16
    %v4730 = vshll.u32 %v4726, 16
    %v4731 = vshrl.u32 %v4726, 16
    %vm4732 = vc.u32 %v4724, %v4728
    %v4733 = vsel %vm4732, 1, 0
    %v4734 = vadd.s32 %v4724, %v4728
    %v4735 = vadd.s32 %v4727, %v4733
    %vm4736 = vc.u32 %v4734, %v4730
    %v4737 = vsel %vm4736, 1, 0
    %v4738 = vadd.s32 %v4734, %v4730
    %v4739 = vadd.s32 %v4735, %v4737
    %v4740 = vadd.s32 %v4739, %v4729
    %v4741 = vadd.s32 %v4740, %v4731
    %v4742 = vmul.u32 %v4697, %v4688
    %v4743 = vadd.s32 %v4719, %v4738
    %vm4744 = vc.u32 %v4719, %v4738
    %v4745 = vadd.s32 %v4741, 1
    %v4746 = vsel %vm4744, %v4745, %v4741
    %v4747 = vadd.s32 %v4742, %v4746
    %v4748 = vadd.s32 %v4747, 536870912
    %v4749 = vshrl.u32 %v4748, 30
    %v4750 = vshll.u32 %v4749, 30
    %v4751 = vsub.s32 %v4747, %v4750
    %vm4752 = vcmp.lt.s32.totalorder %v4751, 0
    %v4753 = vsub.s32 0, %v4751
    %v4754 = vsel %vm4752, %v4753, %v4751
    %v4755 = vclz %v4754
    %v4756 = vsub.s32 %v4755, 2
    %vm4757 = vcmp.gt.s32.totalorder 0, %v4756
    %v4758 = vsel %vm4757, 0, %v4756
    %v4759 = vsub.s32 32, %v4758
    %v4760 = vshll.u32 %v4751, %v4758
    %v4761 = vshrl.u32 %v4743, %v4759
    %v4762 = vor.u32 %v4760, %v4761
    %v4763 = vsub.s32 4294967266, %v4758
    %v4764 = vadd.s32 %v4763, 127
    %v4765 = vshll.u32 %v4764, 23
    %v4766 = vor.u32 4788187, %v4765
    %v4767 = vand.u32 2147483647, %v4766
    %v4769 = vcvt.s32.f32 %v4762
    %v4770 = vmul.f32 %v4769, %v4767
    %v4771 = vxor.u32 %v4770, 2147483648
    %v4772 = vsel %vm4651, %v4771, %v4770
    %v4773 = vsub.s32 4, %v4749
    %v4774 = vsel %vm4651, %v4773, %v4749
    %v4775 = vsel %vm4650, %v305, %v4772
    %v4776 = vsel %vm4650, 0, %v4774
    %v4777 = vmul.f32 %v4775, %v4775
    %v4778 = vmul.f32 %v4777, -0.001358992
    %v4779 = vadd.f32 %v4778, 0.041655596
    %v4780 = vmul.f32 %v4777, %v4779
    %v4781 = vadd.f32 %v4780, -0.4999988
    %v4782 = vmul.f32 %v4777, %v4781
    %v4783 = vadd.f32 1.0, %v4782
    %v4784 = vmul.f32 %v4775, %v4775
    %v4785 = vmul.f32 %v4784, -0.00019511016
    %v4786 = vadd.f32 %v4785, 0.008332121
    %v4787 = vmul.f32 %v4784, %v4786
    %v4788 = vadd.f32 %v4787, -0.16666654
    %v4789 = vmul.f32 %v4784, %v4788
    %v4790 = vadd.f32 %v4789, 1.0
    %v4791 = vmul.f32 %v4790, %v4775
    %vm4792 = vweird.f32 %v305
    %v4793 = vadd.s32 %v4776, 3
    %v4794 = vand.u32 %v4793, 3
    %vm4795 = vcmp.lt.s32.totalorder %v4794, 2
    %vm4796 = vcmp.eq.s32.totalorder %v4794, 0
    %v4797 = vxor.u32 %v4791, 2147483648
    %v4798 = vsel %vm4796, %v4783, %v4797
    %vm4799 = vcmp.eq.s32.totalorder %v4794, 2
    %v4800 = vxor.u32 %v4783, 2147483648
    %v4801 = vsel %vm4799, %v4800, %v4791
    %v4802 = vsel %vm4795, %v4798, %v4801
    %v4803 = vsel %vm4792, nan, %v4802
    %v4804 = vand.u32 2147483647, %v306
    %vm4805 = vcmp.le.f32.partialorder %v4804, 0.7853982
    %vm4806 = vcmp.lt.s32.totalorder %v306, 0
    %v4807 = vand.u32 %v306, 2139095040
    %v4808 = vshrl.u32 %v4807, 23
    %v4809 = vsub.s32 %v4808, 127
    %v4810 = vand.u32 2147483647, %v306
    %v4811 = vand.u32 %v4810, 8388607
    %v4812 = vor.u32 %v4811, 8388608
    %v4813 = vsub.s32 0, %v4812
    %v4814 = vadd.s32 %v4809, 1
    %vm4815 = vcmp.gt.s32.totalorder %v4814, 0
    %v4816 = vsel %vm4815, %v4814, 0
    %v4817 = vshrl.u32 %v4816, 5
    %v4818 = vand.u32 %v4816, 31
    %v4819 = vsub.s32 32, %v4818
    %v4820 = vshrl.u32 683565275, %v4819
    %v4821 = vshll.u32 683565275, %v4818
    %v4822 = vshrl.u32 2475754826, %v4819
    %v4823 = vor.u32 %v4821, %v4822
    %v4824 = vshll.u32 2475754826, %v4818
    %v4825 = vshrl.u32 2131351028, %v4819
    %v4826 = vor.u32 %v4824, %v4825
    %v4827 = vshll.u32 2131351028, %v4818
    %v4828 = vshrl.u32 2102212464, %v4819
    %v4829 = vor.u32 %v4827, %v4828
    %v4830 = vshll.u32 2102212464, %v4818
    %v4831 = vshrl.u32 920167782, %v4819
    %v4832 = vor.u32 %v4830, %v4831
    %v4833 = vshll.u32 920167782, %v4818
    %v4834 = vshrl.u32 1326507024, %v4819
    %v4835 = vor.u32 %v4833, %v4834
    %vm4836 = vcmp.lt.s32.totalorder %v4817, 1
    %vm4837 = vcmp.lt.s32.totalorder %v4817, 2
    %vm4838 = vcmp.lt.s32.totalorder %v4817, 3
    %vm4839 = vcmp.lt.s32.totalorder %v4817, 4
    %v4840 = vsel %vm4836, %v4820, %v4823
    %v4841 = vsel %vm4839, %v4829, 2102212464
    %v4842 = vsel %vm4838, %v4826, %v4841
    %v4843 = vsel %vm4837, %v4840, %v4842
    %v4844 = vsel %vm4836, %v4823, %v4826
    %v4845 = vsel %vm4839, %v4832, 920167782
    %v4846 = vsel %vm4838, %v4829, %v4845
    %v4847 = vsel %vm4837, %v4844, %v4846
    %v4848 = vsel %vm4836, %v4826, %v4829
    %v4849 = vsel %vm4839, %v4835, 1326507024
    %v4850 = vsel %vm4838, %v4832, %v4849
    %v4851 = vsel %vm4837, %v4848, %v4850
    %v4852 = vshll.u32 %v4812, 8
    %v4853 = vand.u32 %v4852, 65535
    %v4854 = vshrl.u32 %v4852, 16
    %v4855 = vand.u32 %v4851, 65535
    %v4856 = vshrl.u32 %v4851, 16
    %v4857 = vmul.u32 %v4853, %v4855
    %v4858 = vmul.u32 %v4853, %v4856
    %v4859 = vmul.u32 %v4854, %v4855
    %v4860 = vmul.u32 %v4854, %v4856
    %v4861 = vshll.u32 %v4858, 16
    %v4862 = vshrl.u32 %v4858, 16
    %v4863 = vshll.u32 %v4859, 16
    %v4864 = vshrl.u32 %v4859, 16
    %vm4865 = vc.u32 %v4857, %v4861
    %v4866 = vsel %vm4865, 1, 0
    %v4867 = vadd.s32 %v4857, %v4861
    %v4868 = vadd.s32 %v4860, %v4866
    %vm4869 = vc.u32 %v4867, %v4863
    %v4870 = vsel %vm4869, 1, 0
    %v4871 = vadd.s32 %v4867, %v4863
    %v4872 = vadd.s32 %v4868, %v4870
    %v4873 = vadd.s32 %v4872, %v4862
    %v4874 = vadd.s32 %v4873, %v4864
    %v4875 = vand.u32 %v4852, 65535
    %v4876 = vshrl.u32 %v4852, 16
    %v4877 = vand.u32 %v4847, 65535
    %v4878 = vshrl.u32 %v4847, 16
    %v4879 = vmul.u32 %v4875, %v4877
    %v4880 = vmul.u32 %v4875, %v4878
    %v4881 = vmul.u32 %v4876, %v4877
    %v4882 = vmul.u32 %v4876, %v4878
    %v4883 = vshll.u32 %v4880, 16
    %v4884 = vshrl.u32 %v4880, 16
    %v4885 = vshll.u32 %v4881, 16
    %v4886 = vshrl.u32 %v4881, 16
    %vm4887 = vc.u32 %v4879, %v4883
    %v4888 = vsel %vm4887, 1, 0
    %v4889 = vadd.s32 %v4879, %v4883
    %v4890 = vadd.s32 %v4882, %v4888
    %vm4891 = vc.u32 %v4889, %v4885
    %v4892 = vsel %vm4891, 1, 0
    %v4893 = vadd.s32 %v4889, %v4885
    %v4894 = vadd.s32 %v4890, %v4892
    %v4895 = vadd.s32 %v4894, %v4884
    %v4896 = vadd.s32 %v4895, %v4886
    %v4897 = vmul.u32 %v4852, %v4843
    %v4898 = vadd.s32 %v4874, %v4893
    %vm4899 = vc.u32 %v4874, %v4893
    %v4900 = vadd.s32 %v4896, 1
    %v4901 = vsel %vm4899, %v4900, %v4896
    %v4902 = vadd.s32 %v4897, %v4901
    %v4903 = vadd.s32 %v4902, 536870912
    %v4904 = vshrl.u32 %v4903, 30
    %v4905 = vshll.u32 %v4904, 30
    %v4906 = vsub.s32 %v4902, %v4905
    %vm4907 = vcmp.lt.s32.totalorder %v4906, 0
    %v4908 = vsub.s32 0, %v4906
    %v4909 = vsel %vm4907, %v4908, %v4906
    %v4910 = vclz %v4909
    %v4911 = vsub.s32 %v4910, 2
    %vm4912 = vcmp.gt.s32.totalorder 0, %v4911
    %v4913 = vsel %vm4912, 0, %v4911
    %v4914 = vsub.s32 32, %v4913
    %v4915 = vshll.u32 %v4906, %v4913
    %v4916 = vshrl.u32 %v4898, %v4914
    %v4917 = vor.u32 %v4915, %v4916
    %v4918 = vsub.s32 4294967266, %v4913
    %v4919 = vadd.s32 %v4918, 127
    %v4920 = vshll.u32 %v4919, 23
    %v4921 = vor.u32 4788187, %v4920
    %v4922 = vand.u32 2147483647, %v4921
    %v4924 = vcvt.s32.f32 %v4917
    %v4925 = vmul.f32 %v4924, %v4922
    %v4926 = vxor.u32 %v4925, 2147483648
    %v4927 = vsel %vm4806, %v4926, %v4925
    %v4928 = vsub.s32 4, %v4904
    %v4929 = vsel %vm4806, %v4928, %v4904
    %v4930 = vsel %vm4805, %v306, %v4927
    %v4931 = vsel %vm4805, 0, %v4929
    %v4932 = vmul.f32 %v4930, %v4930
    %v4933 = vmul.f32 %v4932, -0.001358992
    %v4934 = vadd.f32 %v4933, 0.041655596
    %v4935 = vmul.f32 %v4932, %v4934
    %v4936 = vadd.f32 %v4935, -0.4999988
    %v4937 = vmul.f32 %v4932, %v4936
    %v4938 = vadd.f32 1.0, %v4937
    %v4939 = vmul.f32 %v4930, %v4930
    %v4940 = vmul.f32 %v4939, -0.00019511016
    %v4941 = vadd.f32 %v4940, 0.008332121
    %v4942 = vmul.f32 %v4939, %v4941
    %v4943 = vadd.f32 %v4942, -0.16666654
    %v4944 = vmul.f32 %v4939, %v4943
    %v4945 = vadd.f32 %v4944, 1.0
    %v4946 = vmul.f32 %v4945, %v4930
    %vm4947 = vweird.f32 %v306
    %v4948 = vadd.s32 %v4931, 3
    %v4949 = vand.u32 %v4948, 3
    %vm4950 = vcmp.lt.s32.totalorder %v4949, 2
    %vm4951 = vcmp.eq.s32.totalorder %v4949, 0
    %v4952 = vxor.u32 %v4946, 2147483648
    %v4953 = vsel %vm4951, %v4938, %v4952
    %vm4954 = vcmp.eq.s32.totalorder %v4949, 2
    %v4955 = vxor.u32 %v4938, 2147483648
    %v4956 = vsel %vm4954, %v4955, %v4946
    %v4957 = vsel %vm4950, %v4953, %v4956
    %v4958 = vsel %vm4947, nan, %v4957
    %v4959 = vand.u32 2147483647, %v307
    %vm4960 = vcmp.le.f32.partialorder %v4959, 0.7853982
    %vm4961 = vcmp.lt.s32.totalorder %v307, 0
    %v4962 = vand.u32 %v307, 2139095040
    %v4963 = vshrl.u32 %v4962, 23
    %v4964 = vsub.s32 %v4963, 127
    %v4965 = vand.u32 2147483647, %v307
    %v4966 = vand.u32 %v4965, 8388607
    %v4967 = vor.u32 %v4966, 8388608
    %v4968 = vsub.s32 0, %v4967
    %v4969 = vadd.s32 %v4964, 1
    %vm4970 = vcmp.gt.s32.totalorder %v4969, 0
    %v4971 = vsel %vm4970, %v4969, 0
    %v4972 = vshrl.u32 %v4971, 5
    %v4973 = vand.u32 %v4971, 31
    %v4974 = vsub.s32 32, %v4973
    %v4975 = vshrl.u32 683565275, %v4974
    %v4976 = vshll.u32 683565275, %v4973
    %v4977 = vshrl.u32 2475754826, %v4974
    %v4978 = vor.u32 %v4976, %v4977
    %v4979 = vshll.u32 2475754826, %v4973
    %v4980 = vshrl.u32 2131351028, %v4974
    %v4981 = vor.u32 %v4979, %v4980
    %v4982 = vshll.u32 2131351028, %v4973
    %v4983 = vshrl.u32 2102212464, %v4974
    %v4984 = vor.u32 %v4982, %v4983
    %v4985 = vshll.u32 2102212464, %v4973
    %v4986 = vshrl.u32 920167782, %v4974
    %v4987 = vor.u32 %v4985, %v4986
    %v4988 = vshll.u32 920167782, %v4973
    %v4989 = vshrl.u32 1326507024, %v4974
    %v4990 = vor.u32 %v4988, %v4989
    %vm4991 = vcmp.lt.s32.totalorder %v4972, 1
    %vm4992 = vcmp.lt.s32.totalorder %v4972, 2
    %vm4993 = vcmp.lt.s32.totalorder %v4972, 3
    %vm4994 = vcmp.lt.s32.totalorder %v4972, 4
    %v4995 = vsel %vm4991, %v4975, %v4978
    %v4996 = vsel %vm4994, %v4984, 2102212464
    %v4997 = vsel %vm4993, %v4981, %v4996
    %v4998 = vsel %vm4992, %v4995, %v4997
    %v4999 = vsel %vm4991, %v4978, %v4981
    %v5000 = vsel %vm4994, %v4987, 920167782
    %v5001 = vsel %vm4993, %v4984, %v5000
    %v5002 = vsel %vm4992, %v4999, %v5001
    %v5003 = vsel %vm4991, %v4981, %v4984
    %v5004 = vsel %vm4994, %v4990, 1326507024
    %v5005 = vsel %vm4993, %v4987, %v5004
    %v5006 = vsel %vm4992, %v5003, %v5005
    %v5007 = vshll.u32 %v4967, 8
    %v5008 = vand.u32 %v5007, 65535
    %v5009 = vshrl.u32 %v5007, 16
    %v5010 = vand.u32 %v5006, 65535
    %v5011 = vshrl.u32 %v5006, 16
    %v5012 = vmul.u32 %v5008, %v5010
    %v5013 = vmul.u32 %v5008, %v5011
    %v5014 = vmul.u32 %v5009, %v5010
    %v5015 = vmul.u32 %v5009, %v5011
    %v5016 = vshll.u32 %v5013, 16
    %v5017 = vshrl.u32 %v5013, 16
    %v5018 = vshll.u32 %v5014, 16
    %v5019 = vshrl.u32 %v5014, 16
    %vm5020 = vc.u32 %v5012, %v5016
    %v5021 = vsel %vm5020, 1, 0
    %v5022 = vadd.s32 %v5012, %v5016
    %v5023 = vadd.s32 %v5015, %v5021
    %vm5024 = vc.u32 %v5022, %v5018
    %v5025 = vsel %vm5024, 1, 0
    %v5026 = vadd.s32 %v5022, %v5018
    %v5027 = vadd.s32 %v5023, %v5025
    %v5028 = vadd.s32 %v5027, %v5017
    %v5029 = vadd.s32 %v5028, %v5019
    %v5030 = vand.u32 %v5007, 65535
    %v5031 = vshrl.u32 %v5007, 16
    %v5032 = vand.u32 %v5002, 65535
    %v5033 = vshrl.u32 %v5002, 16
    %v5034 = vmul.u32 %v5030, %v5032
    %v5035 = vmul.u32 %v5030, %v5033
    %v5036 = vmul.u32 %v5031, %v5032
    %v5037 = vmul.u32 %v5031, %v5033
    %v5038 = vshll.u32 %v5035, 16
    %v5039 = vshrl.u32 %v5035, 16
    %v5040 = vshll.u32 %v5036, 16
    %v5041 = vshrl.u32 %v5036, 16
    %vm5042 = vc.u32 %v5034, %v5038
    %v5043 = vsel %vm5042, 1, 0
    %v5044 = vadd.s32 %v5034, %v5038
    %v5045 = vadd.s32 %v5037, %v5043
    %vm5046 = vc.u32 %v5044, %v5040
    %v5047 = vsel %vm5046, 1, 0
    %v5048 = vadd.s32 %v5044, %v5040
    %v5049 = vadd.s32 %v5045, %v5047
    %v5050 = vadd.s32 %v5049, %v5039
    %v5051 = vadd.s32 %v5050, %v5041
    %v5052 = vmul.u32 %v5007, %v4998
    %v5053 = vadd.s32 %v5029, %v5048
    %vm5054 = vc.u32 %v5029, %v5048
    %v5055 = vadd.s32 %v5051, 1
    %v5056 = vsel %vm5054, %v5055, %v5051
    %v5057 = vadd.s32 %v5052, %v5056
    %v5058 = vadd.s32 %v5057, 536870912
    %v5059 = vshrl.u32 %v5058, 30
    %v5060 = vshll.u32 %v5059, 30
    %v5061 = vsub.s32 %v5057, %v5060
    %vm5062 = vcmp.lt.s32.totalorder %v5061, 0
    %v5063 = vsub.s32 0, %v5061
    %v5064 = vsel %vm5062, %v5063, %v5061
    %v5065 = vclz %v5064
    %v5066 = vsub.s32 %v5065, 2
    %vm5067 = vcmp.gt.s32.totalorder 0, %v5066
    %v5068 = vsel %vm5067, 0, %v5066
    %v5069 = vsub.s32 32, %v5068
    %v5070 = vshll.u32 %v5061, %v5068
    %v5071 = vshrl.u32 %v5053, %v5069
    %v5072 = vor.u32 %v5070, %v5071
    %v5073 = vsub.s32 4294967266, %v5068
    %v5074 = vadd.s32 %v5073, 127
    %v5075 = vshll.u32 %v5074, 23
    %v5076 = vor.u32 4788187, %v5075
    %v5077 = vand.u32 2147483647, %v5076
    %v5079 = vcvt.s32.f32 %v5072
    %v5080 = vmul.f32 %v5079, %v5077
    %v5081 = vxor.u32 %v5080, 2147483648
    %v5082 = vsel %vm4961, %v5081, %v5080
    %v5083 = vsub.s32 4, %v5059
    %v5084 = vsel %vm4961, %v5083, %v5059
    %v5085 = vsel %vm4960, %v307, %v5082
    %v5086 = vsel %vm4960, 0, %v5084
    %v5087 = vmul.f32 %v5085, %v5085
    %v5088 = vmul.f32 %v5087, -0.001358992
    %v5089 = vadd.f32 %v5088, 0.041655596
    %v5090 = vmul.f32 %v5087, %v5089
    %v5091 = vadd.f32 %v5090, -0.4999988
    %v5092 = vmul.f32 %v5087, %v5091
    %v5093 = vadd.f32 1.0, %v5092
    %v5094 = vmul.f32 %v5085, %v5085
    %v5095 = vmul.f32 %v5094, -0.00019511016
    %v5096 = vadd.f32 %v5095, 0.008332121
    %v5097 = vmul.f32 %v5094, %v5096
    %v5098 = vadd.f32 %v5097, -0.16666654
    %v5099 = vmul.f32 %v5094, %v5098
    %v5100 = vadd.f32 %v5099, 1.0
    %v5101 = vmul.f32 %v5100, %v5085
    %vm5102 = vweird.f32 %v307
    %v5103 = vadd.s32 %v5086, 3
    %v5104 = vand.u32 %v5103, 3
    %vm5105 = vcmp.lt.s32.totalorder %v5104, 2
    %vm5106 = vcmp.eq.s32.totalorder %v5104, 0
    %v5107 = vxor.u32 %v5101, 2147483648
    %v5108 = vsel %vm5106, %v5093, %v5107
    %vm5109 = vcmp.eq.s32.totalorder %v5104, 2
    %v5110 = vxor.u32 %v5093, 2147483648
    %v5111 = vsel %vm5109, %v5110, %v5101
    %v5112 = vsel %vm5105, %v5108, %v5111
    %v5113 = vsel %vm5102, nan, %v5112
    %v5114 = vand.u32 2147483647, %v308
    %vm5115 = vcmp.le.f32.partialorder %v5114, 0.7853982
    %vm5116 = vcmp.lt.s32.totalorder %v308, 0
    %v5117 = vand.u32 %v308, 2139095040
    %v5118 = vshrl.u32 %v5117, 23
    %v5119 = vsub.s32 %v5118, 127
    %v5120 = vand.u32 2147483647, %v308
    %v5121 = vand.u32 %v5120, 8388607
    %v5122 = vor.u32 %v5121, 8388608
    %v5123 = vsub.s32 0, %v5122
    %v5124 = vadd.s32 %v5119, 1
    %vm5125 = vcmp.gt.s32.totalorder %v5124, 0
    %v5126 = vsel %vm5125, %v5124, 0
    %v5127 = vshrl.u32 %v5126, 5
    %v5128 = vand.u32 %v5126, 31
    %v5129 = vsub.s32 32, %v5128
    %v5130 = vshrl.u32 683565275, %v5129
    %v5131 = vshll.u32 683565275, %v5128
    %v5132 = vshrl.u32 2475754826, %v5129
    %v5133 = vor.u32 %v5131, %v5132
    %v5134 = vshll.u32 2475754826, %v5128
    %v5135 = vshrl.u32 2131351028, %v5129
    %v5136 = vor.u32 %v5134, %v5135
    %v5137 = vshll.u32 2131351028, %v5128
    %v5138 = vshrl.u32 2102212464, %v5129
    %v5139 = vor.u32 %v5137, %v5138
    %v5140 = vshll.u32 2102212464, %v5128
    %v5141 = vshrl.u32 920167782, %v5129
    %v5142 = vor.u32 %v5140, %v5141
    %v5143 = vshll.u32 920167782, %v5128
    %v5144 = vshrl.u32 1326507024, %v5129
    %v5145 = vor.u32 %v5143, %v5144
    %vm5146 = vcmp.lt.s32.totalorder %v5127, 1
    %vm5147 = vcmp.lt.s32.totalorder %v5127, 2
    %vm5148 = vcmp.lt.s32.totalorder %v5127, 3
    %vm5149 = vcmp.lt.s32.totalorder %v5127, 4
    %v5150 = vsel %vm5146, %v5130, %v5133
    %v5151 = vsel %vm5149, %v5139, 2102212464
    %v5152 = vsel %vm5148, %v5136, %v5151
    %v5153 = vsel %vm5147, %v5150, %v5152
    %v5154 = vsel %vm5146, %v5133, %v5136
    %v5155 = vsel %vm5149, %v5142, 920167782
    %v5156 = vsel %vm5148, %v5139, %v5155
    %v5157 = vsel %vm5147, %v5154, %v5156
    %v5158 = vsel %vm5146, %v5136, %v5139
    %v5159 = vsel %vm5149, %v5145, 1326507024
    %v5160 = vsel %vm5148, %v5142, %v5159
    %v5161 = vsel %vm5147, %v5158, %v5160
    %v5162 = vshll.u32 %v5122, 8
    %v5163 = vand.u32 %v5162, 65535
    %v5164 = vshrl.u32 %v5162, 16
    %v5165 = vand.u32 %v5161, 65535
    %v5166 = vshrl.u32 %v5161, 16
    %v5167 = vmul.u32 %v5163, %v5165
    %v5168 = vmul.u32 %v5163, %v5166
    %v5169 = vmul.u32 %v5164, %v5165
    %v5170 = vmul.u32 %v5164, %v5166
    %v5171 = vshll.u32 %v5168, 16
    %v5172 = vshrl.u32 %v5168, 16
    %v5173 = vshll.u32 %v5169, 16
    %v5174 = vshrl.u32 %v5169, 16
    %vm5175 = vc.u32 %v5167, %v5171
    %v5176 = vsel %vm5175, 1, 0
    %v5177 = vadd.s32 %v5167, %v5171
    %v5178 = vadd.s32 %v5170, %v5176
    %vm5179 = vc.u32 %v5177, %v5173
    %v5180 = vsel %vm5179, 1, 0
    %v5181 = vadd.s32 %v5177, %v5173
    %v5182 = vadd.s32 %v5178, %v5180
    %v5183 = vadd.s32 %v5182, %v5172
    %v5184 = vadd.s32 %v5183, %v5174
    %v5185 = vand.u32 %v5162, 65535
    %v5186 = vshrl.u32 %v5162, 16
    %v5187 = vand.u32 %v5157, 65535
    %v5188 = vshrl.u32 %v5157, 16
    %v5189 = vmul.u32 %v5185, %v5187
    %v5190 = vmul.u32 %v5185, %v5188
    %v5191 = vmul.u32 %v5186, %v5187
    %v5192 = vmul.u32 %v5186, %v5188
    %v5193 = vshll.u32 %v5190, 16
    %v5194 = vshrl.u32 %v5190, 16
    %v5195 = vshll.u32 %v5191, 16
    %v5196 = vshrl.u32 %v5191, 16
    %vm5197 = vc.u32 %v5189, %v5193
    %v5198 = vsel %vm5197, 1, 0
    %v5199 = vadd.s32 %v5189, %v5193
    %v5200 = vadd.s32 %v5192, %v5198
    %vm5201 = vc.u32 %v5199, %v5195
    %v5202 = vsel %vm5201, 1, 0
    %v5203 = vadd.s32 %v5199, %v5195
    %v5204 = vadd.s32 %v5200, %v5202
    %v5205 = vadd.s32 %v5204, %v5194
    %v5206 = vadd.s32 %v5205, %v5196
    %v5207 = vmul.u32 %v5162, %v5153
    %v5208 = vadd.s32 %v5184, %v5203
    %vm5209 = vc.u32 %v5184, %v5203
    %v5210 = vadd.s32 %v5206, 1
    %v5211 = vsel %vm5209, %v5210, %v5206
    %v5212 = vadd.s32 %v5207, %v5211
    %v5213 = vadd.s32 %v5212, 536870912
    %v5214 = vshrl.u32 %v5213, 30
    %v5215 = vshll.u32 %v5214, 30
    %v5216 = vsub.s32 %v5212, %v5215
    %vm5217 = vcmp.lt.s32.totalorder %v5216, 0
    %v5218 = vsub.s32 0, %v5216
    %v5219 = vsel %vm5217, %v5218, %v5216
    %v5220 = vclz %v5219
    %v5221 = vsub.s32 %v5220, 2
    %vm5222 = vcmp.gt.s32.totalorder 0, %v5221
    %v5223 = vsel %vm5222, 0, %v5221
    %v5224 = vsub.s32 32, %v5223
    %v5225 = vshll.u32 %v5216, %v5223
    %v5226 = vshrl.u32 %v5208, %v5224
    %v5227 = vor.u32 %v5225, %v5226
    %v5228 = vsub.s32 4294967266, %v5223
    %v5229 = vadd.s32 %v5228, 127
    %v5230 = vshll.u32 %v5229, 23
    %v5231 = vor.u32 4788187, %v5230
    %v5232 = vand.u32 2147483647, %v5231
    %v5234 = vcvt.s32.f32 %v5227
    %v5235 = vmul.f32 %v5234, %v5232
    %v5236 = vxor.u32 %v5235, 2147483648
    %v5237 = vsel %vm5116, %v5236, %v5235
    %v5238 = vsub.s32 4, %v5214
    %v5239 = vsel %vm5116, %v5238, %v5214
    %v5240 = vsel %vm5115, %v308, %v5237
    %v5241 = vsel %vm5115, 0, %v5239
    %v5242 = vmul.f32 %v5240, %v5240
    %v5243 = vmul.f32 %v5242, -0.001358992
    %v5244 = vadd.f32 %v5243, 0.041655596
    %v5245 = vmul.f32 %v5242, %v5244
    %v5246 = vadd.f32 %v5245, -0.4999988
    %v5247 = vmul.f32 %v5242, %v5246
    %v5248 = vadd.f32 1.0, %v5247
    %v5249 = vmul.f32 %v5240, %v5240
    %v5250 = vmul.f32 %v5249, -0.00019511016
    %v5251 = vadd.f32 %v5250, 0.008332121
    %v5252 = vmul.f32 %v5249, %v5251
    %v5253 = vadd.f32 %v5252, -0.16666654
    %v5254 = vmul.f32 %v5249, %v5253
    %v5255 = vadd.f32 %v5254, 1.0
    %v5256 = vmul.f32 %v5255, %v5240
    %vm5257 = vweird.f32 %v308
    %v5258 = vadd.s32 %v5241, 3
    %v5259 = vand.u32 %v5258, 3
    %vm5260 = vcmp.lt.s32.totalorder %v5259, 2
    %vm5261 = vcmp.eq.s32.totalorder %v5259, 0
    %v5262 = vxor.u32 %v5256, 2147483648
    %v5263 = vsel %vm5261, %v5248, %v5262
    %vm5264 = vcmp.eq.s32.totalorder %v5259, 2
    %v5265 = vxor.u32 %v5248, 2147483648
    %v5266 = vsel %vm5264, %v5265, %v5256
    %v5267 = vsel %vm5260, %v5263, %v5266
    %v5268 = vsel %vm5257, nan, %v5267
    %5269 = vst [vmem:[#allocation2] sm:$0xff] %v463
    %5270 = vst [vmem:[#allocation2 + $0x8] sm:$0xff] %v618
    %5271 = vst [vmem:[#allocation2 + $0x10] sm:$0xff] %v773
    %5272 = vst [vmem:[#allocation2 + $0x18] sm:$0xff] %v928
    %5273 = vst [vmem:[#allocation2 + $0x20] sm:$0xff] %v1083
    %5274 = vst [vmem:[#allocation2 + $0x28] sm:$0xff] %v1238
    %5275 = vst [vmem:[#allocation2 + $0x30] sm:$0xff] %v1393
    %5276 = vst [vmem:[#allocation2 + $0x38] sm:$0xff] %v1548
    %5277 = vst [vmem:[#allocation2 + $0x40] sm:$0xff] %v1703
    %5278 = vst [vmem:[#allocation2 + $0x48] sm:$0xff] %v1858
    %5279 = vst [vmem:[#allocation2 + $0x50] sm:$0xff] %v2013
    %5280 = vst [vmem:[#allocation2 + $0x58] sm:$0xff] %v2168
    %5281 = vst [vmem:[#allocation2 + $0x60] sm:$0xff] %v2323
    %5282 = vst [vmem:[#allocation2 + $0x68] sm:$0xff] %v2478
    %5283 = vst [vmem:[#allocation2 + $0x70] sm:$0xff] %v2633
    %5284 = vst [vmem:[#allocation2 + $0x78] sm:$0xff] %v2788
    %5285 = vst [vmem:[#allocation2 + $0x80] sm:$0xff] %v2943
    %5286 = vst [vmem:[#allocation2 + $0x88] sm:$0xff] %v3098
    %5287 = vst [vmem:[#allocation2 + $0x90] sm:$0xff] %v3253
    %5288 = vst [vmem:[#allocation2 + $0x98] sm:$0xff] %v3408
    %5289 = vst [vmem:[#allocation2 + $0xa0] sm:$0xff] %v3563
    %5290 = vst [vmem:[#allocation2 + $0xa8] sm:$0xff] %v3718
    %5291 = vst [vmem:[#allocation2 + $0xb0] sm:$0xff] %v3873
    %5292 = vst [vmem:[#allocation2 + $0xb8] sm:$0xff] %v4028
    %5293 = vst [vmem:[#allocation2 + $0xc0] sm:$0xff] %v4183
    %5294 = vst [vmem:[#allocation2 + $0xc8] sm:$0xff] %v4338
    %5295 = vst [vmem:[#allocation2 + $0xd0] sm:$0xff] %v4493
    %5296 = vst [vmem:[#allocation2 + $0xd8] sm:$0xff] %v4648
    %5297 = vst [vmem:[#allocation2 + $0xe0] sm:$0xff] %v4803
    %5298 = vst [vmem:[#allocation2 + $0xe8] sm:$0xff] %v4958
    %5299 = vst [vmem:[#allocation2 + $0xf0] sm:$0xff] %v5113
    %5300 = vst [vmem:[#allocation2 + $0xf8] sm:$0xff] %v5268
    // Predicated region
    $region6: #{tpu_custom_call.1} parent=1 // pred_check
      _
    $region7: #{tpu_custom_call.1} parent=1 // pred_check_branch
      %5302 = sbr.rel (0) target = $region9
    $region8: #{tpu_custom_call.1} parent=1 // pred_region
      %5304 = vsyncadd [#allocation3], 0
      %s5305 = sshll.u32 [#allocation2], 4
      %s5306 = int_to_ptr.vmem [resolvable:$true] %s5305
      %s5307 = sshll.u32 %s1, 4
      %s5308 = int_to_ptr.hbm [resolvable:$true] %s5307
      %5313 = dma.vmem_to_hbm [thread:$0]  %s5306, 4096, %s5308, [#allocation3], 128, 128, 8
    $region9: #{tpu_custom_call.1} parent=1 // pred_fallthru
      _
    // Predicated region
    $region10: #{tpu_custom_call.1} parent=1 // pred_check
      _
    $region11: #{tpu_custom_call.1} parent=1 // pred_check_branch
      %5315 = sbr.rel (0) target = $region13
    $region12: #{tpu_custom_call.1} parent=1 // pred_region
      %5317 = dma.done [#allocation3], 4096
    $region13: #{tpu_custom_call.1} parent=1 // pred_fallthru
      _
    %5318 = vsyncpa [#allocation3], 1

</llo_original>
